<compile_context>
chip_gen: v7x
topology: tpu7x:2x2x1
jax: 0.10.0
libtpu: 0.0.40
codegen_flags: <defaults>
</compile_context>

<pallas_src>
import functools

import jax
import jax.numpy as jnp
from jax import lax
from jax.experimental import pallas as pl
from jax.experimental.pallas import tpu as pltpu


# ----------------------------- fused network kernel -----------------------------
def _bilstm_net_kernel(*refs, num_layers, hidden_size, seq_len, batch_pad,
                       eup_dtype):
    H = hidden_size
    T = seq_len
    BP = batch_pad                 # batch padded to the 8-sublane granule
    G8 = 8 * H                     # stacked gate width for both directions

    # ---- unpack refs: inputs..., output, scratch -------------------------------
    x_ref = refs[0]
    layer_refs = [(refs[1 + 3 * l], refs[2 + 3 * l], refs[3 + 3 * l])
                  for l in range(num_layers)]
    fcw_ref = refs[1 + 3 * num_layers]          # (2H, C)  bf16
    fcb_ref = refs[2 + 3 * num_layers]          # (1, C)   f32
    out_ref = refs[3 + 3 * num_layers]          # (B, C)   f32
    gx_sc, act_sc = refs[4 + 3 * num_layers:]   # (T*BP,8H) f32, (T*BP,2H) f32

    # Column-direction mask (hoisted: loop/layer invariant). With the gate
    # layout [i_f,i_b | f_f,f_b | o_f,o_b | g_f,g_b], forward-direction columns
    # are the first H of every 2H block.
    col = lax.broadcasted_iota(jnp.int32, (BP, G8), 1)
    is_fwd_col = (col % (2 * H)) < H

    for layer in range(num_layers):
        wih_ref, whh_ref, b_ref = layer_refs[layer]

        # Hoisted input projection for BOTH directions and ALL time steps:
        # one batched MXU matmul per layer (bias folded in here, outside the
        # serial loop). bf16 MXU inputs, f32 accumulation.
        if layer == 0:
            proj = jnp.dot(x_ref[...], wih_ref[...],
                           preferred_element_type=jnp.float32)
        else:
            proj = jnp.dot(act_sc[...].astype(jnp.bfloat16), wih_ref[...],
                           preferred_element_type=jnp.float32)
        gx_sc[...] = proj + b_ref[...]                         # (T*BP, 8H) f32

        whh = whh_ref[...]          # hoist recurrent weight load out of the loop

        def step(s, carry):
            h_prev, c_prev = carry                  # (BP, 2H) f32 in vregs
            # Single recurrent matmul for BOTH directions (block-diagonal whh).
            rec = jnp.dot(h_prev.astype(jnp.bfloat16), whh,
                          preferred_element_type=jnp.float32)   # (BP, 8H)
            tb = T - 1 - s                  # backward direction's time index
            rf = pl.multiple_of(s * BP, BP)
            rb = pl.multiple_of(tb * BP, BP)
            gx_f = gx_sc[pl.ds(rf, BP), :]                      # (BP, 8H)
            gx_b = gx_sc[pl.ds(rb, BP), :]
            # Forward gates take their columns from time s, backward from T-1-s.
            gates = jnp.where(is_fwd_col, gx_f, gx_b) + rec     # (BP, 8H) f32

            # One contiguous sigmoid slab (i,f,o for both dirs) + one tanh slab
            # (g for both dirs). bf16 EUP on v6e/v7x, f32 on v5e; c math in f32.
            sig = jax.nn.sigmoid(gates[:, 0:6 * H].astype(eup_dtype))
            i_g = sig[:, 0:2 * H].astype(jnp.float32)
            f_g = sig[:, 2 * H:4 * H].astype(jnp.float32)
            o_g = sig[:, 4 * H:6 * H].astype(jnp.float32)
            g_g = jnp.tanh(gates[:, 6 * H:8 * H].astype(eup_dtype)
                           ).astype(jnp.float32)

            c_new = f_g * c_prev + i_g * g_g                    # (BP, 2H) f32
            h_new = o_g * jnp.tanh(c_new)                       # (BP, 2H) f32

            # Layer output buffer (off the recurrence critical path):
            # fwd h belongs to time s, bwd h to time T-1-s (in-kernel reversal).
            act_sc[pl.ds(rf, BP), 0:H] = h_new[:, 0:H]
            act_sc[pl.ds(rb, BP), H:2 * H] = h_new[:, H:2 * H]
            return (h_new, c_new)

        init = (jnp.zeros((BP, 2 * H), jnp.float32),   # h_0 = 0
                jnp.zeros((BP, 2 * H), jnp.float32))   # c_0 = 0
        # Unrolled: T is short/static; gives the scheduler cross-step visibility.
        lax.fori_loop(0, T, step, init, unroll=True)

    # output[:, -1, :] of the last layer == [h_fwd(T-1) | h_bwd(T-1)], which is
    # exactly rows (T-1)*BP of the merged activation buffer.
    r_last = pl.multiple_of((T - 1) * BP, BP)
    last = act_sc[pl.ds(r_last, BP), :].astype(jnp.bfloat16)     # (BP, 2H)
    # TODO(synk): nn.Dropout is identity in eval mode; training-time mask not applied.
    logits = jnp.dot(last, fcw_ref[...],
                     preferred_element_type=jnp.float32) + fcb_ref[...]
    out_ref[...] = logits[0:out_ref.shape[0], :].astype(out_ref.dtype)


# ------------------------------- parameter setup --------------------------------
def _stack_gate_cols(wf, wb, H):
    """wf/wb: (..., 4H), PyTorch gate column order [i, f, g, o] per direction.
    Returns (..., 8H) with layout [i_f,i_b | f_f,f_b | o_f,o_b | g_f,g_b]
    (sigmoid gates contiguous in the first 6H columns, tanh gates in the last 2H)."""
    i_f, f_f, g_f, o_f = (wf[..., 0:H], wf[..., H:2 * H],
                          wf[..., 2 * H:3 * H], wf[..., 3 * H:4 * H])
    i_b, f_b, g_b, o_b = (wb[..., 0:H], wb[..., H:2 * H],
                          wb[..., 2 * H:3 * H], wb[..., 3 * H:4 * H])
    return jnp.concatenate([i_f, i_b, f_f, f_b, o_f, o_b, g_f, g_b], axis=-1)


def init_params(key, num_classes, input_size, hidden_size, num_layers):
    H = hidden_size
    bound = 1.0 / jnp.sqrt(H)
    layers = []
    for layer in range(num_layers):
        d_in = input_size if layer == 0 else 2 * H
        key, kf1, kf2, kf3, kf4, kb1, kb2, kb3, kb4 = jax.random.split(key, 9)
        wih_f = jax.random.uniform(kf1, (4 * H, d_in), jnp.float32, -bound, bound)
        whh_f = jax.random.uniform(kf2, (4 * H, H), jnp.float32, -bound, bound)
        bih_f = jax.random.uniform(kf3, (4 * H,), jnp.float32, -bound, bound)
        bhh_f = jax.random.uniform(kf4, (4 * H,), jnp.float32, -bound, bound)
        wih_b = jax.random.uniform(kb1, (4 * H, d_in), jnp.float32, -bound, bound)
        whh_b = jax.random.uniform(kb2, (4 * H, H), jnp.float32, -bound, bound)
        bih_b = jax.random.uniform(kb3, (4 * H,), jnp.float32, -bound, bound)
        bhh_b = jax.random.uniform(kb4, (4 * H,), jnp.float32, -bound, bound)

        # stacked input projection (d_in, 8H) with the interleaved gate layout.
        wih = _stack_gate_cols(wih_f.T, wih_b.T, H).astype(jnp.bfloat16)

        # block-diagonal recurrent weight (2H, 8H): h_f feeds only forward gate
        # columns, h_b only backward gate columns. Fine at H=32 (latency-bound);
        # switch to two per-direction (H,4H) matmuls if H is scaled to >=128.
        zH = jnp.zeros((H, 4 * H), jnp.float32)
        whh_top = _stack_gate_cols(whh_f.T, zH, H)
        whh_bot = _stack_gate_cols(zH, whh_b.T, H)
        whh = jnp.concatenate([whh_top, whh_bot], axis=0).astype(jnp.bfloat16)

        b = _stack_gate_cols((bih_f + bhh_f)[None, :],
                             (bih_b + bhh_b)[None, :], H)         # (1, 8H) f32
        layers.append({"wih": wih, "whh": whh, "b": b})

    key, kw, kb = jax.random.split(key, 3)
    fb = 1.0 / jnp.sqrt(2 * H)
    fc_w = jax.random.uniform(kw, (num_classes, 2 * H), jnp.float32, -fb, fb)
    fc_b = jax.random.uniform(kb, (num_classes,), jnp.float32, -fb, fb)
    return {"lstm": layers,
            "fc_w_t": fc_w.T.astype(jnp.bfloat16),   # (2H, C) bf16 MXU operand
            "fc_b": fc_b[None, :]}                   # (1, C)  f32


def _pick_eup_dtype():
    """bf16 gate nonlinearities on chips with bf16 VPU/EUP (v6e/v7x); f32 otherwise."""
    try:
        kind = jax.devices()[0].device_kind.lower()
    except Exception:
        return jnp.float32
    if ("v6" in kind) or ("v7" in kind) or ("tpu7" in kind):
        return jnp.bfloat16
    return jnp.float32


# -------------------------------- forward pass -----------------------------------
def bilstm_forward(x, params, num_layers, hidden_size, num_classes):
    """x: (B, T, input_size) batch-first, exactly like the PyTorch module."""
    B, T, D = x.shape
    H = hidden_size
    BP = ((B + 7) // 8) * 8        # pad batch to the 8-sublane granule
    x_tm = jnp.transpose(x, (1, 0, 2)).astype(jnp.float32)        # (T, B, D)
    if BP != B:
        x_tm = jnp.pad(x_tm, ((0, 0), (0, BP - B), (0, 0)))
    x_flat = x_tm.reshape(T * BP, D).astype(jnp.bfloat16)         # time-major rows

    inputs = [x_flat]
    for layer in range(num_layers):
        p = params["lstm"][layer]
        inputs += [p["wih"], p["whh"], p["b"]]
    inputs += [params["fc_w_t"], params["fc_b"]]

    kernel = functools.partial(
        _bilstm_net_kernel, num_layers=num_layers, hidden_size=H,
        seq_len=T, batch_pad=BP, eup_dtype=_pick_eup_dtype())

    vmem = pl.BlockSpec(memory_space=pltpu.MemorySpace.VMEM)
    return pl.pallas_call(
        kernel,
        out_shape=jax.ShapeDtypeStruct((B, num_classes), jnp.float32),
        in_specs=[vmem] * len(inputs),
        out_specs=vmem,
        scratch_shapes=[
            pltpu.VMEM((T * BP, 8 * H), jnp.float32),   # gx: hoisted x@wih + b
            pltpu.VMEM((T * BP, 2 * H), jnp.float32),   # merged [fwd|bwd] h(t) acts
        ],
        # Explicit VMEM budget: safe on all gens (v5e scoped default is only
        # 16 MiB; v7x physical is 64 MiB). Tile gx over time chunks before the
        # all-resident plan approaches this limit.
        compiler_params=pltpu.CompilerParams(vmem_limit_bytes=32 * 1024 * 1024),
    )(*inputs)


# ----------------------------------- main -----------------------------------------
if __name__ == "__main__":
    num_classes, input_size, hidden_size, num_layers = 4, 16, 32, 2
    batch, seq_len = 2, 8

    key = jax.random.PRNGKey(0)
    key, kx = jax.random.split(key)
    x = jax.random.normal(kx, (batch, seq_len, input_size), jnp.float32)

    params = init_params(key, num_classes, input_size, hidden_size, num_layers)

    out = bilstm_forward(x, params, num_layers, hidden_size, num_classes)
    jax.block_until_ready(out)
    assert out.shape == (batch, num_classes)
    assert bool(jnp.all(jnp.isfinite(out)))
    print("KERNEL_OK")
</pallas_src>

<mosaic_0001>
module attributes {stable_mosaic.version = 11 : i64} {
  func.func @_bilstm_net_kernel(%arg0: memref<64x16xbf16, #tpu.memory_space<vmem>>, %arg1: memref<16x256xbf16, #tpu.memory_space<vmem>>, %arg2: memref<64x256xbf16, #tpu.memory_space<vmem>>, %arg3: memref<1x256xf32, #tpu.memory_space<vmem>>, %arg4: memref<64x256xbf16, #tpu.memory_space<vmem>>, %arg5: memref<64x256xbf16, #tpu.memory_space<vmem>>, %arg6: memref<1x256xf32, #tpu.memory_space<vmem>>, %arg7: memref<64x4xbf16, #tpu.memory_space<vmem>>, %arg8: memref<1x4xf32, #tpu.memory_space<vmem>>, %arg9: memref<2x4xf32, #tpu.memory_space<vmem>>, %arg10: memref<64x256xf32, #tpu.memory_space<vmem>>, %arg11: memref<64x64xf32, #tpu.memory_space<vmem>>) attributes {dimension_semantics = [], scalar_prefetch = 0 : i64, scratch_operands = 2 : i64, tpu.core_type = #tpu.core_type<tc>} {
    %0 = tpu.iota {dimensions = array<i32: 1>} : vector<8x256xi32>
    %c64_i32 = arith.constant 64 : i32
    %c0_i32 = arith.constant 0 : i32
    %1 = arith.cmpi eq, %c64_i32, %c0_i32 : i32
    %c1_i32 = arith.constant 1 : i32
    %2 = arith.select %1, %c1_i32, %c64_i32 : i32
    %3 = vector.broadcast %2 : i32 to vector<8x256xi32>
    %4 = arith.remsi %0, %3 : vector<8x256xi32>
    %c0_i32_0 = arith.constant 0 : i32
    %5 = vector.broadcast %c0_i32_0 : i32 to vector<8x256xi32>
    %6 = arith.cmpi ne, %4, %5 : vector<8x256xi32>
    %c0_i32_1 = arith.constant 0 : i32
    %7 = vector.broadcast %c0_i32_1 : i32 to vector<8x256xi32>
    %8 = arith.cmpi slt, %4, %7 : vector<8x256xi32>
    %c0_i32_2 = arith.constant 0 : i32
    %9 = arith.cmpi slt, %2, %c0_i32_2 : i32
    %10 = vector.broadcast %9 : i1 to vector<8x256xi1>
    %11 = vector.broadcast %10 : vector<8x256xi1> to vector<8x256xi1>
    %12 = arith.xori %8, %11 : vector<8x256xi1>
    %13 = arith.andi %12, %6 : vector<8x256xi1>
    %14 = vector.broadcast %2 : i32 to vector<8x256xi32>
    %15 = arith.addi %4, %14 : vector<8x256xi32>
    %16 = arith.select %13, %15, %4 : vector<8x256xi1>, vector<8x256xi32>
    %c32_i32 = arith.constant 32 : i32
    %17 = vector.broadcast %c32_i32 : i32 to vector<8x256xi32>
    %18 = arith.cmpi slt, %16, %17 : vector<8x256xi32>
    %c0 = arith.constant 0 : index
    %c0_3 = arith.constant 0 : index
    %19 = vector.load %arg0[%c0, %c0_3] : memref<64x16xbf16, #tpu.memory_space<vmem>>, vector<64x16xbf16>
    %c0_4 = arith.constant 0 : index
    %c0_5 = arith.constant 0 : index
    %20 = vector.load %arg1[%c0_4, %c0_5] : memref<16x256xbf16, #tpu.memory_space<vmem>>, vector<16x256xbf16>
    %cst = arith.constant dense<0.000000e+00> : vector<64x256xf32>
    %21 = tpu.matmul %19, %20, %cst {dimension_numbers = #tpu.dot_dimension_numbers<[1], [0], [0], [1], [0, 0, 1, 1], [], []>} : vector<64x16xbf16>, vector<16x256xbf16>, vector<64x256xf32> -> vector<64x256xf32>
    %c0_6 = arith.constant 0 : index
    %c0_7 = arith.constant 0 : index
    %22 = vector.load %arg3[%c0_6, %c0_7] : memref<1x256xf32, #tpu.memory_space<vmem>>, vector<1x256xf32>
    %23 = vector.broadcast %22 : vector<1x256xf32> to vector<64x256xf32>
    %24 = arith.addf %21, %23 : vector<64x256xf32>
    %c0_8 = arith.constant 0 : index
    %c0_9 = arith.constant 0 : index
    %25 = vector.load %arg10[%c0_8, %c0_9] : memref<64x256xf32, #tpu.memory_space<vmem>>, vector<64x256xf32>
    tpu.vector_store %arg10[%c0_8, %c0_9], %24 {strides = array<i32>} : memref<64x256xf32, #tpu.memory_space<vmem>>, vector<64x256xf32>,
    %c0_10 = arith.constant 0 : index
    %c0_11 = arith.constant 0 : index
    %26 = vector.load %arg2[%c0_10, %c0_11] : memref<64x256xbf16, #tpu.memory_space<vmem>>, vector<64x256xbf16>
    %cst_12 = arith.constant 0.000000e+00 : f32
    %27 = vector.broadcast %cst_12 : f32 to vector<8x64xf32>
    %cst_13 = arith.constant 0.000000e+00 : f32
    %28 = vector.broadcast %cst_13 : f32 to vector<8x64xf32>
    %c0_i32_14 = arith.constant 0 : i32
    %29 = arith.truncf %27 : vector<8x64xf32> to vector<8x64xbf16>
    %cst_15 = arith.constant dense<0.000000e+00> : vector<8x256xf32>
    %30 = tpu.matmul %29, %26, %cst_15 {dimension_numbers = #tpu.dot_dimension_numbers<[1], [0], [0], [1], [0, 0, 1, 1], [], []>} : vector<8x64xbf16>, vector<64x256xbf16>, vector<8x256xf32> -> vector<8x256xf32>
    %c7_i32 = arith.constant 7 : i32
    %31 = arith.subi %c7_i32, %c0_i32_14 : i32
    %c8_i32 = arith.constant 8 : i32
    %32 = arith.muli %c0_i32_14, %c8_i32 : i32
    %33 = tpu.assume_multiple %32, 8 : i32
    %c8_i32_16 = arith.constant 8 : i32
    %34 = arith.muli %31, %c8_i32_16 : i32
    %35 = tpu.assume_multiple %34, 8 : i32
    %36 = arith.index_cast %33 : i32 to index
    %c0_17 = arith.constant 0 : index
    %37 = vector.load %arg10[%36, %c0_17] : memref<64x256xf32, #tpu.memory_space<vmem>>, vector<8x256xf32>
    %38 = arith.index_cast %35 : i32 to index
    %c0_18 = arith.constant 0 : index
    %39 = vector.load %arg10[%38, %c0_18] : memref<64x256xf32, #tpu.memory_space<vmem>>, vector<8x256xf32>
    %40 = arith.select %18, %37, %39 : vector<8x256xi1>, vector<8x256xf32>
    %41 = arith.addf %40, %30 : vector<8x256xf32>
    %42 = vector.extract_strided_slice %41 {offsets = [0, 0], sizes = [8, 192], strides = [1, 1]} : vector<8x256xf32> to vector<8x192xf32>
    %43 = arith.negf %42 : vector<8x192xf32>
    %44 = math.exp %43 : vector<8x192xf32>
    %cst_19 = arith.constant 1.000000e+00 : f32
    %45 = vector.broadcast %cst_19 : f32 to vector<8x192xf32>
    %46 = arith.addf %45, %44 : vector<8x192xf32>
    %47 = arith.divf %45, %46 : vector<8x192xf32>
    %48 = vector.extract_strided_slice %47 {offsets = [0, 0], sizes = [8, 64], strides = [1, 1]} : vector<8x192xf32> to vector<8x64xf32>
    %49 = vector.extract_strided_slice %47 {offsets = [0, 64], sizes = [8, 64], strides = [1, 1]} : vector<8x192xf32> to vector<8x64xf32>
    %50 = vector.extract_strided_slice %47 {offsets = [0, 128], sizes = [8, 64], strides = [1, 1]} : vector<8x192xf32> to vector<8x64xf32>
    %51 = vector.extract_strided_slice %41 {offsets = [0, 192], sizes = [8, 64], strides = [1, 1]} : vector<8x256xf32> to vector<8x64xf32>
    %52 = math.tanh %51 : vector<8x64xf32>
    %53 = arith.mulf %49, %28 : vector<8x64xf32>
    %54 = arith.mulf %48, %52 : vector<8x64xf32>
    %55 = arith.addf %53, %54 : vector<8x64xf32>
    %56 = math.tanh %55 : vector<8x64xf32>
    %57 = arith.mulf %50, %56 : vector<8x64xf32>
    %58 = vector.extract_strided_slice %57 {offsets = [0, 0], sizes = [8, 32], strides = [1, 1]} : vector<8x64xf32> to vector<8x32xf32>
    %59 = arith.index_cast %33 : i32 to index
    %c0_20 = arith.constant 0 : index
    %60 = vector.load %arg11[%59, %c0_20] : memref<64x64xf32, #tpu.memory_space<vmem>>, vector<8x32xf32>
    tpu.vector_store %arg11[%59, %c0_20], %58 {strides = array<i32>} : memref<64x64xf32, #tpu.memory_space<vmem>>, vector<8x32xf32>,
    %61 = vector.extract_strided_slice %57 {offsets = [0, 32], sizes = [8, 32], strides = [1, 1]} : vector<8x64xf32> to vector<8x32xf32>
    %62 = arith.index_cast %35 : i32 to index
    %c32 = arith.constant 32 : index
    %63 = vector.load %arg11[%62, %c32] : memref<64x64xf32, #tpu.memory_space<vmem>>, vector<8x32xf32>
    tpu.vector_store %arg11[%62, %c32], %61 {strides = array<i32>} : memref<64x64xf32, #tpu.memory_space<vmem>>, vector<8x32xf32>,
    %c1_i32_21 = arith.constant 1 : i32
    %64 = arith.truncf %57 : vector<8x64xf32> to vector<8x64xbf16>
    %cst_22 = arith.constant dense<0.000000e+00> : vector<8x256xf32>
    %65 = tpu.matmul %64, %26, %cst_22 {dimension_numbers = #tpu.dot_dimension_numbers<[1], [0], [0], [1], [0, 0, 1, 1], [], []>} : vector<8x64xbf16>, vector<64x256xbf16>, vector<8x256xf32> -> vector<8x256xf32>
    %c7_i32_23 = arith.constant 7 : i32
    %66 = arith.subi %c7_i32_23, %c1_i32_21 : i32
    %c8_i32_24 = arith.constant 8 : i32
    %67 = arith.muli %c1_i32_21, %c8_i32_24 : i32
    %68 = tpu.assume_multiple %67, 8 : i32
    %c8_i32_25 = arith.constant 8 : i32
    %69 = arith.muli %66, %c8_i32_25 : i32
    %70 = tpu.assume_multiple %69, 8 : i32
    %71 = arith.index_cast %68 : i32 to index
    %c0_26 = arith.constant 0 : index
    %72 = vector.load %arg10[%71, %c0_26] : memref<64x256xf32, #tpu.memory_space<vmem>>, vector<8x256xf32>
    %73 = arith.index_cast %70 : i32 to index
    %c0_27 = arith.constant 0 : index
    %74 = vector.load %arg10[%73, %c0_27] : memref<64x256xf32, #tpu.memory_space<vmem>>, vector<8x256xf32>
    %75 = arith.select %18, %72, %74 : vector<8x256xi1>, vector<8x256xf32>
    %76 = arith.addf %75, %65 : vector<8x256xf32>
    %77 = vector.extract_strided_slice %76 {offsets = [0, 0], sizes = [8, 192], strides = [1, 1]} : vector<8x256xf32> to vector<8x192xf32>
    %78 = arith.negf %77 : vector<8x192xf32>
    %79 = math.exp %78 : vector<8x192xf32>
    %cst_28 = arith.constant 1.000000e+00 : f32
    %80 = vector.broadcast %cst_28 : f32 to vector<8x192xf32>
    %81 = arith.addf %80, %79 : vector<8x192xf32>
    %82 = arith.divf %80, %81 : vector<8x192xf32>
    %83 = vector.extract_strided_slice %82 {offsets = [0, 0], sizes = [8, 64], strides = [1, 1]} : vector<8x192xf32> to vector<8x64xf32>
    %84 = vector.extract_strided_slice %82 {offsets = [0, 64], sizes = [8, 64], strides = [1, 1]} : vector<8x192xf32> to vector<8x64xf32>
    %85 = vector.extract_strided_slice %82 {offsets = [0, 128], sizes = [8, 64], strides = [1, 1]} : vector<8x192xf32> to vector<8x64xf32>
    %86 = vector.extract_strided_slice %76 {offsets = [0, 192], sizes = [8, 64], strides = [1, 1]} : vector<8x256xf32> to vector<8x64xf32>
    %87 = math.tanh %86 : vector<8x64xf32>
    %88 = arith.mulf %84, %55 : vector<8x64xf32>
    %89 = arith.mulf %83, %87 : vector<8x64xf32>
    %90 = arith.addf %88, %89 : vector<8x64xf32>
    %91 = math.tanh %90 : vector<8x64xf32>
    %92 = arith.mulf %85, %91 : vector<8x64xf32>
    %93 = vector.extract_strided_slice %92 {offsets = [0, 0], sizes = [8, 32], strides = [1, 1]} : vector<8x64xf32> to vector<8x32xf32>
    %94 = arith.index_cast %68 : i32 to index
    %c0_29 = arith.constant 0 : index
    %95 = vector.load %arg11[%94, %c0_29] : memref<64x64xf32, #tpu.memory_space<vmem>>, vector<8x32xf32>
    tpu.vector_store %arg11[%94, %c0_29], %93 {strides = array<i32>} : memref<64x64xf32, #tpu.memory_space<vmem>>, vector<8x32xf32>,
    %96 = vector.extract_strided_slice %92 {offsets = [0, 32], sizes = [8, 32], strides = [1, 1]} : vector<8x64xf32> to vector<8x32xf32>
    %97 = arith.index_cast %70 : i32 to index
    %c32_30 = arith.constant 32 : index
    %98 = vector.load %arg11[%97, %c32_30] : memref<64x64xf32, #tpu.memory_space<vmem>>, vector<8x32xf32>
    tpu.vector_store %arg11[%97, %c32_30], %96 {strides = array<i32>} : memref<64x64xf32, #tpu.memory_space<vmem>>, vector<8x32xf32>,
    %c2_i32 = arith.constant 2 : i32
    %99 = arith.truncf %92 : vector<8x64xf32> to vector<8x64xbf16>
    %cst_31 = arith.constant dense<0.000000e+00> : vector<8x256xf32>
    %100 = tpu.matmul %99, %26, %cst_31 {dimension_numbers = #tpu.dot_dimension_numbers<[1], [0], [0], [1], [0, 0, 1, 1], [], []>} : vector<8x64xbf16>, vector<64x256xbf16>, vector<8x256xf32> -> vector<8x256xf32>
    %c7_i32_32 = arith.constant 7 : i32
    %101 = arith.subi %c7_i32_32, %c2_i32 : i32
    %c8_i32_33 = arith.constant 8 : i32
    %102 = arith.muli %c2_i32, %c8_i32_33 : i32
    %103 = tpu.assume_multiple %102, 8 : i32
    %c8_i32_34 = arith.constant 8 : i32
    %104 = arith.muli %101, %c8_i32_34 : i32
    %105 = tpu.assume_multiple %104, 8 : i32
    %106 = arith.index_cast %103 : i32 to index
    %c0_35 = arith.constant 0 : index
    %107 = vector.load %arg10[%106, %c0_35] : memref<64x256xf32, #tpu.memory_space<vmem>>, vector<8x256xf32>
    %108 = arith.index_cast %105 : i32 to index
    %c0_36 = arith.constant 0 : index
    %109 = vector.load %arg10[%108, %c0_36] : memref<64x256xf32, #tpu.memory_space<vmem>>, vector<8x256xf32>
    %110 = arith.select %18, %107, %109 : vector<8x256xi1>, vector<8x256xf32>
    %111 = arith.addf %110, %100 : vector<8x256xf32>
    %112 = vector.extract_strided_slice %111 {offsets = [0, 0], sizes = [8, 192], strides = [1, 1]} : vector<8x256xf32> to vector<8x192xf32>
    %113 = arith.negf %112 : vector<8x192xf32>
    %114 = math.exp %113 : vector<8x192xf32>
    %cst_37 = arith.constant 1.000000e+00 : f32
    %115 = vector.broadcast %cst_37 : f32 to vector<8x192xf32>
    %116 = arith.addf %115, %114 : vector<8x192xf32>
    %117 = arith.divf %115, %116 : vector<8x192xf32>
    %118 = vector.extract_strided_slice %117 {offsets = [0, 0], sizes = [8, 64], strides = [1, 1]} : vector<8x192xf32> to vector<8x64xf32>
    %119 = vector.extract_strided_slice %117 {offsets = [0, 64], sizes = [8, 64], strides = [1, 1]} : vector<8x192xf32> to vector<8x64xf32>
    %120 = vector.extract_strided_slice %117 {offsets = [0, 128], sizes = [8, 64], strides = [1, 1]} : vector<8x192xf32> to vector<8x64xf32>
    %121 = vector.extract_strided_slice %111 {offsets = [0, 192], sizes = [8, 64], strides = [1, 1]} : vector<8x256xf32> to vector<8x64xf32>
    %122 = math.tanh %121 : vector<8x64xf32>
    %123 = arith.mulf %119, %90 : vector<8x64xf32>
    %124 = arith.mulf %118, %122 : vector<8x64xf32>
    %125 = arith.addf %123, %124 : vector<8x64xf32>
    %126 = math.tanh %125 : vector<8x64xf32>
    %127 = arith.mulf %120, %126 : vector<8x64xf32>
    %128 = vector.extract_strided_slice %127 {offsets = [0, 0], sizes = [8, 32], strides = [1, 1]} : vector<8x64xf32> to vector<8x32xf32>
    %129 = arith.index_cast %103 : i32 to index
    %c0_38 = arith.constant 0 : index
    %130 = vector.load %arg11[%129, %c0_38] : memref<64x64xf32, #tpu.memory_space<vmem>>, vector<8x32xf32>
    tpu.vector_store %arg11[%129, %c0_38], %128 {strides = array<i32>} : memref<64x64xf32, #tpu.memory_space<vmem>>, vector<8x32xf32>,
    %131 = vector.extract_strided_slice %127 {offsets = [0, 32], sizes = [8, 32], strides = [1, 1]} : vector<8x64xf32> to vector<8x32xf32>
    %132 = arith.index_cast %105 : i32 to index
    %c32_39 = arith.constant 32 : index
    %133 = vector.load %arg11[%132, %c32_39] : memref<64x64xf32, #tpu.memory_space<vmem>>, vector<8x32xf32>
    tpu.vector_store %arg11[%132, %c32_39], %131 {strides = array<i32>} : memref<64x64xf32, #tpu.memory_space<vmem>>, vector<8x32xf32>,
    %c3_i32 = arith.constant 3 : i32
    %134 = arith.truncf %127 : vector<8x64xf32> to vector<8x64xbf16>
    %cst_40 = arith.constant dense<0.000000e+00> : vector<8x256xf32>
    %135 = tpu.matmul %134, %26, %cst_40 {dimension_numbers = #tpu.dot_dimension_numbers<[1], [0], [0], [1], [0, 0, 1, 1], [], []>} : vector<8x64xbf16>, vector<64x256xbf16>, vector<8x256xf32> -> vector<8x256xf32>
    %c7_i32_41 = arith.constant 7 : i32
    %136 = arith.subi %c7_i32_41, %c3_i32 : i32
    %c8_i32_42 = arith.constant 8 : i32
    %137 = arith.muli %c3_i32, %c8_i32_42 : i32
    %138 = tpu.assume_multiple %137, 8 : i32
    %c8_i32_43 = arith.constant 8 : i32
    %139 = arith.muli %136, %c8_i32_43 : i32
    %140 = tpu.assume_multiple %139, 8 : i32
    %141 = arith.index_cast %138 : i32 to index
    %c0_44 = arith.constant 0 : index
    %142 = vector.load %arg10[%141, %c0_44] : memref<64x256xf32, #tpu.memory_space<vmem>>, vector<8x256xf32>
    %143 = arith.index_cast %140 : i32 to index
    %c0_45 = arith.constant 0 : index
    %144 = vector.load %arg10[%143, %c0_45] : memref<64x256xf32, #tpu.memory_space<vmem>>, vector<8x256xf32>
    %145 = arith.select %18, %142, %144 : vector<8x256xi1>, vector<8x256xf32>
    %146 = arith.addf %145, %135 : vector<8x256xf32>
    %147 = vector.extract_strided_slice %146 {offsets = [0, 0], sizes = [8, 192], strides = [1, 1]} : vector<8x256xf32> to vector<8x192xf32>
    %148 = arith.negf %147 : vector<8x192xf32>
    %149 = math.exp %148 : vector<8x192xf32>
    %cst_46 = arith.constant 1.000000e+00 : f32
    %150 = vector.broadcast %cst_46 : f32 to vector<8x192xf32>
    %151 = arith.addf %150, %149 : vector<8x192xf32>
    %152 = arith.divf %150, %151 : vector<8x192xf32>
    %153 = vector.extract_strided_slice %152 {offsets = [0, 0], sizes = [8, 64], strides = [1, 1]} : vector<8x192xf32> to vector<8x64xf32>
    %154 = vector.extract_strided_slice %152 {offsets = [0, 64], sizes = [8, 64], strides = [1, 1]} : vector<8x192xf32> to vector<8x64xf32>
    %155 = vector.extract_strided_slice %152 {offsets = [0, 128], sizes = [8, 64], strides = [1, 1]} : vector<8x192xf32> to vector<8x64xf32>
    %156 = vector.extract_strided_slice %146 {offsets = [0, 192], sizes = [8, 64], strides = [1, 1]} : vector<8x256xf32> to vector<8x64xf32>
    %157 = math.tanh %156 : vector<8x64xf32>
    %158 = arith.mulf %154, %125 : vector<8x64xf32>
    %159 = arith.mulf %153, %157 : vector<8x64xf32>
    %160 = arith.addf %158, %159 : vector<8x64xf32>
    %161 = math.tanh %160 : vector<8x64xf32>
    %162 = arith.mulf %155, %161 : vector<8x64xf32>
    %163 = vector.extract_strided_slice %162 {offsets = [0, 0], sizes = [8, 32], strides = [1, 1]} : vector<8x64xf32> to vector<8x32xf32>
    %164 = arith.index_cast %138 : i32 to index
    %c0_47 = arith.constant 0 : index
    %165 = vector.load %arg11[%164, %c0_47] : memref<64x64xf32, #tpu.memory_space<vmem>>, vector<8x32xf32>
    tpu.vector_store %arg11[%164, %c0_47], %163 {strides = array<i32>} : memref<64x64xf32, #tpu.memory_space<vmem>>, vector<8x32xf32>,
    %166 = vector.extract_strided_slice %162 {offsets = [0, 32], sizes = [8, 32], strides = [1, 1]} : vector<8x64xf32> to vector<8x32xf32>
    %167 = arith.index_cast %140 : i32 to index
    %c32_48 = arith.constant 32 : index
    %168 = vector.load %arg11[%167, %c32_48] : memref<64x64xf32, #tpu.memory_space<vmem>>, vector<8x32xf32>
    tpu.vector_store %arg11[%167, %c32_48], %166 {strides = array<i32>} : memref<64x64xf32, #tpu.memory_space<vmem>>, vector<8x32xf32>,
    %c4_i32 = arith.constant 4 : i32
    %169 = arith.truncf %162 : vector<8x64xf32> to vector<8x64xbf16>
    %cst_49 = arith.constant dense<0.000000e+00> : vector<8x256xf32>
    %170 = tpu.matmul %169, %26, %cst_49 {dimension_numbers = #tpu.dot_dimension_numbers<[1], [0], [0], [1], [0, 0, 1, 1], [], []>} : vector<8x64xbf16>, vector<64x256xbf16>, vector<8x256xf32> -> vector<8x256xf32>
    %c7_i32_50 = arith.constant 7 : i32
    %171 = arith.subi %c7_i32_50, %c4_i32 : i32
    %c8_i32_51 = arith.constant 8 : i32
    %172 = arith.muli %c4_i32, %c8_i32_51 : i32
    %173 = tpu.assume_multiple %172, 8 : i32
    %c8_i32_52 = arith.constant 8 : i32
    %174 = arith.muli %171, %c8_i32_52 : i32
    %175 = tpu.assume_multiple %174, 8 : i32
    %176 = arith.index_cast %173 : i32 to index
    %c0_53 = arith.constant 0 : index
    %177 = vector.load %arg10[%176, %c0_53] : memref<64x256xf32, #tpu.memory_space<vmem>>, vector<8x256xf32>
    %178 = arith.index_cast %175 : i32 to index
    %c0_54 = arith.constant 0 : index
    %179 = vector.load %arg10[%178, %c0_54] : memref<64x256xf32, #tpu.memory_space<vmem>>, vector<8x256xf32>
    %180 = arith.select %18, %177, %179 : vector<8x256xi1>, vector<8x256xf32>
    %181 = arith.addf %180, %170 : vector<8x256xf32>
    %182 = vector.extract_strided_slice %181 {offsets = [0, 0], sizes = [8, 192], strides = [1, 1]} : vector<8x256xf32> to vector<8x192xf32>
    %183 = arith.negf %182 : vector<8x192xf32>
    %184 = math.exp %183 : vector<8x192xf32>
    %cst_55 = arith.constant 1.000000e+00 : f32
    %185 = vector.broadcast %cst_55 : f32 to vector<8x192xf32>
    %186 = arith.addf %185, %184 : vector<8x192xf32>
    %187 = arith.divf %185, %186 : vector<8x192xf32>
    %188 = vector.extract_strided_slice %187 {offsets = [0, 0], sizes = [8, 64], strides = [1, 1]} : vector<8x192xf32> to vector<8x64xf32>
    %189 = vector.extract_strided_slice %187 {offsets = [0, 64], sizes = [8, 64], strides = [1, 1]} : vector<8x192xf32> to vector<8x64xf32>
    %190 = vector.extract_strided_slice %187 {offsets = [0, 128], sizes = [8, 64], strides = [1, 1]} : vector<8x192xf32> to vector<8x64xf32>
    %191 = vector.extract_strided_slice %181 {offsets = [0, 192], sizes = [8, 64], strides = [1, 1]} : vector<8x256xf32> to vector<8x64xf32>
    %192 = math.tanh %191 : vector<8x64xf32>
    %193 = arith.mulf %189, %160 : vector<8x64xf32>
    %194 = arith.mulf %188, %192 : vector<8x64xf32>
    %195 = arith.addf %193, %194 : vector<8x64xf32>
    %196 = math.tanh %195 : vector<8x64xf32>
    %197 = arith.mulf %190, %196 : vector<8x64xf32>
    %198 = vector.extract_strided_slice %197 {offsets = [0, 0], sizes = [8, 32], strides = [1, 1]} : vector<8x64xf32> to vector<8x32xf32>
    %199 = arith.index_cast %173 : i32 to index
    %c0_56 = arith.constant 0 : index
    %200 = vector.load %arg11[%199, %c0_56] : memref<64x64xf32, #tpu.memory_space<vmem>>, vector<8x32xf32>
    tpu.vector_store %arg11[%199, %c0_56], %198 {strides = array<i32>} : memref<64x64xf32, #tpu.memory_space<vmem>>, vector<8x32xf32>,
    %201 = vector.extract_strided_slice %197 {offsets = [0, 32], sizes = [8, 32], strides = [1, 1]} : vector<8x64xf32> to vector<8x32xf32>
    %202 = arith.index_cast %175 : i32 to index
    %c32_57 = arith.constant 32 : index
    %203 = vector.load %arg11[%202, %c32_57] : memref<64x64xf32, #tpu.memory_space<vmem>>, vector<8x32xf32>
    tpu.vector_store %arg11[%202, %c32_57], %201 {strides = array<i32>} : memref<64x64xf32, #tpu.memory_space<vmem>>, vector<8x32xf32>,
    %c5_i32 = arith.constant 5 : i32
    %204 = arith.truncf %197 : vector<8x64xf32> to vector<8x64xbf16>
    %cst_58 = arith.constant dense<0.000000e+00> : vector<8x256xf32>
    %205 = tpu.matmul %204, %26, %cst_58 {dimension_numbers = #tpu.dot_dimension_numbers<[1], [0], [0], [1], [0, 0, 1, 1], [], []>} : vector<8x64xbf16>, vector<64x256xbf16>, vector<8x256xf32> -> vector<8x256xf32>
    %c7_i32_59 = arith.constant 7 : i32
    %206 = arith.subi %c7_i32_59, %c5_i32 : i32
    %c8_i32_60 = arith.constant 8 : i32
    %207 = arith.muli %c5_i32, %c8_i32_60 : i32
    %208 = tpu.assume_multiple %207, 8 : i32
    %c8_i32_61 = arith.constant 8 : i32
    %209 = arith.muli %206, %c8_i32_61 : i32
    %210 = tpu.assume_multiple %209, 8 : i32
    %211 = arith.index_cast %208 : i32 to index
    %c0_62 = arith.constant 0 : index
    %212 = vector.load %arg10[%211, %c0_62] : memref<64x256xf32, #tpu.memory_space<vmem>>, vector<8x256xf32>
    %213 = arith.index_cast %210 : i32 to index
    %c0_63 = arith.constant 0 : index
    %214 = vector.load %arg10[%213, %c0_63] : memref<64x256xf32, #tpu.memory_space<vmem>>, vector<8x256xf32>
    %215 = arith.select %18, %212, %214 : vector<8x256xi1>, vector<8x256xf32>
    %216 = arith.addf %215, %205 : vector<8x256xf32>
    %217 = vector.extract_strided_slice %216 {offsets = [0, 0], sizes = [8, 192], strides = [1, 1]} : vector<8x256xf32> to vector<8x192xf32>
    %218 = arith.negf %217 : vector<8x192xf32>
    %219 = math.exp %218 : vector<8x192xf32>
    %cst_64 = arith.constant 1.000000e+00 : f32
    %220 = vector.broadcast %cst_64 : f32 to vector<8x192xf32>
    %221 = arith.addf %220, %219 : vector<8x192xf32>
    %222 = arith.divf %220, %221 : vector<8x192xf32>
    %223 = vector.extract_strided_slice %222 {offsets = [0, 0], sizes = [8, 64], strides = [1, 1]} : vector<8x192xf32> to vector<8x64xf32>
    %224 = vector.extract_strided_slice %222 {offsets = [0, 64], sizes = [8, 64], strides = [1, 1]} : vector<8x192xf32> to vector<8x64xf32>
    %225 = vector.extract_strided_slice %222 {offsets = [0, 128], sizes = [8, 64], strides = [1, 1]} : vector<8x192xf32> to vector<8x64xf32>
    %226 = vector.extract_strided_slice %216 {offsets = [0, 192], sizes = [8, 64], strides = [1, 1]} : vector<8x256xf32> to vector<8x64xf32>
    %227 = math.tanh %226 : vector<8x64xf32>
    %228 = arith.mulf %224, %195 : vector<8x64xf32>
    %229 = arith.mulf %223, %227 : vector<8x64xf32>
    %230 = arith.addf %228, %229 : vector<8x64xf32>
    %231 = math.tanh %230 : vector<8x64xf32>
    %232 = arith.mulf %225, %231 : vector<8x64xf32>
    %233 = vector.extract_strided_slice %232 {offsets = [0, 0], sizes = [8, 32], strides = [1, 1]} : vector<8x64xf32> to vector<8x32xf32>
    %234 = arith.index_cast %208 : i32 to index
    %c0_65 = arith.constant 0 : index
    %235 = vector.load %arg11[%234, %c0_65] : memref<64x64xf32, #tpu.memory_space<vmem>>, vector<8x32xf32>
    tpu.vector_store %arg11[%234, %c0_65], %233 {strides = array<i32>} : memref<64x64xf32, #tpu.memory_space<vmem>>, vector<8x32xf32>,
    %236 = vector.extract_strided_slice %232 {offsets = [0, 32], sizes = [8, 32], strides = [1, 1]} : vector<8x64xf32> to vector<8x32xf32>
    %237 = arith.index_cast %210 : i32 to index
    %c32_66 = arith.constant 32 : index
    %238 = vector.load %arg11[%237, %c32_66] : memref<64x64xf32, #tpu.memory_space<vmem>>, vector<8x32xf32>
    tpu.vector_store %arg11[%237, %c32_66], %236 {strides = array<i32>} : memref<64x64xf32, #tpu.memory_space<vmem>>, vector<8x32xf32>,
    %c6_i32 = arith.constant 6 : i32
    %239 = arith.truncf %232 : vector<8x64xf32> to vector<8x64xbf16>
    %cst_67 = arith.constant dense<0.000000e+00> : vector<8x256xf32>
    %240 = tpu.matmul %239, %26, %cst_67 {dimension_numbers = #tpu.dot_dimension_numbers<[1], [0], [0], [1], [0, 0, 1, 1], [], []>} : vector<8x64xbf16>, vector<64x256xbf16>, vector<8x256xf32> -> vector<8x256xf32>
    %c7_i32_68 = arith.constant 7 : i32
    %241 = arith.subi %c7_i32_68, %c6_i32 : i32
    %c8_i32_69 = arith.constant 8 : i32
    %242 = arith.muli %c6_i32, %c8_i32_69 : i32
    %243 = tpu.assume_multiple %242, 8 : i32
    %c8_i32_70 = arith.constant 8 : i32
    %244 = arith.muli %241, %c8_i32_70 : i32
    %245 = tpu.assume_multiple %244, 8 : i32
    %246 = arith.index_cast %243 : i32 to index
    %c0_71 = arith.constant 0 : index
    %247 = vector.load %arg10[%246, %c0_71] : memref<64x256xf32, #tpu.memory_space<vmem>>, vector<8x256xf32>
    %248 = arith.index_cast %245 : i32 to index
    %c0_72 = arith.constant 0 : index
    %249 = vector.load %arg10[%248, %c0_72] : memref<64x256xf32, #tpu.memory_space<vmem>>, vector<8x256xf32>
    %250 = arith.select %18, %247, %249 : vector<8x256xi1>, vector<8x256xf32>
    %251 = arith.addf %250, %240 : vector<8x256xf32>
    %252 = vector.extract_strided_slice %251 {offsets = [0, 0], sizes = [8, 192], strides = [1, 1]} : vector<8x256xf32> to vector<8x192xf32>
    %253 = arith.negf %252 : vector<8x192xf32>
    %254 = math.exp %253 : vector<8x192xf32>
    %cst_73 = arith.constant 1.000000e+00 : f32
    %255 = vector.broadcast %cst_73 : f32 to vector<8x192xf32>
    %256 = arith.addf %255, %254 : vector<8x192xf32>
    %257 = arith.divf %255, %256 : vector<8x192xf32>
    %258 = vector.extract_strided_slice %257 {offsets = [0, 0], sizes = [8, 64], strides = [1, 1]} : vector<8x192xf32> to vector<8x64xf32>
    %259 = vector.extract_strided_slice %257 {offsets = [0, 64], sizes = [8, 64], strides = [1, 1]} : vector<8x192xf32> to vector<8x64xf32>
    %260 = vector.extract_strided_slice %257 {offsets = [0, 128], sizes = [8, 64], strides = [1, 1]} : vector<8x192xf32> to vector<8x64xf32>
    %261 = vector.extract_strided_slice %251 {offsets = [0, 192], sizes = [8, 64], strides = [1, 1]} : vector<8x256xf32> to vector<8x64xf32>
    %262 = math.tanh %261 : vector<8x64xf32>
    %263 = arith.mulf %259, %230 : vector<8x64xf32>
    %264 = arith.mulf %258, %262 : vector<8x64xf32>
    %265 = arith.addf %263, %264 : vector<8x64xf32>
    %266 = math.tanh %265 : vector<8x64xf32>
    %267 = arith.mulf %260, %266 : vector<8x64xf32>
    %268 = vector.extract_strided_slice %267 {offsets = [0, 0], sizes = [8, 32], strides = [1, 1]} : vector<8x64xf32> to vector<8x32xf32>
    %269 = arith.index_cast %243 : i32 to index
    %c0_74 = arith.constant 0 : index
    %270 = vector.load %arg11[%269, %c0_74] : memref<64x64xf32, #tpu.memory_space<vmem>>, vector<8x32xf32>
    tpu.vector_store %arg11[%269, %c0_74], %268 {strides = array<i32>} : memref<64x64xf32, #tpu.memory_space<vmem>>, vector<8x32xf32>,
    %271 = vector.extract_strided_slice %267 {offsets = [0, 32], sizes = [8, 32], strides = [1, 1]} : vector<8x64xf32> to vector<8x32xf32>
    %272 = arith.index_cast %245 : i32 to index
    %c32_75 = arith.constant 32 : index
    %273 = vector.load %arg11[%272, %c32_75] : memref<64x64xf32, #tpu.memory_space<vmem>>, vector<8x32xf32>
    tpu.vector_store %arg11[%272, %c32_75], %271 {strides = array<i32>} : memref<64x64xf32, #tpu.memory_space<vmem>>, vector<8x32xf32>,
    %c7_i32_76 = arith.constant 7 : i32
    %274 = arith.truncf %267 : vector<8x64xf32> to vector<8x64xbf16>
    %cst_77 = arith.constant dense<0.000000e+00> : vector<8x256xf32>
    %275 = tpu.matmul %274, %26, %cst_77 {dimension_numbers = #tpu.dot_dimension_numbers<[1], [0], [0], [1], [0, 0, 1, 1], [], []>} : vector<8x64xbf16>, vector<64x256xbf16>, vector<8x256xf32> -> vector<8x256xf32>
    %c7_i32_78 = arith.constant 7 : i32
    %276 = arith.subi %c7_i32_78, %c7_i32_76 : i32
    %c8_i32_79 = arith.constant 8 : i32
    %277 = arith.muli %c7_i32_76, %c8_i32_79 : i32
    %278 = tpu.assume_multiple %277, 8 : i32
    %c8_i32_80 = arith.constant 8 : i32
    %279 = arith.muli %276, %c8_i32_80 : i32
    %280 = tpu.assume_multiple %279, 8 : i32
    %281 = arith.index_cast %278 : i32 to index
    %c0_81 = arith.constant 0 : index
    %282 = vector.load %arg10[%281, %c0_81] : memref<64x256xf32, #tpu.memory_space<vmem>>, vector<8x256xf32>
    %283 = arith.index_cast %280 : i32 to index
    %c0_82 = arith.constant 0 : index
    %284 = vector.load %arg10[%283, %c0_82] : memref<64x256xf32, #tpu.memory_space<vmem>>, vector<8x256xf32>
    %285 = arith.select %18, %282, %284 : vector<8x256xi1>, vector<8x256xf32>
    %286 = arith.addf %285, %275 : vector<8x256xf32>
    %287 = vector.extract_strided_slice %286 {offsets = [0, 0], sizes = [8, 192], strides = [1, 1]} : vector<8x256xf32> to vector<8x192xf32>
    %288 = arith.negf %287 : vector<8x192xf32>
    %289 = math.exp %288 : vector<8x192xf32>
    %cst_83 = arith.constant 1.000000e+00 : f32
    %290 = vector.broadcast %cst_83 : f32 to vector<8x192xf32>
    %291 = arith.addf %290, %289 : vector<8x192xf32>
    %292 = arith.divf %290, %291 : vector<8x192xf32>
    %293 = vector.extract_strided_slice %292 {offsets = [0, 0], sizes = [8, 64], strides = [1, 1]} : vector<8x192xf32> to vector<8x64xf32>
    %294 = vector.extract_strided_slice %292 {offsets = [0, 64], sizes = [8, 64], strides = [1, 1]} : vector<8x192xf32> to vector<8x64xf32>
    %295 = vector.extract_strided_slice %292 {offsets = [0, 128], sizes = [8, 64], strides = [1, 1]} : vector<8x192xf32> to vector<8x64xf32>
    %296 = vector.extract_strided_slice %286 {offsets = [0, 192], sizes = [8, 64], strides = [1, 1]} : vector<8x256xf32> to vector<8x64xf32>
    %297 = math.tanh %296 : vector<8x64xf32>
    %298 = arith.mulf %294, %265 : vector<8x64xf32>
    %299 = arith.mulf %293, %297 : vector<8x64xf32>
    %300 = arith.addf %298, %299 : vector<8x64xf32>
    %301 = math.tanh %300 : vector<8x64xf32>
    %302 = arith.mulf %295, %301 : vector<8x64xf32>
    %303 = vector.extract_strided_slice %302 {offsets = [0, 0], sizes = [8, 32], strides = [1, 1]} : vector<8x64xf32> to vector<8x32xf32>
    %304 = arith.index_cast %278 : i32 to index
    %c0_84 = arith.constant 0 : index
    %305 = vector.load %arg11[%304, %c0_84] : memref<64x64xf32, #tpu.memory_space<vmem>>, vector<8x32xf32>
    tpu.vector_store %arg11[%304, %c0_84], %303 {strides = array<i32>} : memref<64x64xf32, #tpu.memory_space<vmem>>, vector<8x32xf32>,
    %306 = vector.extract_strided_slice %302 {offsets = [0, 32], sizes = [8, 32], strides = [1, 1]} : vector<8x64xf32> to vector<8x32xf32>
    %307 = arith.index_cast %280 : i32 to index
    %c32_85 = arith.constant 32 : index
    %308 = vector.load %arg11[%307, %c32_85] : memref<64x64xf32, #tpu.memory_space<vmem>>, vector<8x32xf32>
    tpu.vector_store %arg11[%307, %c32_85], %306 {strides = array<i32>} : memref<64x64xf32, #tpu.memory_space<vmem>>, vector<8x32xf32>,
    %c8_i32_86 = arith.constant 8 : i32
    %c0_87 = arith.constant 0 : index
    %c0_88 = arith.constant 0 : index
    %309 = vector.load %arg11[%c0_87, %c0_88] : memref<64x64xf32, #tpu.memory_space<vmem>>, vector<64x64xf32>
    %310 = arith.truncf %309 : vector<64x64xf32> to vector<64x64xbf16>
    %c0_89 = arith.constant 0 : index
    %c0_90 = arith.constant 0 : index
    %311 = vector.load %arg4[%c0_89, %c0_90] : memref<64x256xbf16, #tpu.memory_space<vmem>>, vector<64x256xbf16>
    %cst_91 = arith.constant dense<0.000000e+00> : vector<64x256xf32>
    %312 = tpu.matmul %310, %311, %cst_91 {dimension_numbers = #tpu.dot_dimension_numbers<[1], [0], [0], [1], [0, 0, 1, 1], [], []>} : vector<64x64xbf16>, vector<64x256xbf16>, vector<64x256xf32> -> vector<64x256xf32>
    %c0_92 = arith.constant 0 : index
    %c0_93 = arith.constant 0 : index
    %313 = vector.load %arg6[%c0_92, %c0_93] : memref<1x256xf32, #tpu.memory_space<vmem>>, vector<1x256xf32>
    %314 = vector.broadcast %313 : vector<1x256xf32> to vector<64x256xf32>
    %315 = arith.addf %312, %314 : vector<64x256xf32>
    %c0_94 = arith.constant 0 : index
    %c0_95 = arith.constant 0 : index
    %316 = vector.load %arg10[%c0_94, %c0_95] : memref<64x256xf32, #tpu.memory_space<vmem>>, vector<64x256xf32>
    tpu.vector_store %arg10[%c0_94, %c0_95], %315 {strides = array<i32>} : memref<64x256xf32, #tpu.memory_space<vmem>>, vector<64x256xf32>,
    %c0_96 = arith.constant 0 : index
    %c0_97 = arith.constant 0 : index
    %317 = vector.load %arg5[%c0_96, %c0_97] : memref<64x256xbf16, #tpu.memory_space<vmem>>, vector<64x256xbf16>
    %cst_98 = arith.constant 0.000000e+00 : f32
    %318 = vector.broadcast %cst_98 : f32 to vector<8x64xf32>
    %cst_99 = arith.constant 0.000000e+00 : f32
    %319 = vector.broadcast %cst_99 : f32 to vector<8x64xf32>
    %c0_i32_100 = arith.constant 0 : i32
    %320 = arith.truncf %318 : vector<8x64xf32> to vector<8x64xbf16>
    %cst_101 = arith.constant dense<0.000000e+00> : vector<8x256xf32>
    %321 = tpu.matmul %320, %317, %cst_101 {dimension_numbers = #tpu.dot_dimension_numbers<[1], [0], [0], [1], [0, 0, 1, 1], [], []>} : vector<8x64xbf16>, vector<64x256xbf16>, vector<8x256xf32> -> vector<8x256xf32>
    %c7_i32_102 = arith.constant 7 : i32
    %322 = arith.subi %c7_i32_102, %c0_i32_100 : i32
    %c8_i32_103 = arith.constant 8 : i32
    %323 = arith.muli %c0_i32_100, %c8_i32_103 : i32
    %324 = tpu.assume_multiple %323, 8 : i32
    %c8_i32_104 = arith.constant 8 : i32
    %325 = arith.muli %322, %c8_i32_104 : i32
    %326 = tpu.assume_multiple %325, 8 : i32
    %327 = arith.index_cast %324 : i32 to index
    %c0_105 = arith.constant 0 : index
    %328 = vector.load %arg10[%327, %c0_105] : memref<64x256xf32, #tpu.memory_space<vmem>>, vector<8x256xf32>
    %329 = arith.index_cast %326 : i32 to index
    %c0_106 = arith.constant 0 : index
    %330 = vector.load %arg10[%329, %c0_106] : memref<64x256xf32, #tpu.memory_space<vmem>>, vector<8x256xf32>
    %331 = arith.select %18, %328, %330 : vector<8x256xi1>, vector<8x256xf32>
    %332 = arith.addf %331, %321 : vector<8x256xf32>
    %333 = vector.extract_strided_slice %332 {offsets = [0, 0], sizes = [8, 192], strides = [1, 1]} : vector<8x256xf32> to vector<8x192xf32>
    %334 = arith.negf %333 : vector<8x192xf32>
    %335 = math.exp %334 : vector<8x192xf32>
    %cst_107 = arith.constant 1.000000e+00 : f32
    %336 = vector.broadcast %cst_107 : f32 to vector<8x192xf32>
    %337 = arith.addf %336, %335 : vector<8x192xf32>
    %338 = arith.divf %336, %337 : vector<8x192xf32>
    %339 = vector.extract_strided_slice %338 {offsets = [0, 0], sizes = [8, 64], strides = [1, 1]} : vector<8x192xf32> to vector<8x64xf32>
    %340 = vector.extract_strided_slice %338 {offsets = [0, 64], sizes = [8, 64], strides = [1, 1]} : vector<8x192xf32> to vector<8x64xf32>
    %341 = vector.extract_strided_slice %338 {offsets = [0, 128], sizes = [8, 64], strides = [1, 1]} : vector<8x192xf32> to vector<8x64xf32>
    %342 = vector.extract_strided_slice %332 {offsets = [0, 192], sizes = [8, 64], strides = [1, 1]} : vector<8x256xf32> to vector<8x64xf32>
    %343 = math.tanh %342 : vector<8x64xf32>
    %344 = arith.mulf %340, %319 : vector<8x64xf32>
    %345 = arith.mulf %339, %343 : vector<8x64xf32>
    %346 = arith.addf %344, %345 : vector<8x64xf32>
    %347 = math.tanh %346 : vector<8x64xf32>
    %348 = arith.mulf %341, %347 : vector<8x64xf32>
    %349 = vector.extract_strided_slice %348 {offsets = [0, 0], sizes = [8, 32], strides = [1, 1]} : vector<8x64xf32> to vector<8x32xf32>
    %350 = arith.index_cast %324 : i32 to index
    %c0_108 = arith.constant 0 : index
    %351 = vector.load %arg11[%350, %c0_108] : memref<64x64xf32, #tpu.memory_space<vmem>>, vector<8x32xf32>
    tpu.vector_store %arg11[%350, %c0_108], %349 {strides = array<i32>} : memref<64x64xf32, #tpu.memory_space<vmem>>, vector<8x32xf32>,
    %352 = vector.extract_strided_slice %348 {offsets = [0, 32], sizes = [8, 32], strides = [1, 1]} : vector<8x64xf32> to vector<8x32xf32>
    %353 = arith.index_cast %326 : i32 to index
    %c32_109 = arith.constant 32 : index
    %354 = vector.load %arg11[%353, %c32_109] : memref<64x64xf32, #tpu.memory_space<vmem>>, vector<8x32xf32>
    tpu.vector_store %arg11[%353, %c32_109], %352 {strides = array<i32>} : memref<64x64xf32, #tpu.memory_space<vmem>>, vector<8x32xf32>,
    %c1_i32_110 = arith.constant 1 : i32
    %355 = arith.truncf %348 : vector<8x64xf32> to vector<8x64xbf16>
    %cst_111 = arith.constant dense<0.000000e+00> : vector<8x256xf32>
    %356 = tpu.matmul %355, %317, %cst_111 {dimension_numbers = #tpu.dot_dimension_numbers<[1], [0], [0], [1], [0, 0, 1, 1], [], []>} : vector<8x64xbf16>, vector<64x256xbf16>, vector<8x256xf32> -> vector<8x256xf32>
    %c7_i32_112 = arith.constant 7 : i32
    %357 = arith.subi %c7_i32_112, %c1_i32_110 : i32
    %c8_i32_113 = arith.constant 8 : i32
    %358 = arith.muli %c1_i32_110, %c8_i32_113 : i32
    %359 = tpu.assume_multiple %358, 8 : i32
    %c8_i32_114 = arith.constant 8 : i32
    %360 = arith.muli %357, %c8_i32_114 : i32
    %361 = tpu.assume_multiple %360, 8 : i32
    %362 = arith.index_cast %359 : i32 to index
    %c0_115 = arith.constant 0 : index
    %363 = vector.load %arg10[%362, %c0_115] : memref<64x256xf32, #tpu.memory_space<vmem>>, vector<8x256xf32>
    %364 = arith.index_cast %361 : i32 to index
    %c0_116 = arith.constant 0 : index
    %365 = vector.load %arg10[%364, %c0_116] : memref<64x256xf32, #tpu.memory_space<vmem>>, vector<8x256xf32>
    %366 = arith.select %18, %363, %365 : vector<8x256xi1>, vector<8x256xf32>
    %367 = arith.addf %366, %356 : vector<8x256xf32>
    %368 = vector.extract_strided_slice %367 {offsets = [0, 0], sizes = [8, 192], strides = [1, 1]} : vector<8x256xf32> to vector<8x192xf32>
    %369 = arith.negf %368 : vector<8x192xf32>
    %370 = math.exp %369 : vector<8x192xf32>
    %cst_117 = arith.constant 1.000000e+00 : f32
    %371 = vector.broadcast %cst_117 : f32 to vector<8x192xf32>
    %372 = arith.addf %371, %370 : vector<8x192xf32>
    %373 = arith.divf %371, %372 : vector<8x192xf32>
    %374 = vector.extract_strided_slice %373 {offsets = [0, 0], sizes = [8, 64], strides = [1, 1]} : vector<8x192xf32> to vector<8x64xf32>
    %375 = vector.extract_strided_slice %373 {offsets = [0, 64], sizes = [8, 64], strides = [1, 1]} : vector<8x192xf32> to vector<8x64xf32>
    %376 = vector.extract_strided_slice %373 {offsets = [0, 128], sizes = [8, 64], strides = [1, 1]} : vector<8x192xf32> to vector<8x64xf32>
    %377 = vector.extract_strided_slice %367 {offsets = [0, 192], sizes = [8, 64], strides = [1, 1]} : vector<8x256xf32> to vector<8x64xf32>
    %378 = math.tanh %377 : vector<8x64xf32>
    %379 = arith.mulf %375, %346 : vector<8x64xf32>
    %380 = arith.mulf %374, %378 : vector<8x64xf32>
    %381 = arith.addf %379, %380 : vector<8x64xf32>
    %382 = math.tanh %381 : vector<8x64xf32>
    %383 = arith.mulf %376, %382 : vector<8x64xf32>
    %384 = vector.extract_strided_slice %383 {offsets = [0, 0], sizes = [8, 32], strides = [1, 1]} : vector<8x64xf32> to vector<8x32xf32>
    %385 = arith.index_cast %359 : i32 to index
    %c0_118 = arith.constant 0 : index
    %386 = vector.load %arg11[%385, %c0_118] : memref<64x64xf32, #tpu.memory_space<vmem>>, vector<8x32xf32>
    tpu.vector_store %arg11[%385, %c0_118], %384 {strides = array<i32>} : memref<64x64xf32, #tpu.memory_space<vmem>>, vector<8x32xf32>,
    %387 = vector.extract_strided_slice %383 {offsets = [0, 32], sizes = [8, 32], strides = [1, 1]} : vector<8x64xf32> to vector<8x32xf32>
    %388 = arith.index_cast %361 : i32 to index
    %c32_119 = arith.constant 32 : index
    %389 = vector.load %arg11[%388, %c32_119] : memref<64x64xf32, #tpu.memory_space<vmem>>, vector<8x32xf32>
    tpu.vector_store %arg11[%388, %c32_119], %387 {strides = array<i32>} : memref<64x64xf32, #tpu.memory_space<vmem>>, vector<8x32xf32>,
    %c2_i32_120 = arith.constant 2 : i32
    %390 = arith.truncf %383 : vector<8x64xf32> to vector<8x64xbf16>
    %cst_121 = arith.constant dense<0.000000e+00> : vector<8x256xf32>
    %391 = tpu.matmul %390, %317, %cst_121 {dimension_numbers = #tpu.dot_dimension_numbers<[1], [0], [0], [1], [0, 0, 1, 1], [], []>} : vector<8x64xbf16>, vector<64x256xbf16>, vector<8x256xf32> -> vector<8x256xf32>
    %c7_i32_122 = arith.constant 7 : i32
    %392 = arith.subi %c7_i32_122, %c2_i32_120 : i32
    %c8_i32_123 = arith.constant 8 : i32
    %393 = arith.muli %c2_i32_120, %c8_i32_123 : i32
    %394 = tpu.assume_multiple %393, 8 : i32
    %c8_i32_124 = arith.constant 8 : i32
    %395 = arith.muli %392, %c8_i32_124 : i32
    %396 = tpu.assume_multiple %395, 8 : i32
    %397 = arith.index_cast %394 : i32 to index
    %c0_125 = arith.constant 0 : index
    %398 = vector.load %arg10[%397, %c0_125] : memref<64x256xf32, #tpu.memory_space<vmem>>, vector<8x256xf32>
    %399 = arith.index_cast %396 : i32 to index
    %c0_126 = arith.constant 0 : index
    %400 = vector.load %arg10[%399, %c0_126] : memref<64x256xf32, #tpu.memory_space<vmem>>, vector<8x256xf32>
    %401 = arith.select %18, %398, %400 : vector<8x256xi1>, vector<8x256xf32>
    %402 = arith.addf %401, %391 : vector<8x256xf32>
    %403 = vector.extract_strided_slice %402 {offsets = [0, 0], sizes = [8, 192], strides = [1, 1]} : vector<8x256xf32> to vector<8x192xf32>
    %404 = arith.negf %403 : vector<8x192xf32>
    %405 = math.exp %404 : vector<8x192xf32>
    %cst_127 = arith.constant 1.000000e+00 : f32
    %406 = vector.broadcast %cst_127 : f32 to vector<8x192xf32>
    %407 = arith.addf %406, %405 : vector<8x192xf32>
    %408 = arith.divf %406, %407 : vector<8x192xf32>
    %409 = vector.extract_strided_slice %408 {offsets = [0, 0], sizes = [8, 64], strides = [1, 1]} : vector<8x192xf32> to vector<8x64xf32>
    %410 = vector.extract_strided_slice %408 {offsets = [0, 64], sizes = [8, 64], strides = [1, 1]} : vector<8x192xf32> to vector<8x64xf32>
    %411 = vector.extract_strided_slice %408 {offsets = [0, 128], sizes = [8, 64], strides = [1, 1]} : vector<8x192xf32> to vector<8x64xf32>
    %412 = vector.extract_strided_slice %402 {offsets = [0, 192], sizes = [8, 64], strides = [1, 1]} : vector<8x256xf32> to vector<8x64xf32>
    %413 = math.tanh %412 : vector<8x64xf32>
    %414 = arith.mulf %410, %381 : vector<8x64xf32>
    %415 = arith.mulf %409, %413 : vector<8x64xf32>
    %416 = arith.addf %414, %415 : vector<8x64xf32>
    %417 = math.tanh %416 : vector<8x64xf32>
    %418 = arith.mulf %411, %417 : vector<8x64xf32>
    %419 = vector.extract_strided_slice %418 {offsets = [0, 0], sizes = [8, 32], strides = [1, 1]} : vector<8x64xf32> to vector<8x32xf32>
    %420 = arith.index_cast %394 : i32 to index
    %c0_128 = arith.constant 0 : index
    %421 = vector.load %arg11[%420, %c0_128] : memref<64x64xf32, #tpu.memory_space<vmem>>, vector<8x32xf32>
    tpu.vector_store %arg11[%420, %c0_128], %419 {strides = array<i32>} : memref<64x64xf32, #tpu.memory_space<vmem>>, vector<8x32xf32>,
    %422 = vector.extract_strided_slice %418 {offsets = [0, 32], sizes = [8, 32], strides = [1, 1]} : vector<8x64xf32> to vector<8x32xf32>
    %423 = arith.index_cast %396 : i32 to index
    %c32_129 = arith.constant 32 : index
    %424 = vector.load %arg11[%423, %c32_129] : memref<64x64xf32, #tpu.memory_space<vmem>>, vector<8x32xf32>
    tpu.vector_store %arg11[%423, %c32_129], %422 {strides = array<i32>} : memref<64x64xf32, #tpu.memory_space<vmem>>, vector<8x32xf32>,
    %c3_i32_130 = arith.constant 3 : i32
    %425 = arith.truncf %418 : vector<8x64xf32> to vector<8x64xbf16>
    %cst_131 = arith.constant dense<0.000000e+00> : vector<8x256xf32>
    %426 = tpu.matmul %425, %317, %cst_131 {dimension_numbers = #tpu.dot_dimension_numbers<[1], [0], [0], [1], [0, 0, 1, 1], [], []>} : vector<8x64xbf16>, vector<64x256xbf16>, vector<8x256xf32> -> vector<8x256xf32>
    %c7_i32_132 = arith.constant 7 : i32
    %427 = arith.subi %c7_i32_132, %c3_i32_130 : i32
    %c8_i32_133 = arith.constant 8 : i32
    %428 = arith.muli %c3_i32_130, %c8_i32_133 : i32
    %429 = tpu.assume_multiple %428, 8 : i32
    %c8_i32_134 = arith.constant 8 : i32
    %430 = arith.muli %427, %c8_i32_134 : i32
    %431 = tpu.assume_multiple %430, 8 : i32
    %432 = arith.index_cast %429 : i32 to index
    %c0_135 = arith.constant 0 : index
    %433 = vector.load %arg10[%432, %c0_135] : memref<64x256xf32, #tpu.memory_space<vmem>>, vector<8x256xf32>
    %434 = arith.index_cast %431 : i32 to index
    %c0_136 = arith.constant 0 : index
    %435 = vector.load %arg10[%434, %c0_136] : memref<64x256xf32, #tpu.memory_space<vmem>>, vector<8x256xf32>
    %436 = arith.select %18, %433, %435 : vector<8x256xi1>, vector<8x256xf32>
    %437 = arith.addf %436, %426 : vector<8x256xf32>
    %438 = vector.extract_strided_slice %437 {offsets = [0, 0], sizes = [8, 192], strides = [1, 1]} : vector<8x256xf32> to vector<8x192xf32>
    %439 = arith.negf %438 : vector<8x192xf32>
    %440 = math.exp %439 : vector<8x192xf32>
    %cst_137 = arith.constant 1.000000e+00 : f32
    %441 = vector.broadcast %cst_137 : f32 to vector<8x192xf32>
    %442 = arith.addf %441, %440 : vector<8x192xf32>
    %443 = arith.divf %441, %442 : vector<8x192xf32>
    %444 = vector.extract_strided_slice %443 {offsets = [0, 0], sizes = [8, 64], strides = [1, 1]} : vector<8x192xf32> to vector<8x64xf32>
    %445 = vector.extract_strided_slice %443 {offsets = [0, 64], sizes = [8, 64], strides = [1, 1]} : vector<8x192xf32> to vector<8x64xf32>
    %446 = vector.extract_strided_slice %443 {offsets = [0, 128], sizes = [8, 64], strides = [1, 1]} : vector<8x192xf32> to vector<8x64xf32>
    %447 = vector.extract_strided_slice %437 {offsets = [0, 192], sizes = [8, 64], strides = [1, 1]} : vector<8x256xf32> to vector<8x64xf32>
    %448 = math.tanh %447 : vector<8x64xf32>
    %449 = arith.mulf %445, %416 : vector<8x64xf32>
    %450 = arith.mulf %444, %448 : vector<8x64xf32>
    %451 = arith.addf %449, %450 : vector<8x64xf32>
    %452 = math.tanh %451 : vector<8x64xf32>
    %453 = arith.mulf %446, %452 : vector<8x64xf32>
    %454 = vector.extract_strided_slice %453 {offsets = [0, 0], sizes = [8, 32], strides = [1, 1]} : vector<8x64xf32> to vector<8x32xf32>
    %455 = arith.index_cast %429 : i32 to index
    %c0_138 = arith.constant 0 : index
    %456 = vector.load %arg11[%455, %c0_138] : memref<64x64xf32, #tpu.memory_space<vmem>>, vector<8x32xf32>
    tpu.vector_store %arg11[%455, %c0_138], %454 {strides = array<i32>} : memref<64x64xf32, #tpu.memory_space<vmem>>, vector<8x32xf32>,
    %457 = vector.extract_strided_slice %453 {offsets = [0, 32], sizes = [8, 32], strides = [1, 1]} : vector<8x64xf32> to vector<8x32xf32>
    %458 = arith.index_cast %431 : i32 to index
    %c32_139 = arith.constant 32 : index
    %459 = vector.load %arg11[%458, %c32_139] : memref<64x64xf32, #tpu.memory_space<vmem>>, vector<8x32xf32>
    tpu.vector_store %arg11[%458, %c32_139], %457 {strides = array<i32>} : memref<64x64xf32, #tpu.memory_space<vmem>>, vector<8x32xf32>,
    %c4_i32_140 = arith.constant 4 : i32
    %460 = arith.truncf %453 : vector<8x64xf32> to vector<8x64xbf16>
    %cst_141 = arith.constant dense<0.000000e+00> : vector<8x256xf32>
    %461 = tpu.matmul %460, %317, %cst_141 {dimension_numbers = #tpu.dot_dimension_numbers<[1], [0], [0], [1], [0, 0, 1, 1], [], []>} : vector<8x64xbf16>, vector<64x256xbf16>, vector<8x256xf32> -> vector<8x256xf32>
    %c7_i32_142 = arith.constant 7 : i32
    %462 = arith.subi %c7_i32_142, %c4_i32_140 : i32
    %c8_i32_143 = arith.constant 8 : i32
    %463 = arith.muli %c4_i32_140, %c8_i32_143 : i32
    %464 = tpu.assume_multiple %463, 8 : i32
    %c8_i32_144 = arith.constant 8 : i32
    %465 = arith.muli %462, %c8_i32_144 : i32
    %466 = tpu.assume_multiple %465, 8 : i32
    %467 = arith.index_cast %464 : i32 to index
    %c0_145 = arith.constant 0 : index
    %468 = vector.load %arg10[%467, %c0_145] : memref<64x256xf32, #tpu.memory_space<vmem>>, vector<8x256xf32>
    %469 = arith.index_cast %466 : i32 to index
    %c0_146 = arith.constant 0 : index
    %470 = vector.load %arg10[%469, %c0_146] : memref<64x256xf32, #tpu.memory_space<vmem>>, vector<8x256xf32>
    %471 = arith.select %18, %468, %470 : vector<8x256xi1>, vector<8x256xf32>
    %472 = arith.addf %471, %461 : vector<8x256xf32>
    %473 = vector.extract_strided_slice %472 {offsets = [0, 0], sizes = [8, 192], strides = [1, 1]} : vector<8x256xf32> to vector<8x192xf32>
    %474 = arith.negf %473 : vector<8x192xf32>
    %475 = math.exp %474 : vector<8x192xf32>
    %cst_147 = arith.constant 1.000000e+00 : f32
    %476 = vector.broadcast %cst_147 : f32 to vector<8x192xf32>
    %477 = arith.addf %476, %475 : vector<8x192xf32>
    %478 = arith.divf %476, %477 : vector<8x192xf32>
    %479 = vector.extract_strided_slice %478 {offsets = [0, 0], sizes = [8, 64], strides = [1, 1]} : vector<8x192xf32> to vector<8x64xf32>
    %480 = vector.extract_strided_slice %478 {offsets = [0, 64], sizes = [8, 64], strides = [1, 1]} : vector<8x192xf32> to vector<8x64xf32>
    %481 = vector.extract_strided_slice %478 {offsets = [0, 128], sizes = [8, 64], strides = [1, 1]} : vector<8x192xf32> to vector<8x64xf32>
    %482 = vector.extract_strided_slice %472 {offsets = [0, 192], sizes = [8, 64], strides = [1, 1]} : vector<8x256xf32> to vector<8x64xf32>
    %483 = math.tanh %482 : vector<8x64xf32>
    %484 = arith.mulf %480, %451 : vector<8x64xf32>
    %485 = arith.mulf %479, %483 : vector<8x64xf32>
    %486 = arith.addf %484, %485 : vector<8x64xf32>
    %487 = math.tanh %486 : vector<8x64xf32>
    %488 = arith.mulf %481, %487 : vector<8x64xf32>
    %489 = vector.extract_strided_slice %488 {offsets = [0, 0], sizes = [8, 32], strides = [1, 1]} : vector<8x64xf32> to vector<8x32xf32>
    %490 = arith.index_cast %464 : i32 to index
    %c0_148 = arith.constant 0 : index
    %491 = vector.load %arg11[%490, %c0_148] : memref<64x64xf32, #tpu.memory_space<vmem>>, vector<8x32xf32>
    tpu.vector_store %arg11[%490, %c0_148], %489 {strides = array<i32>} : memref<64x64xf32, #tpu.memory_space<vmem>>, vector<8x32xf32>,
    %492 = vector.extract_strided_slice %488 {offsets = [0, 32], sizes = [8, 32], strides = [1, 1]} : vector<8x64xf32> to vector<8x32xf32>
    %493 = arith.index_cast %466 : i32 to index
    %c32_149 = arith.constant 32 : index
    %494 = vector.load %arg11[%493, %c32_149] : memref<64x64xf32, #tpu.memory_space<vmem>>, vector<8x32xf32>
    tpu.vector_store %arg11[%493, %c32_149], %492 {strides = array<i32>} : memref<64x64xf32, #tpu.memory_space<vmem>>, vector<8x32xf32>,
    %c5_i32_150 = arith.constant 5 : i32
    %495 = arith.truncf %488 : vector<8x64xf32> to vector<8x64xbf16>
    %cst_151 = arith.constant dense<0.000000e+00> : vector<8x256xf32>
    %496 = tpu.matmul %495, %317, %cst_151 {dimension_numbers = #tpu.dot_dimension_numbers<[1], [0], [0], [1], [0, 0, 1, 1], [], []>} : vector<8x64xbf16>, vector<64x256xbf16>, vector<8x256xf32> -> vector<8x256xf32>
    %c7_i32_152 = arith.constant 7 : i32
    %497 = arith.subi %c7_i32_152, %c5_i32_150 : i32
    %c8_i32_153 = arith.constant 8 : i32
    %498 = arith.muli %c5_i32_150, %c8_i32_153 : i32
    %499 = tpu.assume_multiple %498, 8 : i32
    %c8_i32_154 = arith.constant 8 : i32
    %500 = arith.muli %497, %c8_i32_154 : i32
    %501 = tpu.assume_multiple %500, 8 : i32
    %502 = arith.index_cast %499 : i32 to index
    %c0_155 = arith.constant 0 : index
    %503 = vector.load %arg10[%502, %c0_155] : memref<64x256xf32, #tpu.memory_space<vmem>>, vector<8x256xf32>
    %504 = arith.index_cast %501 : i32 to index
    %c0_156 = arith.constant 0 : index
    %505 = vector.load %arg10[%504, %c0_156] : memref<64x256xf32, #tpu.memory_space<vmem>>, vector<8x256xf32>
    %506 = arith.select %18, %503, %505 : vector<8x256xi1>, vector<8x256xf32>
    %507 = arith.addf %506, %496 : vector<8x256xf32>
    %508 = vector.extract_strided_slice %507 {offsets = [0, 0], sizes = [8, 192], strides = [1, 1]} : vector<8x256xf32> to vector<8x192xf32>
    %509 = arith.negf %508 : vector<8x192xf32>
    %510 = math.exp %509 : vector<8x192xf32>
    %cst_157 = arith.constant 1.000000e+00 : f32
    %511 = vector.broadcast %cst_157 : f32 to vector<8x192xf32>
    %512 = arith.addf %511, %510 : vector<8x192xf32>
    %513 = arith.divf %511, %512 : vector<8x192xf32>
    %514 = vector.extract_strided_slice %513 {offsets = [0, 0], sizes = [8, 64], strides = [1, 1]} : vector<8x192xf32> to vector<8x64xf32>
    %515 = vector.extract_strided_slice %513 {offsets = [0, 64], sizes = [8, 64], strides = [1, 1]} : vector<8x192xf32> to vector<8x64xf32>
    %516 = vector.extract_strided_slice %513 {offsets = [0, 128], sizes = [8, 64], strides = [1, 1]} : vector<8x192xf32> to vector<8x64xf32>
    %517 = vector.extract_strided_slice %507 {offsets = [0, 192], sizes = [8, 64], strides = [1, 1]} : vector<8x256xf32> to vector<8x64xf32>
    %518 = math.tanh %517 : vector<8x64xf32>
    %519 = arith.mulf %515, %486 : vector<8x64xf32>
    %520 = arith.mulf %514, %518 : vector<8x64xf32>
    %521 = arith.addf %519, %520 : vector<8x64xf32>
    %522 = math.tanh %521 : vector<8x64xf32>
    %523 = arith.mulf %516, %522 : vector<8x64xf32>
    %524 = vector.extract_strided_slice %523 {offsets = [0, 0], sizes = [8, 32], strides = [1, 1]} : vector<8x64xf32> to vector<8x32xf32>
    %525 = arith.index_cast %499 : i32 to index
    %c0_158 = arith.constant 0 : index
    %526 = vector.load %arg11[%525, %c0_158] : memref<64x64xf32, #tpu.memory_space<vmem>>, vector<8x32xf32>
    tpu.vector_store %arg11[%525, %c0_158], %524 {strides = array<i32>} : memref<64x64xf32, #tpu.memory_space<vmem>>, vector<8x32xf32>,
    %527 = vector.extract_strided_slice %523 {offsets = [0, 32], sizes = [8, 32], strides = [1, 1]} : vector<8x64xf32> to vector<8x32xf32>
    %528 = arith.index_cast %501 : i32 to index
    %c32_159 = arith.constant 32 : index
    %529 = vector.load %arg11[%528, %c32_159] : memref<64x64xf32, #tpu.memory_space<vmem>>, vector<8x32xf32>
    tpu.vector_store %arg11[%528, %c32_159], %527 {strides = array<i32>} : memref<64x64xf32, #tpu.memory_space<vmem>>, vector<8x32xf32>,
    %c6_i32_160 = arith.constant 6 : i32
    %530 = arith.truncf %523 : vector<8x64xf32> to vector<8x64xbf16>
    %cst_161 = arith.constant dense<0.000000e+00> : vector<8x256xf32>
    %531 = tpu.matmul %530, %317, %cst_161 {dimension_numbers = #tpu.dot_dimension_numbers<[1], [0], [0], [1], [0, 0, 1, 1], [], []>} : vector<8x64xbf16>, vector<64x256xbf16>, vector<8x256xf32> -> vector<8x256xf32>
    %c7_i32_162 = arith.constant 7 : i32
    %532 = arith.subi %c7_i32_162, %c6_i32_160 : i32
    %c8_i32_163 = arith.constant 8 : i32
    %533 = arith.muli %c6_i32_160, %c8_i32_163 : i32
    %534 = tpu.assume_multiple %533, 8 : i32
    %c8_i32_164 = arith.constant 8 : i32
    %535 = arith.muli %532, %c8_i32_164 : i32
    %536 = tpu.assume_multiple %535, 8 : i32
    %537 = arith.index_cast %534 : i32 to index
    %c0_165 = arith.constant 0 : index
    %538 = vector.load %arg10[%537, %c0_165] : memref<64x256xf32, #tpu.memory_space<vmem>>, vector<8x256xf32>
    %539 = arith.index_cast %536 : i32 to index
    %c0_166 = arith.constant 0 : index
    %540 = vector.load %arg10[%539, %c0_166] : memref<64x256xf32, #tpu.memory_space<vmem>>, vector<8x256xf32>
    %541 = arith.select %18, %538, %540 : vector<8x256xi1>, vector<8x256xf32>
    %542 = arith.addf %541, %531 : vector<8x256xf32>
    %543 = vector.extract_strided_slice %542 {offsets = [0, 0], sizes = [8, 192], strides = [1, 1]} : vector<8x256xf32> to vector<8x192xf32>
    %544 = arith.negf %543 : vector<8x192xf32>
    %545 = math.exp %544 : vector<8x192xf32>
    %cst_167 = arith.constant 1.000000e+00 : f32
    %546 = vector.broadcast %cst_167 : f32 to vector<8x192xf32>
    %547 = arith.addf %546, %545 : vector<8x192xf32>
    %548 = arith.divf %546, %547 : vector<8x192xf32>
    %549 = vector.extract_strided_slice %548 {offsets = [0, 0], sizes = [8, 64], strides = [1, 1]} : vector<8x192xf32> to vector<8x64xf32>
    %550 = vector.extract_strided_slice %548 {offsets = [0, 64], sizes = [8, 64], strides = [1, 1]} : vector<8x192xf32> to vector<8x64xf32>
    %551 = vector.extract_strided_slice %548 {offsets = [0, 128], sizes = [8, 64], strides = [1, 1]} : vector<8x192xf32> to vector<8x64xf32>
    %552 = vector.extract_strided_slice %542 {offsets = [0, 192], sizes = [8, 64], strides = [1, 1]} : vector<8x256xf32> to vector<8x64xf32>
    %553 = math.tanh %552 : vector<8x64xf32>
    %554 = arith.mulf %550, %521 : vector<8x64xf32>
    %555 = arith.mulf %549, %553 : vector<8x64xf32>
    %556 = arith.addf %554, %555 : vector<8x64xf32>
    %557 = math.tanh %556 : vector<8x64xf32>
    %558 = arith.mulf %551, %557 : vector<8x64xf32>
    %559 = vector.extract_strided_slice %558 {offsets = [0, 0], sizes = [8, 32], strides = [1, 1]} : vector<8x64xf32> to vector<8x32xf32>
    %560 = arith.index_cast %534 : i32 to index
    %c0_168 = arith.constant 0 : index
    %561 = vector.load %arg11[%560, %c0_168] : memref<64x64xf32, #tpu.memory_space<vmem>>, vector<8x32xf32>
    tpu.vector_store %arg11[%560, %c0_168], %559 {strides = array<i32>} : memref<64x64xf32, #tpu.memory_space<vmem>>, vector<8x32xf32>,
    %562 = vector.extract_strided_slice %558 {offsets = [0, 32], sizes = [8, 32], strides = [1, 1]} : vector<8x64xf32> to vector<8x32xf32>
    %563 = arith.index_cast %536 : i32 to index
    %c32_169 = arith.constant 32 : index
    %564 = vector.load %arg11[%563, %c32_169] : memref<64x64xf32, #tpu.memory_space<vmem>>, vector<8x32xf32>
    tpu.vector_store %arg11[%563, %c32_169], %562 {strides = array<i32>} : memref<64x64xf32, #tpu.memory_space<vmem>>, vector<8x32xf32>,
    %c7_i32_170 = arith.constant 7 : i32
    %565 = arith.truncf %558 : vector<8x64xf32> to vector<8x64xbf16>
    %cst_171 = arith.constant dense<0.000000e+00> : vector<8x256xf32>
    %566 = tpu.matmul %565, %317, %cst_171 {dimension_numbers = #tpu.dot_dimension_numbers<[1], [0], [0], [1], [0, 0, 1, 1], [], []>} : vector<8x64xbf16>, vector<64x256xbf16>, vector<8x256xf32> -> vector<8x256xf32>
    %c7_i32_172 = arith.constant 7 : i32
    %567 = arith.subi %c7_i32_172, %c7_i32_170 : i32
    %c8_i32_173 = arith.constant 8 : i32
    %568 = arith.muli %c7_i32_170, %c8_i32_173 : i32
    %569 = tpu.assume_multiple %568, 8 : i32
    %c8_i32_174 = arith.constant 8 : i32
    %570 = arith.muli %567, %c8_i32_174 : i32
    %571 = tpu.assume_multiple %570, 8 : i32
    %572 = arith.index_cast %569 : i32 to index
    %c0_175 = arith.constant 0 : index
    %573 = vector.load %arg10[%572, %c0_175] : memref<64x256xf32, #tpu.memory_space<vmem>>, vector<8x256xf32>
    %574 = arith.index_cast %571 : i32 to index
    %c0_176 = arith.constant 0 : index
    %575 = vector.load %arg10[%574, %c0_176] : memref<64x256xf32, #tpu.memory_space<vmem>>, vector<8x256xf32>
    %576 = arith.select %18, %573, %575 : vector<8x256xi1>, vector<8x256xf32>
    %577 = arith.addf %576, %566 : vector<8x256xf32>
    %578 = vector.extract_strided_slice %577 {offsets = [0, 0], sizes = [8, 192], strides = [1, 1]} : vector<8x256xf32> to vector<8x192xf32>
    %579 = arith.negf %578 : vector<8x192xf32>
    %580 = math.exp %579 : vector<8x192xf32>
    %cst_177 = arith.constant 1.000000e+00 : f32
    %581 = vector.broadcast %cst_177 : f32 to vector<8x192xf32>
    %582 = arith.addf %581, %580 : vector<8x192xf32>
    %583 = arith.divf %581, %582 : vector<8x192xf32>
    %584 = vector.extract_strided_slice %583 {offsets = [0, 0], sizes = [8, 64], strides = [1, 1]} : vector<8x192xf32> to vector<8x64xf32>
    %585 = vector.extract_strided_slice %583 {offsets = [0, 64], sizes = [8, 64], strides = [1, 1]} : vector<8x192xf32> to vector<8x64xf32>
    %586 = vector.extract_strided_slice %583 {offsets = [0, 128], sizes = [8, 64], strides = [1, 1]} : vector<8x192xf32> to vector<8x64xf32>
    %587 = vector.extract_strided_slice %577 {offsets = [0, 192], sizes = [8, 64], strides = [1, 1]} : vector<8x256xf32> to vector<8x64xf32>
    %588 = math.tanh %587 : vector<8x64xf32>
    %589 = arith.mulf %585, %556 : vector<8x64xf32>
    %590 = arith.mulf %584, %588 : vector<8x64xf32>
    %591 = arith.addf %589, %590 : vector<8x64xf32>
    %592 = math.tanh %591 : vector<8x64xf32>
    %593 = arith.mulf %586, %592 : vector<8x64xf32>
    %594 = vector.extract_strided_slice %593 {offsets = [0, 0], sizes = [8, 32], strides = [1, 1]} : vector<8x64xf32> to vector<8x32xf32>
    %595 = arith.index_cast %569 : i32 to index
    %c0_178 = arith.constant 0 : index
    %596 = vector.load %arg11[%595, %c0_178] : memref<64x64xf32, #tpu.memory_space<vmem>>, vector<8x32xf32>
    tpu.vector_store %arg11[%595, %c0_178], %594 {strides = array<i32>} : memref<64x64xf32, #tpu.memory_space<vmem>>, vector<8x32xf32>,
    %597 = vector.extract_strided_slice %593 {offsets = [0, 32], sizes = [8, 32], strides = [1, 1]} : vector<8x64xf32> to vector<8x32xf32>
    %598 = arith.index_cast %571 : i32 to index
    %c32_179 = arith.constant 32 : index
    %599 = vector.load %arg11[%598, %c32_179] : memref<64x64xf32, #tpu.memory_space<vmem>>, vector<8x32xf32>
    tpu.vector_store %arg11[%598, %c32_179], %597 {strides = array<i32>} : memref<64x64xf32, #tpu.memory_space<vmem>>, vector<8x32xf32>,
    %c8_i32_180 = arith.constant 8 : i32
    %c56_i32 = arith.constant 56 : i32
    %600 = tpu.assume_multiple %c56_i32, 8 : i32
    %601 = arith.index_cast %600 : i32 to index
    %c0_181 = arith.constant 0 : index
    %602 = vector.load %arg11[%601, %c0_181] : memref<64x64xf32, #tpu.memory_space<vmem>>, vector<8x64xf32>
    %603 = arith.truncf %602 : vector<8x64xf32> to vector<8x64xbf16>
    %c0_182 = arith.constant 0 : index
    %c0_183 = arith.constant 0 : index
    %604 = vector.load %arg7[%c0_182, %c0_183] : memref<64x4xbf16, #tpu.memory_space<vmem>>, vector<64x4xbf16>
    %cst_184 = arith.constant dense<0.000000e+00> : vector<8x4xf32>
    %605 = tpu.matmul %603, %604, %cst_184 {dimension_numbers = #tpu.dot_dimension_numbers<[1], [0], [0], [1], [0, 0, 1, 1], [], []>} : vector<8x64xbf16>, vector<64x4xbf16>, vector<8x4xf32> -> vector<8x4xf32>
    %c0_185 = arith.constant 0 : index
    %c0_186 = arith.constant 0 : index
    %606 = vector.load %arg8[%c0_185, %c0_186] : memref<1x4xf32, #tpu.memory_space<vmem>>, vector<1x4xf32>
    %607 = vector.broadcast %606 : vector<1x4xf32> to vector<8x4xf32>
    %608 = arith.addf %605, %607 : vector<8x4xf32>
    %609 = vector.extract_strided_slice %608 {offsets = [0, 0], sizes = [2, 4], strides = [1, 1]} : vector<8x4xf32> to vector<2x4xf32>
    %c0_187 = arith.constant 0 : index
    %c0_188 = arith.constant 0 : index
    %610 = vector.load %arg9[%c0_187, %c0_188] : memref<2x4xf32, #tpu.memory_space<vmem>>, vector<2x4xf32>
    tpu.vector_store %arg9[%c0_187, %c0_188], %609 {strides = array<i32>} : memref<2x4xf32, #tpu.memory_space<vmem>>, vector<2x4xf32>,
    return
  }
}

</mosaic_0001>

<llo_original>
// kernel: tpu_custom_call.1
$region0: #{tpu_custom_call.1}
  #allocation0 [shape = 'u32[]', space=smem, size = 0x4, offset = 0x4, fixed_abs, tag = 'smem constant byte address 0x4 - core index']
  #allocation1 [shape = 'u32[144,128]{1,0:T(1,128)}', space=vmem, size = 0x12000, scoped, tag = 'internal scratch']
  #allocation2 [shape = 'f32[64,256]{1,0:T(8,128)}', space=vmem, size = 0x10000, scoped, tag = 'scratch operand']
  #allocation3 [shape = 'f32[64,64]{1,0:T(8,128)}', space=vmem, size = 0x8000, scoped, tag = 'scratch operand']
  %s0 = inlined_call_operand.vmem [shape: bf16[64,16], index: 0, kind: input, shape index: {}]
  %s1 = inlined_call_operand.vmem [shape: bf16[16,256], index: 1, kind: input, shape index: {}]
  %s2 = inlined_call_operand.vmem [shape: bf16[64,256], index: 2, kind: input, shape index: {}]
  %s3 = inlined_call_operand.vmem [shape: f32[1,256], index: 3, kind: input, shape index: {}]
  %s4 = inlined_call_operand.hbm [shape: bf16[64,256], index: 4, kind: input, shape index: {}]
  %s5 = inlined_call_operand.hbm [shape: bf16[64,256], index: 5, kind: input, shape index: {}]
  %s6 = inlined_call_operand.vmem [shape: f32[1,256], index: 6, kind: input, shape index: {}]
  %s7 = inlined_call_operand.vmem [shape: bf16[64,4], index: 7, kind: input, shape index: {}]
  %s8 = inlined_call_operand.vmem [shape: f32[1,4], index: 8, kind: input, shape index: {}]
  %s9 = inlined_call_operand.hbm [shape: f32[2,4], index: 9, kind: output, shape index: {}]
  %s10 = sld [smem:[#allocation0]]
  $region54: #{tpu_custom_call.1} parent=0
    _
  %s12 = ssub.s32 1, %s10
  %s13 = scalar_select 0, %s12, %s10
  $region1: #{tpu_custom_call.1} parent=0
    #allocation4 [shape = 'u8[32768]{0}', space=vmem, size = 0x8000, scoped, tag = 'input window, operand 4, single buffered']
    #allocation5 [shape = 's32[1]{0}', space=sflag, size = 0x4, scoped, tag = 'scoped memory for tpu_custom_call.1']
    #allocation6 [shape = 's32[1]{0}', space=sflag, size = 0x4, scoped, tag = 'scoped memory for tpu_custom_call.1']
    #allocation7 [shape = 'u8[32768]{0}', space=vmem, size = 0x8000, scoped, tag = 'input window, operand 5, single buffered']
    #allocation8 [shape = 's32[1]{0}', space=sflag, size = 0x4, scoped, tag = 'scoped memory for tpu_custom_call.1']
    #allocation9 [shape = 'u8[1024]{0}', space=vmem, size = 0x400, scoped, tag = 'output window, operand 0, single buffered']
    %14 = vsyncpa [#allocation5], 0
    %15 = vsyncpa [#allocation8], 0
    %16 = vsyncpa [#allocation6], 0
    // Predicated region
    $region2: #{tpu_custom_call.1} parent=1 // pred_check
      _
    $region3: #{tpu_custom_call.1} parent=1 // pred_check_branch
      %18 = sbr.rel (0) target = $region5
    $region4: #{tpu_custom_call.1} parent=1 // pred_region
      _
    $region5: #{tpu_custom_call.1} parent=1 // pred_fallthru
      _
    // Predicated region
    $region6: #{tpu_custom_call.1} parent=1 // pred_check
      _
    $region7: #{tpu_custom_call.1} parent=1 // pred_check_branch
      %20 = sbr.rel (0) target = $region9
    $region8: #{tpu_custom_call.1} parent=1 // pred_region
      _
    $region9: #{tpu_custom_call.1} parent=1 // pred_fallthru
      _
    // Predicated region
    $region10: #{tpu_custom_call.1} parent=1 // pred_check
      _
    $region11: #{tpu_custom_call.1} parent=1 // pred_check_branch
      %22 = sbr.rel (0) target = $region13
    $region12: #{tpu_custom_call.1} parent=1 // pred_region
      _
    $region13: #{tpu_custom_call.1} parent=1 // pred_fallthru
      _
    // Predicated region
    $region14: #{tpu_custom_call.1} parent=1 // pred_check
      _
    $region15: #{tpu_custom_call.1} parent=1 // pred_check_branch
      %24 = sbr.rel (0) target = $region17
    $region16: #{tpu_custom_call.1} parent=1 // pred_region
      _
    $region17: #{tpu_custom_call.1} parent=1 // pred_fallthru
      _
    // Predicated region
    $region18: #{tpu_custom_call.1} parent=1 // pred_check
      _
    $region19: #{tpu_custom_call.1} parent=1 // pred_check_branch
      %26 = sbr.rel (0) target = $region21
    $region20: #{tpu_custom_call.1} parent=1 // pred_region
      %s28 = ssub.s32 1024, 1024
      %29 = vsyncadd [#allocation5], %s28
      %s30 = sshll.u32 [#allocation4], 4
      %s31 = int_to_ptr.vmem [resolvable:$true] %s30
      %36 = dma.hbm_to_vmem [thread:$0]  %s4, 1024, %s31, [#allocation5], 128, 128, 8
    $region21: #{tpu_custom_call.1} parent=1 // pred_fallthru
      _
    // Predicated region
    $region22: #{tpu_custom_call.1} parent=1 // pred_check
      _
    $region23: #{tpu_custom_call.1} parent=1 // pred_check_branch
      %38 = sbr.rel (0) target = $region25
    $region24: #{tpu_custom_call.1} parent=1 // pred_region
      %s40 = ssub.s32 1024, 1024
      %41 = vsyncadd [#allocation8], %s40
      %s42 = sshll.u32 [#allocation7], 4
      %s43 = int_to_ptr.vmem [resolvable:$true] %s42
      %48 = dma.hbm_to_vmem [thread:$0]  %s5, 1024, %s43, [#allocation8], 128, 128, 8
    $region25: #{tpu_custom_call.1} parent=1 // pred_fallthru
      _
    // Predicated region
    $region26: #{tpu_custom_call.1} parent=1 // pred_check
      _
    $region27: #{tpu_custom_call.1} parent=1 // pred_check_branch
      %50 = sbr.rel (0) target = $region29
    $region28: #{tpu_custom_call.1} parent=1 // pred_region
      _
    $region29: #{tpu_custom_call.1} parent=1 // pred_fallthru
      _
    // Predicated region
    $region30: #{tpu_custom_call.1} parent=1 // pred_check
      _
    $region31: #{tpu_custom_call.1} parent=1 // pred_check_branch
      %52 = sbr.rel (0) target = $region33
    $region32: #{tpu_custom_call.1} parent=1 // pred_region
      _
    $region33: #{tpu_custom_call.1} parent=1 // pred_fallthru
      _
    // Predicated region
    $region34: #{tpu_custom_call.1} parent=1 // pred_check
      _
    $region35: #{tpu_custom_call.1} parent=1 // pred_check_branch
      %54 = sbr.rel (0) target = $region37
    $region36: #{tpu_custom_call.1} parent=1 // pred_region
      _
    $region37: #{tpu_custom_call.1} parent=1 // pred_fallthru
      _
    // Predicated region
    $region38: #{tpu_custom_call.1} parent=1 // pred_check
      _
    $region39: #{tpu_custom_call.1} parent=1 // pred_check_branch
      %56 = sbr.rel (0) target = $region41
    $region40: #{tpu_custom_call.1} parent=1 // pred_region
      %57 = dma.done [#allocation5], 1024
    $region41: #{tpu_custom_call.1} parent=1 // pred_fallthru
      _
    // Predicated region
    $region42: #{tpu_custom_call.1} parent=1 // pred_check
      _
    $region43: #{tpu_custom_call.1} parent=1 // pred_check_branch
      %59 = sbr.rel (0) target = $region45
    $region44: #{tpu_custom_call.1} parent=1 // pred_region
      %60 = dma.done [#allocation8], 1024
    $region45: #{tpu_custom_call.1} parent=1 // pred_fallthru
      _
    %v62 = vlaneseq
    %v63 = vand.u32 %v62, 127
    %v64 = vadd.s32 %v63, 128
    %vm65 = vcmp.lt.s32.totalorder %v63, 0
    %v66 = vsub.s32 0, %v63
    %v67 = vsel %vm65, %v66, %v63
    %v68 = vshrl.u32 %v67, 6
    %v69 = vand.u32 %v67, 63
    %v70 = vsub.s32 0, %v69
    %v71 = vsel %vm65, %v70, %v69
    %vm72 = vcmp.lt.s32.totalorder %v64, 0
    %v73 = vsub.s32 0, %v64
    %v74 = vsel %vm72, %v73, %v64
    %v75 = vshrl.u32 %v74, 6
    %v76 = vand.u32 %v74, 63
    %v77 = vsub.s32 0, %v76
    %v78 = vsel %vm72, %v77, %v76
    %vm79 = vcmp.ne.s32.totalorder %v71, 0
    %vm80 = vcmp.ne.s32.totalorder %v78, 0
    %vm81 = vcmp.lt.s32.totalorder %v71, 0
    %vm82 = vcmp.lt.s32.totalorder %v78, 0
    %vm83 = vmand %vm81, %vm79
    %vm84 = vmand %vm82, %vm80
    %v85 = vadd.s32 %v71, 64
    %v86 = vadd.s32 %v78, 64
    %v87 = vsel %vm83, %v85, %v71
    %v88 = vsel %vm84, %v86, %v78
    %vm89 = vcmp.lt.s32.totalorder %v87, 32
    %vm90 = vcmp.lt.s32.totalorder %v88, 32
    %v91 = vld [vmem:[%s0] sm:$0xf]
    %v92 = vld [vmem:[%s0 + $0x4] sm:$0xf]
    %v93 = vld [vmem:[%s0 + $0x8] sm:$0xf]
    %v94 = vld [vmem:[%s0 + $0xc] sm:$0xf]
    %v95 = vld [vmem:[%s0 + $0x10] sm:$0xf]
    %v96 = vld [vmem:[%s0 + $0x14] sm:$0xf]
    %v97 = vld [vmem:[%s0 + $0x18] sm:$0xf]
    %v98 = vld [vmem:[%s0 + $0x1c] sm:$0xf]
    %v99 = vld [vmem:[%s1] sm:$0xff]
    %v100 = vld [vmem:[%s1 + $0x8] sm:$0xff]
    %v101 = vld [vmem:[%s3] sm:$0x3]
    %v103 = vlaneseq
    %v104 = vshrl.u32 %v103, 7
    %v105 = vsub.s32 0, %v104
    %v106 = vrot.slane %v101, %v105
    %v107 = vlaneseq
    %v108 = vshrl.u32 %v107, 7
    %v109 = vsub.s32 1, %v108
    %v110 = vrot.slane %v101, %v109
    %v121 = vunpack.c.l.b16 %v91
    %v122 = vunpack.c.l.b16 %v92
    %v123 = vunpack.c.l.b16 %v93
    %v124 = vunpack.c.l.b16 %v94
    %v125 = vunpack.c.l.b16 %v95
    %v126 = vunpack.c.l.b16 %v96
    %v127 = vunpack.c.l.b16 %v97
    %v128 = vunpack.c.l.b16 %v98
    %v129 = vpack.c.b16 %v122, %v121
    %v130 = vpack.c.b16 %v124, %v123
    %v131 = vpack.c.b16 %v126, %v125
    %v132 = vpack.c.b16 %v128, %v127
    %v135 = vunpack.c.l.b16 %v99
    %v136 = vunpack.c.h.b16 %v99
    %v137 = vunpack.c.l.b16 %v100
    %v138 = vunpack.c.h.b16 %v100
    %v139 = vpack.c.b16 %v137, %v135
    %v140 = vpack.c.b16 %v138, %v136
    %vm143 = vcmask 130048
    %v145 = vsel %vm143, %v129, 0
    %v148 = vsel %vm143, %v130, 0
    %v151 = vsel %vm143, %v131, 0
    %v154 = vsel %vm143, %v132, 0
    %156 = vmatprep.subr.bf16.mxu0 %v140
    %157 = vmatpush1.bf16.msra.mxu0 %v139
    %158 = vmatprep.subr.bf16.mxu0 0
    %159 = vmatpush1.bf16.msra.mxu0 0
    %160 = vmatprep.subr.bf16.mxu0 0
    %161 = vmatpush1.bf16.msra.mxu0 0
    %162 = vmatprep.subr.bf16.mxu0 0
    %163 = vmatpush1.bf16.msra.mxu0 0
    %164 = vmatprep.subr.bf16.mxu0 0
    %165 = vmatpush1.bf16.msra.mxu0 0
    %166 = vmatprep.subr.bf16.mxu0 0
    %167 = vmatpush1.bf16.msra.mxu0 0
    %168 = vmatprep.subr.bf16.mxu0 0
    %169 = vmatpush1.bf16.msra.mxu0 0
    %170 = vmatprep.subr.bf16.mxu0 0
    %171 = vmatpush1.bf16.msra.mxu0 0
    %172 = vmatprep.subr.bf16.mxu0 0
    %173 = vmatpush1.bf16.msra.mxu0 0
    %174 = vmatprep.subr.bf16.mxu0 0
    %175 = vmatpush1.bf16.msra.mxu0 0
    %176 = vmatprep.subr.bf16.mxu0 0
    %177 = vmatpush1.bf16.msra.mxu0 0
    %178 = vmatprep.subr.bf16.mxu0 0
    %179 = vmatpush1.bf16.msra.mxu0 0
    %180 = vmatprep.subr.bf16.mxu0 0
    %181 = vmatpush1.bf16.msra.mxu0 0
    %182 = vmatprep.subr.bf16.mxu0 0
    %183 = vmatpush1.bf16.msra.mxu0 0
    %184 = vmatprep.subr.bf16.mxu0 0
    %185 = vmatpush1.bf16.msra.mxu0 0
    %186 = vmatprep.subr.bf16.mxu0 0
    %187 = vmatpush1.bf16.msra.mxu0 0
    %188 = vmatprep.mubr.bf16.mxu0 0
    %189 = vmatmul.mubr.bf16.gmra.mrb[0].mxu0 %v145
    %v190 = vpop.f32.mrb[0].mxu0
    %v191 = vadd.f32 %v106, %v190
    %v192 = vpop.f32.mrb[0].mxu0
    %v193 = vadd.f32 %v110, %v192
    %v194 = vpop.f32.mrb[0].mxu0
    %v195 = vadd.f32 %v106, %v194
    %v196 = vpop.f32.mrb[0].mxu0
    %v197 = vadd.f32 %v110, %v196
    %198 = vmatprep.mubr.bf16.mxu0 0
    %199 = vmatmul.mubr.bf16.gmra.mrb[0].mxu0 %v148
    %v200 = vpop.f32.mrb[0].mxu0
    %v201 = vadd.f32 %v106, %v200
    %v202 = vpop.f32.mrb[0].mxu0
    %v203 = vadd.f32 %v110, %v202
    %v204 = vpop.f32.mrb[0].mxu0
    %v205 = vadd.f32 %v106, %v204
    %v206 = vpop.f32.mrb[0].mxu0
    %v207 = vadd.f32 %v110, %v206
    %208 = vmatprep.mubr.bf16.mxu0 0
    %209 = vmatmul.mubr.bf16.gmra.mrb[0].mxu0 %v151
    %v210 = vpop.f32.mrb[0].mxu0
    %v211 = vadd.f32 %v106, %v210
    %v212 = vpop.f32.mrb[0].mxu0
    %v213 = vadd.f32 %v110, %v212
    %v214 = vpop.f32.mrb[0].mxu0
    %v215 = vadd.f32 %v106, %v214
    %v216 = vpop.f32.mrb[0].mxu0
    %v217 = vadd.f32 %v110, %v216
    %218 = vmatprep.mubr.bf16.mxu0 0
    %219 = vmatmul.mubr.bf16.gmra.mrb[0].mxu0 %v154
    %v220 = vpop.f32.mrb[0].mxu0
    %v221 = vadd.f32 %v106, %v220
    %v222 = vpop.f32.mrb[0].mxu0
    %v223 = vadd.f32 %v110, %v222
    %v224 = vpop.f32.mrb[0].mxu0
    %v225 = vadd.f32 %v106, %v224
    %v226 = vpop.f32.mrb[0].mxu0
    %v227 = vadd.f32 %v110, %v226
    %228 = vdwg.mxu0
    %229 = vst [vmem:[#allocation2] sm:$0xff] %v191
    %230 = vst [vmem:[#allocation2 + $0x8] sm:$0xff] %v193
    %231 = vst [vmem:[#allocation2 + $0x10] sm:$0xff] %v195
    %232 = vst [vmem:[#allocation2 + $0x18] sm:$0xff] %v197
    %233 = vst [vmem:[#allocation2 + $0x20] sm:$0xff] %v201
    %234 = vst [vmem:[#allocation2 + $0x28] sm:$0xff] %v203
    %235 = vst [vmem:[#allocation2 + $0x30] sm:$0xff] %v205
    %236 = vst [vmem:[#allocation2 + $0x38] sm:$0xff] %v207
    %237 = vst [vmem:[#allocation2 + $0x40] sm:$0xff] %v211
    %238 = vst [vmem:[#allocation2 + $0x48] sm:$0xff] %v213
    %239 = vst [vmem:[#allocation2 + $0x50] sm:$0xff] %v215
    %240 = vst [vmem:[#allocation2 + $0x58] sm:$0xff] %v217
    %241 = vst [vmem:[#allocation2 + $0x60] sm:$0xff] %v221
    %242 = vst [vmem:[#allocation2 + $0x68] sm:$0xff] %v223
    %243 = vst [vmem:[#allocation2 + $0x70] sm:$0xff] %v225
    %244 = vst [vmem:[#allocation2 + $0x78] sm:$0xff] %v227
    %v245 = vld [vmem:[%s2] sm:$0xff]
    %v246 = vld [vmem:[%s2 + $0x8] sm:$0xff]
    %v247 = vld [vmem:[%s2 + $0x10] sm:$0xff]
    %v248 = vld [vmem:[%s2 + $0x18] sm:$0xff]
    %v249 = vld [vmem:[%s2 + $0x20] sm:$0xff]
    %v250 = vld [vmem:[%s2 + $0x28] sm:$0xff]
    %v251 = vld [vmem:[%s2 + $0x30] sm:$0xff]
    %v252 = vld [vmem:[%s2 + $0x38] sm:$0xff]
    %v261 = vunpack.c.l.b16 %v245
    %v262 = vunpack.c.h.b16 %v245
    %v263 = vunpack.c.l.b16 %v246
    %v264 = vunpack.c.h.b16 %v246
    %v265 = vunpack.c.l.b16 %v247
    %v266 = vunpack.c.h.b16 %v247
    %v267 = vunpack.c.l.b16 %v248
    %v268 = vunpack.c.h.b16 %v248
    %v269 = vunpack.c.l.b16 %v249
    %v270 = vunpack.c.h.b16 %v249
    %v271 = vunpack.c.l.b16 %v250
    %v272 = vunpack.c.h.b16 %v250
    %v273 = vunpack.c.l.b16 %v251
    %v274 = vunpack.c.h.b16 %v251
    %v275 = vunpack.c.l.b16 %v252
    %v276 = vunpack.c.h.b16 %v252
    %v277 = vpack.c.b16 %v263, %v261
    %v278 = vpack.c.b16 %v264, %v262
    %v279 = vpack.c.b16 %v267, %v265
    %v280 = vpack.c.b16 %v268, %v266
    %v281 = vpack.c.b16 %v271, %v269
    %v282 = vpack.c.b16 %v272, %v270
    %v283 = vpack.c.b16 %v275, %v273
    %v284 = vpack.c.b16 %v276, %v274
    %vm293 = vcmask 523264
    %v295 = vsel %vm293, 0, 0
    %297 = vmatprep.subr.bf16.mxu0 %v278
    %298 = vmatpush1.bf16.msra.mxu0 %v277
    %299 = vmatprep.subr.bf16.mxu0 %v280
    %300 = vmatpush1.bf16.msra.mxu0 %v279
    %301 = vmatprep.subr.bf16.mxu0 %v282
    %302 = vmatpush1.bf16.msra.mxu0 %v281
    %303 = vmatprep.subr.bf16.mxu0 %v284
    %304 = vmatpush1.bf16.msra.mxu0 %v283
    %305 = vmatprep.subr.bf16.mxu0 0
    %306 = vmatpush1.bf16.msra.mxu0 0
    %307 = vmatprep.subr.bf16.mxu0 0
    %308 = vmatpush1.bf16.msra.mxu0 0
    %309 = vmatprep.subr.bf16.mxu0 0
    %310 = vmatpush1.bf16.msra.mxu0 0
    %311 = vmatprep.subr.bf16.mxu0 0
    %312 = vmatpush1.bf16.msra.mxu0 0
    %313 = vmatprep.subr.bf16.mxu0 0
    %314 = vmatpush1.bf16.msra.mxu0 0
    %315 = vmatprep.subr.bf16.mxu0 0
    %316 = vmatpush1.bf16.msra.mxu0 0
    %317 = vmatprep.subr.bf16.mxu0 0
    %318 = vmatpush1.bf16.msra.mxu0 0
    %319 = vmatprep.subr.bf16.mxu0 0
    %320 = vmatpush1.bf16.msra.mxu0 0
    %321 = vmatprep.subr.bf16.mxu0 0
    %322 = vmatpush1.bf16.msra.mxu0 0
    %323 = vmatprep.subr.bf16.mxu0 0
    %324 = vmatpush1.bf16.msra.mxu0 0
    %325 = vmatprep.subr.bf16.mxu0 0
    %326 = vmatpush1.bf16.msra.mxu0 0
    %327 = vmatprep.subr.bf16.mxu0 0
    %328 = vmatpush1.bf16.msra.mxu0 0
    %329 = vmatprep.mubr.bf16.mxu0 0
    %330 = vmatmul.mubr.bf16.gmra.mrb[0].mxu0 %v295
    %v331 = vpop.f32.mrb[0].mxu0
    %v332 = vadd.f32 0.0, %v331
    %v333 = vpop.f32.mrb[0].mxu0
    %v334 = vadd.f32 0.0, %v333
    %v335 = vpop.f32.mrb[0].mxu0
    %v336 = vpop.f32.mrb[0].mxu0
    %337 = vdwg.mxu0
    %s338 = smul.u32 0, 2
    %s339 = smul.addr %s338, 8
    %s340 = scalar_lea.vmem [#allocation2], %s339
    %v341 = vld [vmem:[%s340] sm:$0xff]
    %v342 = vld [vmem:[%s340 + $0x8] sm:$0xff]
    %s343 = smul.u32 7, 2
    %s344 = smul.addr %s343, 8
    %s345 = scalar_lea.vmem [#allocation2], %s344
    %v346 = vld [vmem:[%s345] sm:$0xff]
    %v347 = vld [vmem:[%s345 + $0x8] sm:$0xff]
    %v348 = vsel %vm89, %v341, %v346
    %v349 = vsel %vm90, %v342, %v347
    %v350 = vadd.f32 %v348, %v332
    %v351 = vadd.f32 %v349, %v334
    %v352 = vxor.u32 %v350, 2147483648
    %v353 = vxor.u32 %v351, 2147483648
    %v354 = vmul.f32 %v352, 1.442695
    %v355 = vpow.pop %v354
    %v356 = vmul.f32 %v353, 1.442695
    %v357 = vpow.pop %v356
    %v358 = vadd.f32 %v355, 1.0
    %v359 = vadd.f32 %v357, 1.0
    %v360 = vrcp.pop %v358
    %v361 = vmul.f32 1.0, %v360
    %v362 = vrcp.pop %v359
    %v363 = vmul.f32 1.0, %v362
    %v364 = vtanh.pop %v351
    %v365 = vmul.f32 %v361, 0.0
    %367 = vrot.lane.b32.xlu0 %v364, 64
    %v368 = vpop.permute.xlu0 %367
    %v370 = vmul.f32 %v361, %v368
    %372 = vrot.lane.b32.xlu0 %v370, 64
    %v373 = vpop.permute.xlu0 %372
    %v375 = vadd.f32 %v365, %v373
    %v376 = vtanh.pop %v375
    %378 = vrot.lane.b32.xlu0 %v376, 64
    %v379 = vpop.permute.xlu0 %378
    %v381 = vmul.f32 %v363, %v379
    %vm382 = vcmask 261120
    %383 = vst.msk [vmem:[#allocation3] sm:$0xff] %vm382, %v381
    %s384 = scalar_lea.vmem [#allocation3], 56
    %vm385 = vcmask 523520
    %386 = vst.msk [vmem:[%s384] sm:$0xff] %vm385, %v381
    %v387 = vpack.c.bf16 %v381, %v381
    %v389 = vsel %vm293, %v387, 0
    %391 = vmatprep.subr.bf16.mxu0 %v278
    %392 = vmatpush1.bf16.msra.mxu0 %v277
    %393 = vmatprep.subr.bf16.mxu0 %v280
    %394 = vmatpush1.bf16.msra.mxu0 %v279
    %395 = vmatprep.subr.bf16.mxu0 %v282
    %396 = vmatpush1.bf16.msra.mxu0 %v281
    %397 = vmatprep.subr.bf16.mxu0 %v284
    %398 = vmatpush1.bf16.msra.mxu0 %v283
    %399 = vmatprep.subr.bf16.mxu0 0
    %400 = vmatpush1.bf16.msra.mxu0 0
    %401 = vmatprep.subr.bf16.mxu0 0
    %402 = vmatpush1.bf16.msra.mxu0 0
    %403 = vmatprep.subr.bf16.mxu0 0
    %404 = vmatpush1.bf16.msra.mxu0 0
    %405 = vmatprep.subr.bf16.mxu0 0
    %406 = vmatpush1.bf16.msra.mxu0 0
    %407 = vmatprep.subr.bf16.mxu0 0
    %408 = vmatpush1.bf16.msra.mxu0 0
    %409 = vmatprep.subr.bf16.mxu0 0
    %410 = vmatpush1.bf16.msra.mxu0 0
    %411 = vmatprep.subr.bf16.mxu0 0
    %412 = vmatpush1.bf16.msra.mxu0 0
    %413 = vmatprep.subr.bf16.mxu0 0
    %414 = vmatpush1.bf16.msra.mxu0 0
    %415 = vmatprep.subr.bf16.mxu0 0
    %416 = vmatpush1.bf16.msra.mxu0 0
    %417 = vmatprep.subr.bf16.mxu0 0
    %418 = vmatpush1.bf16.msra.mxu0 0
    %419 = vmatprep.subr.bf16.mxu0 0
    %420 = vmatpush1.bf16.msra.mxu0 0
    %421 = vmatprep.subr.bf16.mxu0 0
    %422 = vmatpush1.bf16.msra.mxu0 0
    %423 = vmatprep.mubr.bf16.mxu0 0
    %424 = vmatmul.mubr.bf16.gmra.mrb[0].mxu0 %v389
    %v425 = vpop.f32.mrb[0].mxu0
    %v426 = vadd.f32 0.0, %v425
    %v427 = vpop.f32.mrb[0].mxu0
    %v428 = vadd.f32 0.0, %v427
    %v429 = vpop.f32.mrb[0].mxu0
    %v430 = vpop.f32.mrb[0].mxu0
    %431 = vdwg.mxu0
    %s432 = smul.u32 1, 2
    %s433 = smul.addr %s432, 8
    %s434 = scalar_lea.vmem [#allocation2], %s433
    %v435 = vld [vmem:[%s434] sm:$0xff]
    %v436 = vld [vmem:[%s434 + $0x8] sm:$0xff]
    %s437 = smul.u32 6, 2
    %s438 = smul.addr %s437, 8
    %s439 = scalar_lea.vmem [#allocation2], %s438
    %v440 = vld [vmem:[%s439] sm:$0xff]
    %v441 = vld [vmem:[%s439 + $0x8] sm:$0xff]
    %v442 = vsel %vm89, %v435, %v440
    %v443 = vsel %vm90, %v436, %v441
    %v444 = vadd.f32 %v442, %v426
    %v445 = vadd.f32 %v443, %v428
    %v446 = vxor.u32 %v444, 2147483648
    %v447 = vxor.u32 %v445, 2147483648
    %v448 = vmul.f32 %v446, 1.442695
    %v449 = vpow.pop %v448
    %v450 = vmul.f32 %v447, 1.442695
    %v451 = vpow.pop %v450
    %v452 = vadd.f32 %v449, 1.0
    %v453 = vadd.f32 %v451, 1.0
    %v454 = vrcp.pop %v452
    %v455 = vmul.f32 1.0, %v454
    %v456 = vrcp.pop %v453
    %v457 = vmul.f32 1.0, %v456
    %v458 = vtanh.pop %v445
    %v459 = vmul.f32 %v455, %v375
    %461 = vrot.lane.b32.xlu0 %v458, 64
    %v462 = vpop.permute.xlu0 %461
    %v464 = vmul.f32 %v455, %v462
    %466 = vrot.lane.b32.xlu0 %v464, 64
    %v467 = vpop.permute.xlu0 %466
    %v469 = vadd.f32 %v459, %v467
    %v470 = vtanh.pop %v469
    %472 = vrot.lane.b32.xlu0 %v470, 64
    %v473 = vpop.permute.xlu0 %472
    %v475 = vmul.f32 %v457, %v473
    %s476 = scalar_lea.vmem [#allocation3], 8
    %477 = vst.msk [vmem:[%s476] sm:$0xff] %vm382, %v475
    %s478 = scalar_lea.vmem [#allocation3], 48
    %479 = vst.msk [vmem:[%s478] sm:$0xff] %vm385, %v475
    %v480 = vpack.c.bf16 %v475, %v475
    %v482 = vsel %vm293, %v480, 0
    %484 = vmatprep.subr.bf16.mxu0 %v278
    %485 = vmatpush1.bf16.msra.mxu0 %v277
    %486 = vmatprep.subr.bf16.mxu0 %v280
    %487 = vmatpush1.bf16.msra.mxu0 %v279
    %488 = vmatprep.subr.bf16.mxu0 %v282
    %489 = vmatpush1.bf16.msra.mxu0 %v281
    %490 = vmatprep.subr.bf16.mxu0 %v284
    %491 = vmatpush1.bf16.msra.mxu0 %v283
    %492 = vmatprep.subr.bf16.mxu0 0
    %493 = vmatpush1.bf16.msra.mxu0 0
    %494 = vmatprep.subr.bf16.mxu0 0
    %495 = vmatpush1.bf16.msra.mxu0 0
    %496 = vmatprep.subr.bf16.mxu0 0
    %497 = vmatpush1.bf16.msra.mxu0 0
    %498 = vmatprep.subr.bf16.mxu0 0
    %499 = vmatpush1.bf16.msra.mxu0 0
    %500 = vmatprep.subr.bf16.mxu0 0
    %501 = vmatpush1.bf16.msra.mxu0 0
    %502 = vmatprep.subr.bf16.mxu0 0
    %503 = vmatpush1.bf16.msra.mxu0 0
    %504 = vmatprep.subr.bf16.mxu0 0
    %505 = vmatpush1.bf16.msra.mxu0 0
    %506 = vmatprep.subr.bf16.mxu0 0
    %507 = vmatpush1.bf16.msra.mxu0 0
    %508 = vmatprep.subr.bf16.mxu0 0
    %509 = vmatpush1.bf16.msra.mxu0 0
    %510 = vmatprep.subr.bf16.mxu0 0
    %511 = vmatpush1.bf16.msra.mxu0 0
    %512 = vmatprep.subr.bf16.mxu0 0
    %513 = vmatpush1.bf16.msra.mxu0 0
    %514 = vmatprep.subr.bf16.mxu0 0
    %515 = vmatpush1.bf16.msra.mxu0 0
    %516 = vmatprep.mubr.bf16.mxu0 0
    %517 = vmatmul.mubr.bf16.gmra.mrb[0].mxu0 %v482
    %v518 = vpop.f32.mrb[0].mxu0
    %v519 = vadd.f32 0.0, %v518
    %v520 = vpop.f32.mrb[0].mxu0
    %v521 = vadd.f32 0.0, %v520
    %v522 = vpop.f32.mrb[0].mxu0
    %v523 = vpop.f32.mrb[0].mxu0
    %524 = vdwg.mxu0
    %s525 = smul.u32 2, 2
    %s526 = smul.addr %s525, 8
    %s527 = scalar_lea.vmem [#allocation2], %s526
    %v528 = vld [vmem:[%s527] sm:$0xff]
    %v529 = vld [vmem:[%s527 + $0x8] sm:$0xff]
    %s530 = smul.u32 5, 2
    %s531 = smul.addr %s530, 8
    %s532 = scalar_lea.vmem [#allocation2], %s531
    %v533 = vld [vmem:[%s532] sm:$0xff]
    %v534 = vld [vmem:[%s532 + $0x8] sm:$0xff]
    %v535 = vsel %vm89, %v528, %v533
    %v536 = vsel %vm90, %v529, %v534
    %v537 = vadd.f32 %v535, %v519
    %v538 = vadd.f32 %v536, %v521
    %v539 = vxor.u32 %v537, 2147483648
    %v540 = vxor.u32 %v538, 2147483648
    %v541 = vmul.f32 %v539, 1.442695
    %v542 = vpow.pop %v541
    %v543 = vmul.f32 %v540, 1.442695
    %v544 = vpow.pop %v543
    %v545 = vadd.f32 %v542, 1.0
    %v546 = vadd.f32 %v544, 1.0
    %v547 = vrcp.pop %v545
    %v548 = vmul.f32 1.0, %v547
    %v549 = vrcp.pop %v546
    %v550 = vmul.f32 1.0, %v549
    %v551 = vtanh.pop %v538
    %v552 = vmul.f32 %v548, %v469
    %554 = vrot.lane.b32.xlu0 %v551, 64
    %v555 = vpop.permute.xlu0 %554
    %v557 = vmul.f32 %v548, %v555
    %559 = vrot.lane.b32.xlu0 %v557, 64
    %v560 = vpop.permute.xlu0 %559
    %v562 = vadd.f32 %v552, %v560
    %v563 = vtanh.pop %v562
    %565 = vrot.lane.b32.xlu0 %v563, 64
    %v566 = vpop.permute.xlu0 %565
    %v568 = vmul.f32 %v550, %v566
    %s569 = scalar_lea.vmem [#allocation3], 16
    %570 = vst.msk [vmem:[%s569] sm:$0xff] %vm382, %v568
    %s571 = scalar_lea.vmem [#allocation3], 40
    %572 = vst.msk [vmem:[%s571] sm:$0xff] %vm385, %v568
    %v573 = vpack.c.bf16 %v568, %v568
    %v575 = vsel %vm293, %v573, 0
    %577 = vmatprep.subr.bf16.mxu0 %v278
    %578 = vmatpush1.bf16.msra.mxu0 %v277
    %579 = vmatprep.subr.bf16.mxu0 %v280
    %580 = vmatpush1.bf16.msra.mxu0 %v279
    %581 = vmatprep.subr.bf16.mxu0 %v282
    %582 = vmatpush1.bf16.msra.mxu0 %v281
    %583 = vmatprep.subr.bf16.mxu0 %v284
    %584 = vmatpush1.bf16.msra.mxu0 %v283
    %585 = vmatprep.subr.bf16.mxu0 0
    %586 = vmatpush1.bf16.msra.mxu0 0
    %587 = vmatprep.subr.bf16.mxu0 0
    %588 = vmatpush1.bf16.msra.mxu0 0
    %589 = vmatprep.subr.bf16.mxu0 0
    %590 = vmatpush1.bf16.msra.mxu0 0
    %591 = vmatprep.subr.bf16.mxu0 0
    %592 = vmatpush1.bf16.msra.mxu0 0
    %593 = vmatprep.subr.bf16.mxu0 0
    %594 = vmatpush1.bf16.msra.mxu0 0
    %595 = vmatprep.subr.bf16.mxu0 0
    %596 = vmatpush1.bf16.msra.mxu0 0
    %597 = vmatprep.subr.bf16.mxu0 0
    %598 = vmatpush1.bf16.msra.mxu0 0
    %599 = vmatprep.subr.bf16.mxu0 0
    %600 = vmatpush1.bf16.msra.mxu0 0
    %601 = vmatprep.subr.bf16.mxu0 0
    %602 = vmatpush1.bf16.msra.mxu0 0
    %603 = vmatprep.subr.bf16.mxu0 0
    %604 = vmatpush1.bf16.msra.mxu0 0
    %605 = vmatprep.subr.bf16.mxu0 0
    %606 = vmatpush1.bf16.msra.mxu0 0
    %607 = vmatprep.subr.bf16.mxu0 0
    %608 = vmatpush1.bf16.msra.mxu0 0
    %609 = vmatprep.mubr.bf16.mxu0 0
    %610 = vmatmul.mubr.bf16.gmra.mrb[0].mxu0 %v575
    %v611 = vpop.f32.mrb[0].mxu0
    %v612 = vadd.f32 0.0, %v611
    %v613 = vpop.f32.mrb[0].mxu0
    %v614 = vadd.f32 0.0, %v613
    %v615 = vpop.f32.mrb[0].mxu0
    %v616 = vpop.f32.mrb[0].mxu0
    %617 = vdwg.mxu0
    %s618 = smul.u32 3, 2
    %s619 = smul.addr %s618, 8
    %s620 = scalar_lea.vmem [#allocation2], %s619
    %v621 = vld [vmem:[%s620] sm:$0xff]
    %v622 = vld [vmem:[%s620 + $0x8] sm:$0xff]
    %s623 = smul.u32 4, 2
    %s624 = smul.addr %s623, 8
    %s625 = scalar_lea.vmem [#allocation2], %s624
    %v626 = vld [vmem:[%s625] sm:$0xff]
    %v627 = vld [vmem:[%s625 + $0x8] sm:$0xff]
    %v628 = vsel %vm89, %v621, %v626
    %v629 = vsel %vm90, %v622, %v627
    %v630 = vadd.f32 %v628, %v612
    %v631 = vadd.f32 %v629, %v614
    %v632 = vxor.u32 %v630, 2147483648
    %v633 = vxor.u32 %v631, 2147483648
    %v634 = vmul.f32 %v632, 1.442695
    %v635 = vpow.pop %v634
    %v636 = vmul.f32 %v633, 1.442695
    %v637 = vpow.pop %v636
    %v638 = vadd.f32 %v635, 1.0
    %v639 = vadd.f32 %v637, 1.0
    %v640 = vrcp.pop %v638
    %v641 = vmul.f32 1.0, %v640
    %v642 = vrcp.pop %v639
    %v643 = vmul.f32 1.0, %v642
    %v644 = vtanh.pop %v631
    %v645 = vmul.f32 %v641, %v562
    %647 = vrot.lane.b32.xlu0 %v644, 64
    %v648 = vpop.permute.xlu0 %647
    %v650 = vmul.f32 %v641, %v648
    %652 = vrot.lane.b32.xlu0 %v650, 64
    %v653 = vpop.permute.xlu0 %652
    %v655 = vadd.f32 %v645, %v653
    %v656 = vtanh.pop %v655
    %658 = vrot.lane.b32.xlu0 %v656, 64
    %v659 = vpop.permute.xlu0 %658
    %v661 = vmul.f32 %v643, %v659
    %s662 = scalar_lea.vmem [#allocation3], 24
    %663 = vst.msk [vmem:[%s662] sm:$0xff] %vm382, %v661
    %s664 = scalar_lea.vmem [#allocation3], 32
    %665 = vst.msk [vmem:[%s664] sm:$0xff] %vm385, %v661
    %v666 = vpack.c.bf16 %v661, %v661
    %v668 = vsel %vm293, %v666, 0
    %670 = vmatprep.subr.bf16.mxu0 %v278
    %671 = vmatpush1.bf16.msra.mxu0 %v277
    %672 = vmatprep.subr.bf16.mxu0 %v280
    %673 = vmatpush1.bf16.msra.mxu0 %v279
    %674 = vmatprep.subr.bf16.mxu0 %v282
    %675 = vmatpush1.bf16.msra.mxu0 %v281
    %676 = vmatprep.subr.bf16.mxu0 %v284
    %677 = vmatpush1.bf16.msra.mxu0 %v283
    %678 = vmatprep.subr.bf16.mxu0 0
    %679 = vmatpush1.bf16.msra.mxu0 0
    %680 = vmatprep.subr.bf16.mxu0 0
    %681 = vmatpush1.bf16.msra.mxu0 0
    %682 = vmatprep.subr.bf16.mxu0 0
    %683 = vmatpush1.bf16.msra.mxu0 0
    %684 = vmatprep.subr.bf16.mxu0 0
    %685 = vmatpush1.bf16.msra.mxu0 0
    %686 = vmatprep.subr.bf16.mxu0 0
    %687 = vmatpush1.bf16.msra.mxu0 0
    %688 = vmatprep.subr.bf16.mxu0 0
    %689 = vmatpush1.bf16.msra.mxu0 0
    %690 = vmatprep.subr.bf16.mxu0 0
    %691 = vmatpush1.bf16.msra.mxu0 0
    %692 = vmatprep.subr.bf16.mxu0 0
    %693 = vmatpush1.bf16.msra.mxu0 0
    %694 = vmatprep.subr.bf16.mxu0 0
    %695 = vmatpush1.bf16.msra.mxu0 0
    %696 = vmatprep.subr.bf16.mxu0 0
    %697 = vmatpush1.bf16.msra.mxu0 0
    %698 = vmatprep.subr.bf16.mxu0 0
    %699 = vmatpush1.bf16.msra.mxu0 0
    %700 = vmatprep.subr.bf16.mxu0 0
    %701 = vmatpush1.bf16.msra.mxu0 0
    %702 = vmatprep.mubr.bf16.mxu0 0
    %703 = vmatmul.mubr.bf16.gmra.mrb[0].mxu0 %v668
    %v704 = vpop.f32.mrb[0].mxu0
    %v705 = vadd.f32 0.0, %v704
    %v706 = vpop.f32.mrb[0].mxu0
    %v707 = vadd.f32 0.0, %v706
    %v708 = vpop.f32.mrb[0].mxu0
    %v709 = vpop.f32.mrb[0].mxu0
    %710 = vdwg.mxu0
    %v711 = vld [vmem:[%s625] sm:$0xff]
    %v712 = vld [vmem:[%s625 + $0x8] sm:$0xff]
    %v713 = vld [vmem:[%s620] sm:$0xff]
    %v714 = vld [vmem:[%s620 + $0x8] sm:$0xff]
    %v715 = vsel %vm89, %v711, %v713
    %v716 = vsel %vm90, %v712, %v714
    %v717 = vadd.f32 %v715, %v705
    %v718 = vadd.f32 %v716, %v707
    %v719 = vxor.u32 %v717, 2147483648
    %v720 = vxor.u32 %v718, 2147483648
    %v721 = vmul.f32 %v719, 1.442695
    %v722 = vpow.pop %v721
    %v723 = vmul.f32 %v720, 1.442695
    %v724 = vpow.pop %v723
    %v725 = vadd.f32 %v722, 1.0
    %v726 = vadd.f32 %v724, 1.0
    %v727 = vrcp.pop %v725
    %v728 = vmul.f32 1.0, %v727
    %v729 = vrcp.pop %v726
    %v730 = vmul.f32 1.0, %v729
    %v731 = vtanh.pop %v718
    %v732 = vmul.f32 %v728, %v655
    %734 = vrot.lane.b32.xlu0 %v731, 64
    %v735 = vpop.permute.xlu0 %734
    %v737 = vmul.f32 %v728, %v735
    %739 = vrot.lane.b32.xlu0 %v737, 64
    %v740 = vpop.permute.xlu0 %739
    %v742 = vadd.f32 %v732, %v740
    %v743 = vtanh.pop %v742
    %745 = vrot.lane.b32.xlu0 %v743, 64
    %v746 = vpop.permute.xlu0 %745
    %v748 = vmul.f32 %v730, %v746
    %749 = vst.msk [vmem:[%s664] sm:$0xff] %vm382, %v748
    %750 = vst.msk [vmem:[%s662] sm:$0xff] %vm385, %v748
    %v751 = vpack.c.bf16 %v748, %v748
    %v753 = vsel %vm293, %v751, 0
    %755 = vmatprep.subr.bf16.mxu0 %v278
    %756 = vmatpush1.bf16.msra.mxu0 %v277
    %757 = vmatprep.subr.bf16.mxu0 %v280
    %758 = vmatpush1.bf16.msra.mxu0 %v279
    %759 = vmatprep.subr.bf16.mxu0 %v282
    %760 = vmatpush1.bf16.msra.mxu0 %v281
    %761 = vmatprep.subr.bf16.mxu0 %v284
    %762 = vmatpush1.bf16.msra.mxu0 %v283
    %763 = vmatprep.subr.bf16.mxu0 0
    %764 = vmatpush1.bf16.msra.mxu0 0
    %765 = vmatprep.subr.bf16.mxu0 0
    %766 = vmatpush1.bf16.msra.mxu0 0
    %767 = vmatprep.subr.bf16.mxu0 0
    %768 = vmatpush1.bf16.msra.mxu0 0
    %769 = vmatprep.subr.bf16.mxu0 0
    %770 = vmatpush1.bf16.msra.mxu0 0
    %771 = vmatprep.subr.bf16.mxu0 0
    %772 = vmatpush1.bf16.msra.mxu0 0
    %773 = vmatprep.subr.bf16.mxu0 0
    %774 = vmatpush1.bf16.msra.mxu0 0
    %775 = vmatprep.subr.bf16.mxu0 0
    %776 = vmatpush1.bf16.msra.mxu0 0
    %777 = vmatprep.subr.bf16.mxu0 0
    %778 = vmatpush1.bf16.msra.mxu0 0
    %779 = vmatprep.subr.bf16.mxu0 0
    %780 = vmatpush1.bf16.msra.mxu0 0
    %781 = vmatprep.subr.bf16.mxu0 0
    %782 = vmatpush1.bf16.msra.mxu0 0
    %783 = vmatprep.subr.bf16.mxu0 0
    %784 = vmatpush1.bf16.msra.mxu0 0
    %785 = vmatprep.subr.bf16.mxu0 0
    %786 = vmatpush1.bf16.msra.mxu0 0
    %787 = vmatprep.mubr.bf16.mxu0 0
    %788 = vmatmul.mubr.bf16.gmra.mrb[0].mxu0 %v753
    %v789 = vpop.f32.mrb[0].mxu0
    %v790 = vadd.f32 0.0, %v789
    %v791 = vpop.f32.mrb[0].mxu0
    %v792 = vadd.f32 0.0, %v791
    %v793 = vpop.f32.mrb[0].mxu0
    %v794 = vpop.f32.mrb[0].mxu0
    %795 = vdwg.mxu0
    %v796 = vld [vmem:[%s532] sm:$0xff]
    %v797 = vld [vmem:[%s532 + $0x8] sm:$0xff]
    %v798 = vld [vmem:[%s527] sm:$0xff]
    %v799 = vld [vmem:[%s527 + $0x8] sm:$0xff]
    %v800 = vsel %vm89, %v796, %v798
    %v801 = vsel %vm90, %v797, %v799
    %v802 = vadd.f32 %v800, %v790
    %v803 = vadd.f32 %v801, %v792
    %v804 = vxor.u32 %v802, 2147483648
    %v805 = vxor.u32 %v803, 2147483648
    %v806 = vmul.f32 %v804, 1.442695
    %v807 = vpow.pop %v806
    %v808 = vmul.f32 %v805, 1.442695
    %v809 = vpow.pop %v808
    %v810 = vadd.f32 %v807, 1.0
    %v811 = vadd.f32 %v809, 1.0
    %v812 = vrcp.pop %v810
    %v813 = vmul.f32 1.0, %v812
    %v814 = vrcp.pop %v811
    %v815 = vmul.f32 1.0, %v814
    %v816 = vtanh.pop %v803
    %v817 = vmul.f32 %v813, %v742
    %819 = vrot.lane.b32.xlu0 %v816, 64
    %v820 = vpop.permute.xlu0 %819
    %v822 = vmul.f32 %v813, %v820
    %824 = vrot.lane.b32.xlu0 %v822, 64
    %v825 = vpop.permute.xlu0 %824
    %v827 = vadd.f32 %v817, %v825
    %v828 = vtanh.pop %v827
    %830 = vrot.lane.b32.xlu0 %v828, 64
    %v831 = vpop.permute.xlu0 %830
    %v833 = vmul.f32 %v815, %v831
    %834 = vst.msk [vmem:[%s571] sm:$0xff] %vm382, %v833
    %835 = vst.msk [vmem:[%s569] sm:$0xff] %vm385, %v833
    %v836 = vpack.c.bf16 %v833, %v833
    %v838 = vsel %vm293, %v836, 0
    %840 = vmatprep.subr.bf16.mxu0 %v278
    %841 = vmatpush1.bf16.msra.mxu0 %v277
    %842 = vmatprep.subr.bf16.mxu0 %v280
    %843 = vmatpush1.bf16.msra.mxu0 %v279
    %844 = vmatprep.subr.bf16.mxu0 %v282
    %845 = vmatpush1.bf16.msra.mxu0 %v281
    %846 = vmatprep.subr.bf16.mxu0 %v284
    %847 = vmatpush1.bf16.msra.mxu0 %v283
    %848 = vmatprep.subr.bf16.mxu0 0
    %849 = vmatpush1.bf16.msra.mxu0 0
    %850 = vmatprep.subr.bf16.mxu0 0
    %851 = vmatpush1.bf16.msra.mxu0 0
    %852 = vmatprep.subr.bf16.mxu0 0
    %853 = vmatpush1.bf16.msra.mxu0 0
    %854 = vmatprep.subr.bf16.mxu0 0
    %855 = vmatpush1.bf16.msra.mxu0 0
    %856 = vmatprep.subr.bf16.mxu0 0
    %857 = vmatpush1.bf16.msra.mxu0 0
    %858 = vmatprep.subr.bf16.mxu0 0
    %859 = vmatpush1.bf16.msra.mxu0 0
    %860 = vmatprep.subr.bf16.mxu0 0
    %861 = vmatpush1.bf16.msra.mxu0 0
    %862 = vmatprep.subr.bf16.mxu0 0
    %863 = vmatpush1.bf16.msra.mxu0 0
    %864 = vmatprep.subr.bf16.mxu0 0
    %865 = vmatpush1.bf16.msra.mxu0 0
    %866 = vmatprep.subr.bf16.mxu0 0
    %867 = vmatpush1.bf16.msra.mxu0 0
    %868 = vmatprep.subr.bf16.mxu0 0
    %869 = vmatpush1.bf16.msra.mxu0 0
    %870 = vmatprep.subr.bf16.mxu0 0
    %871 = vmatpush1.bf16.msra.mxu0 0
    %872 = vmatprep.mubr.bf16.mxu0 0
    %873 = vmatmul.mubr.bf16.gmra.mrb[0].mxu0 %v838
    %v874 = vpop.f32.mrb[0].mxu0
    %v875 = vadd.f32 0.0, %v874
    %v876 = vpop.f32.mrb[0].mxu0
    %v877 = vadd.f32 0.0, %v876
    %v878 = vpop.f32.mrb[0].mxu0
    %v879 = vpop.f32.mrb[0].mxu0
    %880 = vdwg.mxu0
    %v881 = vld [vmem:[%s439] sm:$0xff]
    %v882 = vld [vmem:[%s439 + $0x8] sm:$0xff]
    %v883 = vld [vmem:[%s434] sm:$0xff]
    %v884 = vld [vmem:[%s434 + $0x8] sm:$0xff]
    %v885 = vsel %vm89, %v881, %v883
    %v886 = vsel %vm90, %v882, %v884
    %v887 = vadd.f32 %v885, %v875
    %v888 = vadd.f32 %v886, %v877
    %v889 = vxor.u32 %v887, 2147483648
    %v890 = vxor.u32 %v888, 2147483648
    %v891 = vmul.f32 %v889, 1.442695
    %v892 = vpow.pop %v891
    %v893 = vmul.f32 %v890, 1.442695
    %v894 = vpow.pop %v893
    %v895 = vadd.f32 %v892, 1.0
    %v896 = vadd.f32 %v894, 1.0
    %v897 = vrcp.pop %v895
    %v898 = vmul.f32 1.0, %v897
    %v899 = vrcp.pop %v896
    %v900 = vmul.f32 1.0, %v899
    %v901 = vtanh.pop %v888
    %v902 = vmul.f32 %v898, %v827
    %904 = vrot.lane.b32.xlu0 %v901, 64
    %v905 = vpop.permute.xlu0 %904
    %v907 = vmul.f32 %v898, %v905
    %909 = vrot.lane.b32.xlu0 %v907, 64
    %v910 = vpop.permute.xlu0 %909
    %v912 = vadd.f32 %v902, %v910
    %v913 = vtanh.pop %v912
    %915 = vrot.lane.b32.xlu0 %v913, 64
    %v916 = vpop.permute.xlu0 %915
    %v918 = vmul.f32 %v900, %v916
    %919 = vst.msk [vmem:[%s478] sm:$0xff] %vm382, %v918
    %920 = vst.msk [vmem:[%s476] sm:$0xff] %vm385, %v918
    %v921 = vpack.c.bf16 %v918, %v918
    %v923 = vsel %vm293, %v921, 0
    %925 = vmatprep.subr.bf16.mxu0 %v278
    %926 = vmatpush1.bf16.msra.mxu0 %v277
    %927 = vmatprep.subr.bf16.mxu0 %v280
    %928 = vmatpush1.bf16.msra.mxu0 %v279
    %929 = vmatprep.subr.bf16.mxu0 %v282
    %930 = vmatpush1.bf16.msra.mxu0 %v281
    %931 = vmatprep.subr.bf16.mxu0 %v284
    %932 = vmatpush1.bf16.msra.mxu0 %v283
    %933 = vmatprep.subr.bf16.mxu0 0
    %934 = vmatpush1.bf16.msra.mxu0 0
    %935 = vmatprep.subr.bf16.mxu0 0
    %936 = vmatpush1.bf16.msra.mxu0 0
    %937 = vmatprep.subr.bf16.mxu0 0
    %938 = vmatpush1.bf16.msra.mxu0 0
    %939 = vmatprep.subr.bf16.mxu0 0
    %940 = vmatpush1.bf16.msra.mxu0 0
    %941 = vmatprep.subr.bf16.mxu0 0
    %942 = vmatpush1.bf16.msra.mxu0 0
    %943 = vmatprep.subr.bf16.mxu0 0
    %944 = vmatpush1.bf16.msra.mxu0 0
    %945 = vmatprep.subr.bf16.mxu0 0
    %946 = vmatpush1.bf16.msra.mxu0 0
    %947 = vmatprep.subr.bf16.mxu0 0
    %948 = vmatpush1.bf16.msra.mxu0 0
    %949 = vmatprep.subr.bf16.mxu0 0
    %950 = vmatpush1.bf16.msra.mxu0 0
    %951 = vmatprep.subr.bf16.mxu0 0
    %952 = vmatpush1.bf16.msra.mxu0 0
    %953 = vmatprep.subr.bf16.mxu0 0
    %954 = vmatpush1.bf16.msra.mxu0 0
    %955 = vmatprep.subr.bf16.mxu0 0
    %956 = vmatpush1.bf16.msra.mxu0 0
    %957 = vmatprep.mubr.bf16.mxu0 0
    %958 = vmatmul.mubr.bf16.gmra.mrb[0].mxu0 %v923
    %v959 = vpop.f32.mrb[0].mxu0
    %v960 = vadd.f32 0.0, %v959
    %v961 = vpop.f32.mrb[0].mxu0
    %v962 = vadd.f32 0.0, %v961
    %v963 = vpop.f32.mrb[0].mxu0
    %v964 = vpop.f32.mrb[0].mxu0
    %965 = vdwg.mxu0
    %v966 = vld [vmem:[%s345] sm:$0xff]
    %v967 = vld [vmem:[%s345 + $0x8] sm:$0xff]
    %v968 = vld [vmem:[%s340] sm:$0xff]
    %v969 = vld [vmem:[%s340 + $0x8] sm:$0xff]
    %v970 = vsel %vm89, %v966, %v968
    %v971 = vsel %vm90, %v967, %v969
    %v972 = vadd.f32 %v970, %v960
    %v973 = vadd.f32 %v971, %v962
    %v974 = vxor.u32 %v972, 2147483648
    %v975 = vxor.u32 %v973, 2147483648
    %v976 = vmul.f32 %v974, 1.442695
    %v977 = vpow.pop %v976
    %v978 = vmul.f32 %v975, 1.442695
    %v979 = vpow.pop %v978
    %v980 = vadd.f32 %v977, 1.0
    %v981 = vadd.f32 %v979, 1.0
    %v982 = vrcp.pop %v980
    %v983 = vmul.f32 1.0, %v982
    %v984 = vrcp.pop %v981
    %v985 = vmul.f32 1.0, %v984
    %v986 = vtanh.pop %v973
    %v987 = vmul.f32 %v983, %v912
    %989 = vrot.lane.b32.xlu0 %v986, 64
    %v990 = vpop.permute.xlu0 %989
    %v992 = vmul.f32 %v983, %v990
    %994 = vrot.lane.b32.xlu0 %v992, 64
    %v995 = vpop.permute.xlu0 %994
    %v997 = vadd.f32 %v987, %v995
    %v998 = vtanh.pop %v997
    %1000 = vrot.lane.b32.xlu0 %v998, 64
    %v1001 = vpop.permute.xlu0 %1000
    %v1003 = vmul.f32 %v985, %v1001
    %1004 = vst.msk [vmem:[%s384] sm:$0xff] %vm382, %v1003
    %1005 = vst.msk [vmem:[#allocation3] sm:$0xff] %vm385, %v1003
    %v1006 = vld [vmem:[#allocation3] sm:$0xff]
    %v1007 = vld [vmem:[#allocation3 + $0x8] sm:$0xff]
    %v1008 = vld [vmem:[#allocation3 + $0x10] sm:$0xff]
    %v1009 = vld [vmem:[#allocation3 + $0x18] sm:$0xff]
    %v1010 = vld [vmem:[#allocation3 + $0x20] sm:$0xff]
    %v1011 = vld [vmem:[#allocation3 + $0x28] sm:$0xff]
    %v1012 = vld [vmem:[#allocation3 + $0x30] sm:$0xff]
    %v1013 = vld [vmem:[#allocation3 + $0x38] sm:$0xff]
    %v1014 = vpack.c.bf16 %v1007, %v1006
    %v1015 = vpack.c.bf16 %v1009, %v1008
    %v1016 = vpack.c.bf16 %v1011, %v1010
    %v1017 = vpack.c.bf16 %v1013, %v1012
    %v1018 = vld [vmem:[#allocation4] sm:$0xff]
    %v1019 = vld [vmem:[#allocation4 + $0x8] sm:$0xff]
    %v1020 = vld [vmem:[#allocation4 + $0x10] sm:$0xff]
    %v1021 = vld [vmem:[#allocation4 + $0x18] sm:$0xff]
    %v1022 = vld [vmem:[#allocation4 + $0x20] sm:$0xff]
    %v1023 = vld [vmem:[#allocation4 + $0x28] sm:$0xff]
    %v1024 = vld [vmem:[#allocation4 + $0x30] sm:$0xff]
    %v1025 = vld [vmem:[#allocation4 + $0x38] sm:$0xff]
    %v1026 = vld [vmem:[%s6] sm:$0x3]
    %v1028 = vlaneseq
    %v1029 = vshrl.u32 %v1028, 7
    %v1030 = vsub.s32 0, %v1029
    %v1031 = vrot.slane %v1026, %v1030
    %v1032 = vlaneseq
    %v1033 = vshrl.u32 %v1032, 7
    %v1034 = vsub.s32 1, %v1033
    %v1035 = vrot.slane %v1026, %v1034
    %v1046 = vunpack.c.l.b16 %v1018
    %v1047 = vunpack.c.h.b16 %v1018
    %v1048 = vunpack.c.l.b16 %v1019
    %v1049 = vunpack.c.h.b16 %v1019
    %v1050 = vunpack.c.l.b16 %v1020
    %v1051 = vunpack.c.h.b16 %v1020
    %v1052 = vunpack.c.l.b16 %v1021
    %v1053 = vunpack.c.h.b16 %v1021
    %v1054 = vunpack.c.l.b16 %v1022
    %v1055 = vunpack.c.h.b16 %v1022
    %v1056 = vunpack.c.l.b16 %v1023
    %v1057 = vunpack.c.h.b16 %v1023
    %v1058 = vunpack.c.l.b16 %v1024
    %v1059 = vunpack.c.h.b16 %v1024
    %v1060 = vunpack.c.l.b16 %v1025
    %v1061 = vunpack.c.h.b16 %v1025
    %v1062 = vpack.c.b16 %v1048, %v1046
    %v1063 = vpack.c.b16 %v1049, %v1047
    %v1064 = vpack.c.b16 %v1052, %v1050
    %v1065 = vpack.c.b16 %v1053, %v1051
    %v1066 = vpack.c.b16 %v1056, %v1054
    %v1067 = vpack.c.b16 %v1057, %v1055
    %v1068 = vpack.c.b16 %v1060, %v1058
    %v1069 = vpack.c.b16 %v1061, %v1059
    %v1079 = vsel %vm293, %v1014, 0
    %v1082 = vsel %vm293, %v1015, 0
    %v1085 = vsel %vm293, %v1016, 0
    %v1088 = vsel %vm293, %v1017, 0
    %1090 = vmatprep.subr.bf16.mxu0 %v1063
    %1091 = vmatpush1.bf16.msra.mxu0 %v1062
    %1092 = vmatprep.subr.bf16.mxu0 %v1065
    %1093 = vmatpush1.bf16.msra.mxu0 %v1064
    %1094 = vmatprep.subr.bf16.mxu0 %v1067
    %1095 = vmatpush1.bf16.msra.mxu0 %v1066
    %1096 = vmatprep.subr.bf16.mxu0 %v1069
    %1097 = vmatpush1.bf16.msra.mxu0 %v1068
    %1098 = vmatprep.subr.bf16.mxu0 0
    %1099 = vmatpush1.bf16.msra.mxu0 0
    %1100 = vmatprep.subr.bf16.mxu0 0
    %1101 = vmatpush1.bf16.msra.mxu0 0
    %1102 = vmatprep.subr.bf16.mxu0 0
    %1103 = vmatpush1.bf16.msra.mxu0 0
    %1104 = vmatprep.subr.bf16.mxu0 0
    %1105 = vmatpush1.bf16.msra.mxu0 0
    %1106 = vmatprep.subr.bf16.mxu0 0
    %1107 = vmatpush1.bf16.msra.mxu0 0
    %1108 = vmatprep.subr.bf16.mxu0 0
    %1109 = vmatpush1.bf16.msra.mxu0 0
    %1110 = vmatprep.subr.bf16.mxu0 0
    %1111 = vmatpush1.bf16.msra.mxu0 0
    %1112 = vmatprep.subr.bf16.mxu0 0
    %1113 = vmatpush1.bf16.msra.mxu0 0
    %1114 = vmatprep.subr.bf16.mxu0 0
    %1115 = vmatpush1.bf16.msra.mxu0 0
    %1116 = vmatprep.subr.bf16.mxu0 0
    %1117 = vmatpush1.bf16.msra.mxu0 0
    %1118 = vmatprep.subr.bf16.mxu0 0
    %1119 = vmatpush1.bf16.msra.mxu0 0
    %1120 = vmatprep.subr.bf16.mxu0 0
    %1121 = vmatpush1.bf16.msra.mxu0 0
    %1122 = vmatprep.mubr.bf16.mxu0 0
    %1123 = vmatmul.mubr.bf16.gmra.mrb[0].mxu0 %v1079
    %v1124 = vpop.f32.mrb[0].mxu0
    %v1125 = vadd.f32 %v1031, %v1124
    %v1126 = vpop.f32.mrb[0].mxu0
    %v1127 = vadd.f32 %v1035, %v1126
    %v1128 = vpop.f32.mrb[0].mxu0
    %v1129 = vadd.f32 %v1031, %v1128
    %v1130 = vpop.f32.mrb[0].mxu0
    %v1131 = vadd.f32 %v1035, %v1130
    %1132 = vmatprep.mubr.bf16.mxu0 0
    %1133 = vmatmul.mubr.bf16.gmra.mrb[0].mxu0 %v1082
    %v1134 = vpop.f32.mrb[0].mxu0
    %v1135 = vadd.f32 %v1031, %v1134
    %v1136 = vpop.f32.mrb[0].mxu0
    %v1137 = vadd.f32 %v1035, %v1136
    %v1138 = vpop.f32.mrb[0].mxu0
    %v1139 = vadd.f32 %v1031, %v1138
    %v1140 = vpop.f32.mrb[0].mxu0
    %v1141 = vadd.f32 %v1035, %v1140
    %1142 = vmatprep.mubr.bf16.mxu0 0
    %1143 = vmatmul.mubr.bf16.gmra.mrb[0].mxu0 %v1085
    %v1144 = vpop.f32.mrb[0].mxu0
    %v1145 = vadd.f32 %v1031, %v1144
    %v1146 = vpop.f32.mrb[0].mxu0
    %v1147 = vadd.f32 %v1035, %v1146
    %v1148 = vpop.f32.mrb[0].mxu0
    %v1149 = vadd.f32 %v1031, %v1148
    %v1150 = vpop.f32.mrb[0].mxu0
    %v1151 = vadd.f32 %v1035, %v1150
    %1152 = vmatprep.mubr.bf16.mxu0 0
    %1153 = vmatmul.mubr.bf16.gmra.mrb[0].mxu0 %v1088
    %v1154 = vpop.f32.mrb[0].mxu0
    %v1155 = vadd.f32 %v1031, %v1154
    %v1156 = vpop.f32.mrb[0].mxu0
    %v1157 = vadd.f32 %v1035, %v1156
    %v1158 = vpop.f32.mrb[0].mxu0
    %v1159 = vadd.f32 %v1031, %v1158
    %v1160 = vpop.f32.mrb[0].mxu0
    %v1161 = vadd.f32 %v1035, %v1160
    %1162 = vdwg.mxu0
    %1163 = vst [vmem:[#allocation2] sm:$0xff] %v1125
    %1164 = vst [vmem:[#allocation2 + $0x8] sm:$0xff] %v1127
    %1165 = vst [vmem:[#allocation2 + $0x10] sm:$0xff] %v1129
    %1166 = vst [vmem:[#allocation2 + $0x18] sm:$0xff] %v1131
    %1167 = vst [vmem:[#allocation2 + $0x20] sm:$0xff] %v1135
    %1168 = vst [vmem:[#allocation2 + $0x28] sm:$0xff] %v1137
    %1169 = vst [vmem:[#allocation2 + $0x30] sm:$0xff] %v1139
    %1170 = vst [vmem:[#allocation2 + $0x38] sm:$0xff] %v1141
    %1171 = vst [vmem:[#allocation2 + $0x40] sm:$0xff] %v1145
    %1172 = vst [vmem:[#allocation2 + $0x48] sm:$0xff] %v1147
    %1173 = vst [vmem:[#allocation2 + $0x50] sm:$0xff] %v1149
    %1174 = vst [vmem:[#allocation2 + $0x58] sm:$0xff] %v1151
    %1175 = vst [vmem:[#allocation2 + $0x60] sm:$0xff] %v1155
    %1176 = vst [vmem:[#allocation2 + $0x68] sm:$0xff] %v1157
    %1177 = vst [vmem:[#allocation2 + $0x70] sm:$0xff] %v1159
    %1178 = vst [vmem:[#allocation2 + $0x78] sm:$0xff] %v1161
    %v1179 = vld [vmem:[#allocation7] sm:$0xff]
    %v1180 = vld [vmem:[#allocation7 + $0x8] sm:$0xff]
    %v1181 = vld [vmem:[#allocation7 + $0x10] sm:$0xff]
    %v1182 = vld [vmem:[#allocation7 + $0x18] sm:$0xff]
    %v1183 = vld [vmem:[#allocation7 + $0x20] sm:$0xff]
    %v1184 = vld [vmem:[#allocation7 + $0x28] sm:$0xff]
    %v1185 = vld [vmem:[#allocation7 + $0x30] sm:$0xff]
    %v1186 = vld [vmem:[#allocation7 + $0x38] sm:$0xff]
    %v1195 = vunpack.c.l.b16 %v1179
    %v1196 = vunpack.c.h.b16 %v1179
    %v1197 = vunpack.c.l.b16 %v1180
    %v1198 = vunpack.c.h.b16 %v1180
    %v1199 = vunpack.c.l.b16 %v1181
    %v1200 = vunpack.c.h.b16 %v1181
    %v1201 = vunpack.c.l.b16 %v1182
    %v1202 = vunpack.c.h.b16 %v1182
    %v1203 = vunpack.c.l.b16 %v1183
    %v1204 = vunpack.c.h.b16 %v1183
    %v1205 = vunpack.c.l.b16 %v1184
    %v1206 = vunpack.c.h.b16 %v1184
    %v1207 = vunpack.c.l.b16 %v1185
    %v1208 = vunpack.c.h.b16 %v1185
    %v1209 = vunpack.c.l.b16 %v1186
    %v1210 = vunpack.c.h.b16 %v1186
    %v1211 = vpack.c.b16 %v1197, %v1195
    %v1212 = vpack.c.b16 %v1198, %v1196
    %v1213 = vpack.c.b16 %v1201, %v1199
    %v1214 = vpack.c.b16 %v1202, %v1200
    %v1215 = vpack.c.b16 %v1205, %v1203
    %v1216 = vpack.c.b16 %v1206, %v1204
    %v1217 = vpack.c.b16 %v1209, %v1207
    %v1218 = vpack.c.b16 %v1210, %v1208
    %1227 = vmatprep.subr.bf16.mxu0 %v1212
    %1228 = vmatpush1.bf16.msra.mxu0 %v1211
    %1229 = vmatprep.subr.bf16.mxu0 %v1214
    %1230 = vmatpush1.bf16.msra.mxu0 %v1213
    %1231 = vmatprep.subr.bf16.mxu0 %v1216
    %1232 = vmatpush1.bf16.msra.mxu0 %v1215
    %1233 = vmatprep.subr.bf16.mxu0 %v1218
    %1234 = vmatpush1.bf16.msra.mxu0 %v1217
    %1235 = vmatprep.subr.bf16.mxu0 0
    %1236 = vmatpush1.bf16.msra.mxu0 0
    %1237 = vmatprep.subr.bf16.mxu0 0
    %1238 = vmatpush1.bf16.msra.mxu0 0
    %1239 = vmatprep.subr.bf16.mxu0 0
    %1240 = vmatpush1.bf16.msra.mxu0 0
    %1241 = vmatprep.subr.bf16.mxu0 0
    %1242 = vmatpush1.bf16.msra.mxu0 0
    %1243 = vmatprep.subr.bf16.mxu0 0
    %1244 = vmatpush1.bf16.msra.mxu0 0
    %1245 = vmatprep.subr.bf16.mxu0 0
    %1246 = vmatpush1.bf16.msra.mxu0 0
    %1247 = vmatprep.subr.bf16.mxu0 0
    %1248 = vmatpush1.bf16.msra.mxu0 0
    %1249 = vmatprep.subr.bf16.mxu0 0
    %1250 = vmatpush1.bf16.msra.mxu0 0
    %1251 = vmatprep.subr.bf16.mxu0 0
    %1252 = vmatpush1.bf16.msra.mxu0 0
    %1253 = vmatprep.subr.bf16.mxu0 0
    %1254 = vmatpush1.bf16.msra.mxu0 0
    %1255 = vmatprep.subr.bf16.mxu0 0
    %1256 = vmatpush1.bf16.msra.mxu0 0
    %1257 = vmatprep.subr.bf16.mxu0 0
    %1258 = vmatpush1.bf16.msra.mxu0 0
    %1259 = vmatprep.mubr.bf16.mxu0 0
    %1260 = vmatmul.mubr.bf16.gmra.mrb[0].mxu0 %v295
    %v1261 = vpop.f32.mrb[0].mxu0
    %v1262 = vadd.f32 0.0, %v1261
    %v1263 = vpop.f32.mrb[0].mxu0
    %v1264 = vadd.f32 0.0, %v1263
    %v1265 = vpop.f32.mrb[0].mxu0
    %v1266 = vpop.f32.mrb[0].mxu0
    %1267 = vdwg.mxu0
    %v1268 = vld [vmem:[%s340] sm:$0xff]
    %v1269 = vld [vmem:[%s340 + $0x8] sm:$0xff]
    %v1270 = vld [vmem:[%s345] sm:$0xff]
    %v1271 = vld [vmem:[%s345 + $0x8] sm:$0xff]
    %v1272 = vsel %vm89, %v1268, %v1270
    %v1273 = vsel %vm90, %v1269, %v1271
    %v1274 = vadd.f32 %v1272, %v1262
    %v1275 = vadd.f32 %v1273, %v1264
    %v1276 = vxor.u32 %v1274, 2147483648
    %v1277 = vxor.u32 %v1275, 2147483648
    %v1278 = vmul.f32 %v1276, 1.442695
    %v1279 = vpow.pop %v1278
    %v1280 = vmul.f32 %v1277, 1.442695
    %v1281 = vpow.pop %v1280
    %v1282 = vadd.f32 %v1279, 1.0
    %v1283 = vadd.f32 %v1281, 1.0
    %v1284 = vrcp.pop %v1282
    %v1285 = vmul.f32 1.0, %v1284
    %v1286 = vrcp.pop %v1283
    %v1287 = vmul.f32 1.0, %v1286
    %v1288 = vtanh.pop %v1275
    %v1289 = vmul.f32 %v1285, 0.0
    %1291 = vrot.lane.b32.xlu0 %v1288, 64
    %v1292 = vpop.permute.xlu0 %1291
    %v1294 = vmul.f32 %v1285, %v1292
    %1296 = vrot.lane.b32.xlu0 %v1294, 64
    %v1297 = vpop.permute.xlu0 %1296
    %v1299 = vadd.f32 %v1289, %v1297
    %v1300 = vtanh.pop %v1299
    %1302 = vrot.lane.b32.xlu0 %v1300, 64
    %v1303 = vpop.permute.xlu0 %1302
    %v1305 = vmul.f32 %v1287, %v1303
    %1306 = vst.msk [vmem:[#allocation3] sm:$0xff] %vm382, %v1305
    %1307 = vst.msk [vmem:[%s384] sm:$0xff] %vm385, %v1305
    %v1308 = vpack.c.bf16 %v1305, %v1305
    %v1310 = vsel %vm293, %v1308, 0
    %1312 = vmatprep.subr.bf16.mxu0 %v1212
    %1313 = vmatpush1.bf16.msra.mxu0 %v1211
    %1314 = vmatprep.subr.bf16.mxu0 %v1214
    %1315 = vmatpush1.bf16.msra.mxu0 %v1213
    %1316 = vmatprep.subr.bf16.mxu0 %v1216
    %1317 = vmatpush1.bf16.msra.mxu0 %v1215
    %1318 = vmatprep.subr.bf16.mxu0 %v1218
    %1319 = vmatpush1.bf16.msra.mxu0 %v1217
    %1320 = vmatprep.subr.bf16.mxu0 0
    %1321 = vmatpush1.bf16.msra.mxu0 0
    %1322 = vmatprep.subr.bf16.mxu0 0
    %1323 = vmatpush1.bf16.msra.mxu0 0
    %1324 = vmatprep.subr.bf16.mxu0 0
    %1325 = vmatpush1.bf16.msra.mxu0 0
    %1326 = vmatprep.subr.bf16.mxu0 0
    %1327 = vmatpush1.bf16.msra.mxu0 0
    %1328 = vmatprep.subr.bf16.mxu0 0
    %1329 = vmatpush1.bf16.msra.mxu0 0
    %1330 = vmatprep.subr.bf16.mxu0 0
    %1331 = vmatpush1.bf16.msra.mxu0 0
    %1332 = vmatprep.subr.bf16.mxu0 0
    %1333 = vmatpush1.bf16.msra.mxu0 0
    %1334 = vmatprep.subr.bf16.mxu0 0
    %1335 = vmatpush1.bf16.msra.mxu0 0
    %1336 = vmatprep.subr.bf16.mxu0 0
    %1337 = vmatpush1.bf16.msra.mxu0 0
    %1338 = vmatprep.subr.bf16.mxu0 0
    %1339 = vmatpush1.bf16.msra.mxu0 0
    %1340 = vmatprep.subr.bf16.mxu0 0
    %1341 = vmatpush1.bf16.msra.mxu0 0
    %1342 = vmatprep.subr.bf16.mxu0 0
    %1343 = vmatpush1.bf16.msra.mxu0 0
    %1344 = vmatprep.mubr.bf16.mxu0 0
    %1345 = vmatmul.mubr.bf16.gmra.mrb[0].mxu0 %v1310
    %v1346 = vpop.f32.mrb[0].mxu0
    %v1347 = vadd.f32 0.0, %v1346
    %v1348 = vpop.f32.mrb[0].mxu0
    %v1349 = vadd.f32 0.0, %v1348
    %v1350 = vpop.f32.mrb[0].mxu0
    %v1351 = vpop.f32.mrb[0].mxu0
    %1352 = vdwg.mxu0
    %v1353 = vld [vmem:[%s434] sm:$0xff]
    %v1354 = vld [vmem:[%s434 + $0x8] sm:$0xff]
    %v1355 = vld [vmem:[%s439] sm:$0xff]
    %v1356 = vld [vmem:[%s439 + $0x8] sm:$0xff]
    %v1357 = vsel %vm89, %v1353, %v1355
    %v1358 = vsel %vm90, %v1354, %v1356
    %v1359 = vadd.f32 %v1357, %v1347
    %v1360 = vadd.f32 %v1358, %v1349
    %v1361 = vxor.u32 %v1359, 2147483648
    %v1362 = vxor.u32 %v1360, 2147483648
    %v1363 = vmul.f32 %v1361, 1.442695
    %v1364 = vpow.pop %v1363
    %v1365 = vmul.f32 %v1362, 1.442695
    %v1366 = vpow.pop %v1365
    %v1367 = vadd.f32 %v1364, 1.0
    %v1368 = vadd.f32 %v1366, 1.0
    %v1369 = vrcp.pop %v1367
    %v1370 = vmul.f32 1.0, %v1369
    %v1371 = vrcp.pop %v1368
    %v1372 = vmul.f32 1.0, %v1371
    %v1373 = vtanh.pop %v1360
    %v1374 = vmul.f32 %v1370, %v1299
    %1376 = vrot.lane.b32.xlu0 %v1373, 64
    %v1377 = vpop.permute.xlu0 %1376
    %v1379 = vmul.f32 %v1370, %v1377
    %1381 = vrot.lane.b32.xlu0 %v1379, 64
    %v1382 = vpop.permute.xlu0 %1381
    %v1384 = vadd.f32 %v1374, %v1382
    %v1385 = vtanh.pop %v1384
    %1387 = vrot.lane.b32.xlu0 %v1385, 64
    %v1388 = vpop.permute.xlu0 %1387
    %v1390 = vmul.f32 %v1372, %v1388
    %1391 = vst.msk [vmem:[%s476] sm:$0xff] %vm382, %v1390
    %1392 = vst.msk [vmem:[%s478] sm:$0xff] %vm385, %v1390
    %v1393 = vpack.c.bf16 %v1390, %v1390
    %v1395 = vsel %vm293, %v1393, 0
    %1397 = vmatprep.subr.bf16.mxu0 %v1212
    %1398 = vmatpush1.bf16.msra.mxu0 %v1211
    %1399 = vmatprep.subr.bf16.mxu0 %v1214
    %1400 = vmatpush1.bf16.msra.mxu0 %v1213
    %1401 = vmatprep.subr.bf16.mxu0 %v1216
    %1402 = vmatpush1.bf16.msra.mxu0 %v1215
    %1403 = vmatprep.subr.bf16.mxu0 %v1218
    %1404 = vmatpush1.bf16.msra.mxu0 %v1217
    %1405 = vmatprep.subr.bf16.mxu0 0
    %1406 = vmatpush1.bf16.msra.mxu0 0
    %1407 = vmatprep.subr.bf16.mxu0 0
    %1408 = vmatpush1.bf16.msra.mxu0 0
    %1409 = vmatprep.subr.bf16.mxu0 0
    %1410 = vmatpush1.bf16.msra.mxu0 0
    %1411 = vmatprep.subr.bf16.mxu0 0
    %1412 = vmatpush1.bf16.msra.mxu0 0
    %1413 = vmatprep.subr.bf16.mxu0 0
    %1414 = vmatpush1.bf16.msra.mxu0 0
    %1415 = vmatprep.subr.bf16.mxu0 0
    %1416 = vmatpush1.bf16.msra.mxu0 0
    %1417 = vmatprep.subr.bf16.mxu0 0
    %1418 = vmatpush1.bf16.msra.mxu0 0
    %1419 = vmatprep.subr.bf16.mxu0 0
    %1420 = vmatpush1.bf16.msra.mxu0 0
    %1421 = vmatprep.subr.bf16.mxu0 0
    %1422 = vmatpush1.bf16.msra.mxu0 0
    %1423 = vmatprep.subr.bf16.mxu0 0
    %1424 = vmatpush1.bf16.msra.mxu0 0
    %1425 = vmatprep.subr.bf16.mxu0 0
    %1426 = vmatpush1.bf16.msra.mxu0 0
    %1427 = vmatprep.subr.bf16.mxu0 0
    %1428 = vmatpush1.bf16.msra.mxu0 0
    %1429 = vmatprep.mubr.bf16.mxu0 0
    %1430 = vmatmul.mubr.bf16.gmra.mrb[0].mxu0 %v1395
    %v1431 = vpop.f32.mrb[0].mxu0
    %v1432 = vadd.f32 0.0, %v1431
    %v1433 = vpop.f32.mrb[0].mxu0
    %v1434 = vadd.f32 0.0, %v1433
    %v1435 = vpop.f32.mrb[0].mxu0
    %v1436 = vpop.f32.mrb[0].mxu0
    %1437 = vdwg.mxu0
    %v1438 = vld [vmem:[%s527] sm:$0xff]
    %v1439 = vld [vmem:[%s527 + $0x8] sm:$0xff]
    %v1440 = vld [vmem:[%s532] sm:$0xff]
    %v1441 = vld [vmem:[%s532 + $0x8] sm:$0xff]
    %v1442 = vsel %vm89, %v1438, %v1440
    %v1443 = vsel %vm90, %v1439, %v1441
    %v1444 = vadd.f32 %v1442, %v1432
    %v1445 = vadd.f32 %v1443, %v1434
    %v1446 = vxor.u32 %v1444, 2147483648
    %v1447 = vxor.u32 %v1445, 2147483648
    %v1448 = vmul.f32 %v1446, 1.442695
    %v1449 = vpow.pop %v1448
    %v1450 = vmul.f32 %v1447, 1.442695
    %v1451 = vpow.pop %v1450
    %v1452 = vadd.f32 %v1449, 1.0
    %v1453 = vadd.f32 %v1451, 1.0
    %v1454 = vrcp.pop %v1452
    %v1455 = vmul.f32 1.0, %v1454
    %v1456 = vrcp.pop %v1453
    %v1457 = vmul.f32 1.0, %v1456
    %v1458 = vtanh.pop %v1445
    %v1459 = vmul.f32 %v1455, %v1384
    %1461 = vrot.lane.b32.xlu0 %v1458, 64
    %v1462 = vpop.permute.xlu0 %1461
    %v1464 = vmul.f32 %v1455, %v1462
    %1466 = vrot.lane.b32.xlu0 %v1464, 64
    %v1467 = vpop.permute.xlu0 %1466
    %v1469 = vadd.f32 %v1459, %v1467
    %v1470 = vtanh.pop %v1469
    %1472 = vrot.lane.b32.xlu0 %v1470, 64
    %v1473 = vpop.permute.xlu0 %1472
    %v1475 = vmul.f32 %v1457, %v1473
    %1476 = vst.msk [vmem:[%s569] sm:$0xff] %vm382, %v1475
    %1477 = vst.msk [vmem:[%s571] sm:$0xff] %vm385, %v1475
    %v1478 = vpack.c.bf16 %v1475, %v1475
    %v1480 = vsel %vm293, %v1478, 0
    %1482 = vmatprep.subr.bf16.mxu0 %v1212
    %1483 = vmatpush1.bf16.msra.mxu0 %v1211
    %1484 = vmatprep.subr.bf16.mxu0 %v1214
    %1485 = vmatpush1.bf16.msra.mxu0 %v1213
    %1486 = vmatprep.subr.bf16.mxu0 %v1216
    %1487 = vmatpush1.bf16.msra.mxu0 %v1215
    %1488 = vmatprep.subr.bf16.mxu0 %v1218
    %1489 = vmatpush1.bf16.msra.mxu0 %v1217
    %1490 = vmatprep.subr.bf16.mxu0 0
    %1491 = vmatpush1.bf16.msra.mxu0 0
    %1492 = vmatprep.subr.bf16.mxu0 0
    %1493 = vmatpush1.bf16.msra.mxu0 0
    %1494 = vmatprep.subr.bf16.mxu0 0
    %1495 = vmatpush1.bf16.msra.mxu0 0
    %1496 = vmatprep.subr.bf16.mxu0 0
    %1497 = vmatpush1.bf16.msra.mxu0 0
    %1498 = vmatprep.subr.bf16.mxu0 0
    %1499 = vmatpush1.bf16.msra.mxu0 0
    %1500 = vmatprep.subr.bf16.mxu0 0
    %1501 = vmatpush1.bf16.msra.mxu0 0
    %1502 = vmatprep.subr.bf16.mxu0 0
    %1503 = vmatpush1.bf16.msra.mxu0 0
    %1504 = vmatprep.subr.bf16.mxu0 0
    %1505 = vmatpush1.bf16.msra.mxu0 0
    %1506 = vmatprep.subr.bf16.mxu0 0
    %1507 = vmatpush1.bf16.msra.mxu0 0
    %1508 = vmatprep.subr.bf16.mxu0 0
    %1509 = vmatpush1.bf16.msra.mxu0 0
    %1510 = vmatprep.subr.bf16.mxu0 0
    %1511 = vmatpush1.bf16.msra.mxu0 0
    %1512 = vmatprep.subr.bf16.mxu0 0
    %1513 = vmatpush1.bf16.msra.mxu0 0
    %1514 = vmatprep.mubr.bf16.mxu0 0
    %1515 = vmatmul.mubr.bf16.gmra.mrb[0].mxu0 %v1480
    %v1516 = vpop.f32.mrb[0].mxu0
    %v1517 = vadd.f32 0.0, %v1516
    %v1518 = vpop.f32.mrb[0].mxu0
    %v1519 = vadd.f32 0.0, %v1518
    %v1520 = vpop.f32.mrb[0].mxu0
    %v1521 = vpop.f32.mrb[0].mxu0
    %1522 = vdwg.mxu0
    %v1523 = vld [vmem:[%s620] sm:$0xff]
    %v1524 = vld [vmem:[%s620 + $0x8] sm:$0xff]
    %v1525 = vld [vmem:[%s625] sm:$0xff]
    %v1526 = vld [vmem:[%s625 + $0x8] sm:$0xff]
    %v1527 = vsel %vm89, %v1523, %v1525
    %v1528 = vsel %vm90, %v1524, %v1526
    %v1529 = vadd.f32 %v1527, %v1517
    %v1530 = vadd.f32 %v1528, %v1519
    %v1531 = vxor.u32 %v1529, 2147483648
    %v1532 = vxor.u32 %v1530, 2147483648
    %v1533 = vmul.f32 %v1531, 1.442695
    %v1534 = vpow.pop %v1533
    %v1535 = vmul.f32 %v1532, 1.442695
    %v1536 = vpow.pop %v1535
    %v1537 = vadd.f32 %v1534, 1.0
    %v1538 = vadd.f32 %v1536, 1.0
    %v1539 = vrcp.pop %v1537
    %v1540 = vmul.f32 1.0, %v1539
    %v1541 = vrcp.pop %v1538
    %v1542 = vmul.f32 1.0, %v1541
    %v1543 = vtanh.pop %v1530
    %v1544 = vmul.f32 %v1540, %v1469
    %1546 = vrot.lane.b32.xlu0 %v1543, 64
    %v1547 = vpop.permute.xlu0 %1546
    %v1549 = vmul.f32 %v1540, %v1547
    %1551 = vrot.lane.b32.xlu0 %v1549, 64
    %v1552 = vpop.permute.xlu0 %1551
    %v1554 = vadd.f32 %v1544, %v1552
    %v1555 = vtanh.pop %v1554
    %1557 = vrot.lane.b32.xlu0 %v1555, 64
    %v1558 = vpop.permute.xlu0 %1557
    %v1560 = vmul.f32 %v1542, %v1558
    %1561 = vst.msk [vmem:[%s662] sm:$0xff] %vm382, %v1560
    %1562 = vst.msk [vmem:[%s664] sm:$0xff] %vm385, %v1560
    %v1563 = vpack.c.bf16 %v1560, %v1560
    %v1565 = vsel %vm293, %v1563, 0
    %1567 = vmatprep.subr.bf16.mxu0 %v1212
    %1568 = vmatpush1.bf16.msra.mxu0 %v1211
    %1569 = vmatprep.subr.bf16.mxu0 %v1214
    %1570 = vmatpush1.bf16.msra.mxu0 %v1213
    %1571 = vmatprep.subr.bf16.mxu0 %v1216
    %1572 = vmatpush1.bf16.msra.mxu0 %v1215
    %1573 = vmatprep.subr.bf16.mxu0 %v1218
    %1574 = vmatpush1.bf16.msra.mxu0 %v1217
    %1575 = vmatprep.subr.bf16.mxu0 0
    %1576 = vmatpush1.bf16.msra.mxu0 0
    %1577 = vmatprep.subr.bf16.mxu0 0
    %1578 = vmatpush1.bf16.msra.mxu0 0
    %1579 = vmatprep.subr.bf16.mxu0 0
    %1580 = vmatpush1.bf16.msra.mxu0 0
    %1581 = vmatprep.subr.bf16.mxu0 0
    %1582 = vmatpush1.bf16.msra.mxu0 0
    %1583 = vmatprep.subr.bf16.mxu0 0
    %1584 = vmatpush1.bf16.msra.mxu0 0
    %1585 = vmatprep.subr.bf16.mxu0 0
    %1586 = vmatpush1.bf16.msra.mxu0 0
    %1587 = vmatprep.subr.bf16.mxu0 0
    %1588 = vmatpush1.bf16.msra.mxu0 0
    %1589 = vmatprep.subr.bf16.mxu0 0
    %1590 = vmatpush1.bf16.msra.mxu0 0
    %1591 = vmatprep.subr.bf16.mxu0 0
    %1592 = vmatpush1.bf16.msra.mxu0 0
    %1593 = vmatprep.subr.bf16.mxu0 0
    %1594 = vmatpush1.bf16.msra.mxu0 0
    %1595 = vmatprep.subr.bf16.mxu0 0
    %1596 = vmatpush1.bf16.msra.mxu0 0
    %1597 = vmatprep.subr.bf16.mxu0 0
    %1598 = vmatpush1.bf16.msra.mxu0 0
    %1599 = vmatprep.mubr.bf16.mxu0 0
    %1600 = vmatmul.mubr.bf16.gmra.mrb[0].mxu0 %v1565
    %v1601 = vpop.f32.mrb[0].mxu0
    %v1602 = vadd.f32 0.0, %v1601
    %v1603 = vpop.f32.mrb[0].mxu0
    %v1604 = vadd.f32 0.0, %v1603
    %v1605 = vpop.f32.mrb[0].mxu0
    %v1606 = vpop.f32.mrb[0].mxu0
    %1607 = vdwg.mxu0
    %v1608 = vld [vmem:[%s625] sm:$0xff]
    %v1609 = vld [vmem:[%s625 + $0x8] sm:$0xff]
    %v1610 = vld [vmem:[%s620] sm:$0xff]
    %v1611 = vld [vmem:[%s620 + $0x8] sm:$0xff]
    %v1612 = vsel %vm89, %v1608, %v1610
    %v1613 = vsel %vm90, %v1609, %v1611
    %v1614 = vadd.f32 %v1612, %v1602
    %v1615 = vadd.f32 %v1613, %v1604
    %v1616 = vxor.u32 %v1614, 2147483648
    %v1617 = vxor.u32 %v1615, 2147483648
    %v1618 = vmul.f32 %v1616, 1.442695
    %v1619 = vpow.pop %v1618
    %v1620 = vmul.f32 %v1617, 1.442695
    %v1621 = vpow.pop %v1620
    %v1622 = vadd.f32 %v1619, 1.0
    %v1623 = vadd.f32 %v1621, 1.0
    %v1624 = vrcp.pop %v1622
    %v1625 = vmul.f32 1.0, %v1624
    %v1626 = vrcp.pop %v1623
    %v1627 = vmul.f32 1.0, %v1626
    %v1628 = vtanh.pop %v1615
    %v1629 = vmul.f32 %v1625, %v1554
    %1631 = vrot.lane.b32.xlu0 %v1628, 64
    %v1632 = vpop.permute.xlu0 %1631
    %v1634 = vmul.f32 %v1625, %v1632
    %1636 = vrot.lane.b32.xlu0 %v1634, 64
    %v1637 = vpop.permute.xlu0 %1636
    %v1639 = vadd.f32 %v1629, %v1637
    %v1640 = vtanh.pop %v1639
    %1642 = vrot.lane.b32.xlu0 %v1640, 64
    %v1643 = vpop.permute.xlu0 %1642
    %v1645 = vmul.f32 %v1627, %v1643
    %1646 = vst.msk [vmem:[%s664] sm:$0xff] %vm382, %v1645
    %1647 = vst.msk [vmem:[%s662] sm:$0xff] %vm385, %v1645
    %v1648 = vpack.c.bf16 %v1645, %v1645
    %v1650 = vsel %vm293, %v1648, 0
    %1652 = vmatprep.subr.bf16.mxu0 %v1212
    %1653 = vmatpush1.bf16.msra.mxu0 %v1211
    %1654 = vmatprep.subr.bf16.mxu0 %v1214
    %1655 = vmatpush1.bf16.msra.mxu0 %v1213
    %1656 = vmatprep.subr.bf16.mxu0 %v1216
    %1657 = vmatpush1.bf16.msra.mxu0 %v1215
    %1658 = vmatprep.subr.bf16.mxu0 %v1218
    %1659 = vmatpush1.bf16.msra.mxu0 %v1217
    %1660 = vmatprep.subr.bf16.mxu0 0
    %1661 = vmatpush1.bf16.msra.mxu0 0
    %1662 = vmatprep.subr.bf16.mxu0 0
    %1663 = vmatpush1.bf16.msra.mxu0 0
    %1664 = vmatprep.subr.bf16.mxu0 0
    %1665 = vmatpush1.bf16.msra.mxu0 0
    %1666 = vmatprep.subr.bf16.mxu0 0
    %1667 = vmatpush1.bf16.msra.mxu0 0
    %1668 = vmatprep.subr.bf16.mxu0 0
    %1669 = vmatpush1.bf16.msra.mxu0 0
    %1670 = vmatprep.subr.bf16.mxu0 0
    %1671 = vmatpush1.bf16.msra.mxu0 0
    %1672 = vmatprep.subr.bf16.mxu0 0
    %1673 = vmatpush1.bf16.msra.mxu0 0
    %1674 = vmatprep.subr.bf16.mxu0 0
    %1675 = vmatpush1.bf16.msra.mxu0 0
    %1676 = vmatprep.subr.bf16.mxu0 0
    %1677 = vmatpush1.bf16.msra.mxu0 0
    %1678 = vmatprep.subr.bf16.mxu0 0
    %1679 = vmatpush1.bf16.msra.mxu0 0
    %1680 = vmatprep.subr.bf16.mxu0 0
    %1681 = vmatpush1.bf16.msra.mxu0 0
    %1682 = vmatprep.subr.bf16.mxu0 0
    %1683 = vmatpush1.bf16.msra.mxu0 0
    %1684 = vmatprep.mubr.bf16.mxu0 0
    %1685 = vmatmul.mubr.bf16.gmra.mrb[0].mxu0 %v1650
    %v1686 = vpop.f32.mrb[0].mxu0
    %v1687 = vadd.f32 0.0, %v1686
    %v1688 = vpop.f32.mrb[0].mxu0
    %v1689 = vadd.f32 0.0, %v1688
    %v1690 = vpop.f32.mrb[0].mxu0
    %v1691 = vpop.f32.mrb[0].mxu0
    %1692 = vdwg.mxu0
    %v1693 = vld [vmem:[%s532] sm:$0xff]
    %v1694 = vld [vmem:[%s532 + $0x8] sm:$0xff]
    %v1695 = vld [vmem:[%s527] sm:$0xff]
    %v1696 = vld [vmem:[%s527 + $0x8] sm:$0xff]
    %v1697 = vsel %vm89, %v1693, %v1695
    %v1698 = vsel %vm90, %v1694, %v1696
    %v1699 = vadd.f32 %v1697, %v1687
    %v1700 = vadd.f32 %v1698, %v1689
    %v1701 = vxor.u32 %v1699, 2147483648
    %v1702 = vxor.u32 %v1700, 2147483648
    %v1703 = vmul.f32 %v1701, 1.442695
    %v1704 = vpow.pop %v1703
    %v1705 = vmul.f32 %v1702, 1.442695
    %v1706 = vpow.pop %v1705
    %v1707 = vadd.f32 %v1704, 1.0
    %v1708 = vadd.f32 %v1706, 1.0
    %v1709 = vrcp.pop %v1707
    %v1710 = vmul.f32 1.0, %v1709
    %v1711 = vrcp.pop %v1708
    %v1712 = vmul.f32 1.0, %v1711
    %v1713 = vtanh.pop %v1700
    %v1714 = vmul.f32 %v1710, %v1639
    %1716 = vrot.lane.b32.xlu0 %v1713, 64
    %v1717 = vpop.permute.xlu0 %1716
    %v1719 = vmul.f32 %v1710, %v1717
    %1721 = vrot.lane.b32.xlu0 %v1719, 64
    %v1722 = vpop.permute.xlu0 %1721
    %v1724 = vadd.f32 %v1714, %v1722
    %v1725 = vtanh.pop %v1724
    %1727 = vrot.lane.b32.xlu0 %v1725, 64
    %v1728 = vpop.permute.xlu0 %1727
    %v1730 = vmul.f32 %v1712, %v1728
    %1731 = vst.msk [vmem:[%s571] sm:$0xff] %vm382, %v1730
    %1732 = vst.msk [vmem:[%s569] sm:$0xff] %vm385, %v1730
    %v1733 = vpack.c.bf16 %v1730, %v1730
    %v1735 = vsel %vm293, %v1733, 0
    %1737 = vmatprep.subr.bf16.mxu0 %v1212
    %1738 = vmatpush1.bf16.msra.mxu0 %v1211
    %1739 = vmatprep.subr.bf16.mxu0 %v1214
    %1740 = vmatpush1.bf16.msra.mxu0 %v1213
    %1741 = vmatprep.subr.bf16.mxu0 %v1216
    %1742 = vmatpush1.bf16.msra.mxu0 %v1215
    %1743 = vmatprep.subr.bf16.mxu0 %v1218
    %1744 = vmatpush1.bf16.msra.mxu0 %v1217
    %1745 = vmatprep.subr.bf16.mxu0 0
    %1746 = vmatpush1.bf16.msra.mxu0 0
    %1747 = vmatprep.subr.bf16.mxu0 0
    %1748 = vmatpush1.bf16.msra.mxu0 0
    %1749 = vmatprep.subr.bf16.mxu0 0
    %1750 = vmatpush1.bf16.msra.mxu0 0
    %1751 = vmatprep.subr.bf16.mxu0 0
    %1752 = vmatpush1.bf16.msra.mxu0 0
    %1753 = vmatprep.subr.bf16.mxu0 0
    %1754 = vmatpush1.bf16.msra.mxu0 0
    %1755 = vmatprep.subr.bf16.mxu0 0
    %1756 = vmatpush1.bf16.msra.mxu0 0
    %1757 = vmatprep.subr.bf16.mxu0 0
    %1758 = vmatpush1.bf16.msra.mxu0 0
    %1759 = vmatprep.subr.bf16.mxu0 0
    %1760 = vmatpush1.bf16.msra.mxu0 0
    %1761 = vmatprep.subr.bf16.mxu0 0
    %1762 = vmatpush1.bf16.msra.mxu0 0
    %1763 = vmatprep.subr.bf16.mxu0 0
    %1764 = vmatpush1.bf16.msra.mxu0 0
    %1765 = vmatprep.subr.bf16.mxu0 0
    %1766 = vmatpush1.bf16.msra.mxu0 0
    %1767 = vmatprep.subr.bf16.mxu0 0
    %1768 = vmatpush1.bf16.msra.mxu0 0
    %1769 = vmatprep.mubr.bf16.mxu0 0
    %1770 = vmatmul.mubr.bf16.gmra.mrb[0].mxu0 %v1735
    %v1771 = vpop.f32.mrb[0].mxu0
    %v1772 = vadd.f32 0.0, %v1771
    %v1773 = vpop.f32.mrb[0].mxu0
    %v1774 = vadd.f32 0.0, %v1773
    %v1775 = vpop.f32.mrb[0].mxu0
    %v1776 = vpop.f32.mrb[0].mxu0
    %1777 = vdwg.mxu0
    %v1778 = vld [vmem:[%s439] sm:$0xff]
    %v1779 = vld [vmem:[%s439 + $0x8] sm:$0xff]
    %v1780 = vld [vmem:[%s434] sm:$0xff]
    %v1781 = vld [vmem:[%s434 + $0x8] sm:$0xff]
    %v1782 = vsel %vm89, %v1778, %v1780
    %v1783 = vsel %vm90, %v1779, %v1781
    %v1784 = vadd.f32 %v1782, %v1772
    %v1785 = vadd.f32 %v1783, %v1774
    %v1786 = vxor.u32 %v1784, 2147483648
    %v1787 = vxor.u32 %v1785, 2147483648
    %v1788 = vmul.f32 %v1786, 1.442695
    %v1789 = vpow.pop %v1788
    %v1790 = vmul.f32 %v1787, 1.442695
    %v1791 = vpow.pop %v1790
    %v1792 = vadd.f32 %v1789, 1.0
    %v1793 = vadd.f32 %v1791, 1.0
    %v1794 = vrcp.pop %v1792
    %v1795 = vmul.f32 1.0, %v1794
    %v1796 = vrcp.pop %v1793
    %v1797 = vmul.f32 1.0, %v1796
    %v1798 = vtanh.pop %v1785
    %v1799 = vmul.f32 %v1795, %v1724
    %1801 = vrot.lane.b32.xlu0 %v1798, 64
    %v1802 = vpop.permute.xlu0 %1801
    %v1804 = vmul.f32 %v1795, %v1802
    %1806 = vrot.lane.b32.xlu0 %v1804, 64
    %v1807 = vpop.permute.xlu0 %1806
    %v1809 = vadd.f32 %v1799, %v1807
    %v1810 = vtanh.pop %v1809
    %1812 = vrot.lane.b32.xlu0 %v1810, 64
    %v1813 = vpop.permute.xlu0 %1812
    %v1815 = vmul.f32 %v1797, %v1813
    %1816 = vst.msk [vmem:[%s478] sm:$0xff] %vm382, %v1815
    %1817 = vst.msk [vmem:[%s476] sm:$0xff] %vm385, %v1815
    %v1818 = vpack.c.bf16 %v1815, %v1815
    %v1820 = vsel %vm293, %v1818, 0
    %1822 = vmatprep.subr.bf16.mxu0 %v1212
    %1823 = vmatpush1.bf16.msra.mxu0 %v1211
    %1824 = vmatprep.subr.bf16.mxu0 %v1214
    %1825 = vmatpush1.bf16.msra.mxu0 %v1213
    %1826 = vmatprep.subr.bf16.mxu0 %v1216
    %1827 = vmatpush1.bf16.msra.mxu0 %v1215
    %1828 = vmatprep.subr.bf16.mxu0 %v1218
    %1829 = vmatpush1.bf16.msra.mxu0 %v1217
    %1830 = vmatprep.subr.bf16.mxu0 0
    %1831 = vmatpush1.bf16.msra.mxu0 0
    %1832 = vmatprep.subr.bf16.mxu0 0
    %1833 = vmatpush1.bf16.msra.mxu0 0
    %1834 = vmatprep.subr.bf16.mxu0 0
    %1835 = vmatpush1.bf16.msra.mxu0 0
    %1836 = vmatprep.subr.bf16.mxu0 0
    %1837 = vmatpush1.bf16.msra.mxu0 0
    %1838 = vmatprep.subr.bf16.mxu0 0
    %1839 = vmatpush1.bf16.msra.mxu0 0
    %1840 = vmatprep.subr.bf16.mxu0 0
    %1841 = vmatpush1.bf16.msra.mxu0 0
    %1842 = vmatprep.subr.bf16.mxu0 0
    %1843 = vmatpush1.bf16.msra.mxu0 0
    %1844 = vmatprep.subr.bf16.mxu0 0
    %1845 = vmatpush1.bf16.msra.mxu0 0
    %1846 = vmatprep.subr.bf16.mxu0 0
    %1847 = vmatpush1.bf16.msra.mxu0 0
    %1848 = vmatprep.subr.bf16.mxu0 0
    %1849 = vmatpush1.bf16.msra.mxu0 0
    %1850 = vmatprep.subr.bf16.mxu0 0
    %1851 = vmatpush1.bf16.msra.mxu0 0
    %1852 = vmatprep.subr.bf16.mxu0 0
    %1853 = vmatpush1.bf16.msra.mxu0 0
    %1854 = vmatprep.mubr.bf16.mxu0 0
    %1855 = vmatmul.mubr.bf16.gmra.mrb[0].mxu0 %v1820
    %v1856 = vpop.f32.mrb[0].mxu0
    %v1857 = vadd.f32 0.0, %v1856
    %v1858 = vpop.f32.mrb[0].mxu0
    %v1859 = vadd.f32 0.0, %v1858
    %v1860 = vpop.f32.mrb[0].mxu0
    %v1861 = vpop.f32.mrb[0].mxu0
    %1862 = vdwg.mxu0
    %v1863 = vld [vmem:[%s345] sm:$0xff]
    %v1864 = vld [vmem:[%s345 + $0x8] sm:$0xff]
    %v1865 = vld [vmem:[%s340] sm:$0xff]
    %v1866 = vld [vmem:[%s340 + $0x8] sm:$0xff]
    %v1867 = vsel %vm89, %v1863, %v1865
    %v1868 = vsel %vm90, %v1864, %v1866
    %v1869 = vadd.f32 %v1867, %v1857
    %v1870 = vadd.f32 %v1868, %v1859
    %v1871 = vxor.u32 %v1869, 2147483648
    %v1872 = vxor.u32 %v1870, 2147483648
    %v1873 = vmul.f32 %v1871, 1.442695
    %v1874 = vpow.pop %v1873
    %v1875 = vmul.f32 %v1872, 1.442695
    %v1876 = vpow.pop %v1875
    %v1877 = vadd.f32 %v1874, 1.0
    %v1878 = vadd.f32 %v1876, 1.0
    %v1879 = vrcp.pop %v1877
    %v1880 = vmul.f32 1.0, %v1879
    %v1881 = vrcp.pop %v1878
    %v1882 = vmul.f32 1.0, %v1881
    %v1883 = vtanh.pop %v1870
    %v1884 = vmul.f32 %v1880, %v1809
    %1886 = vrot.lane.b32.xlu0 %v1883, 64
    %v1887 = vpop.permute.xlu0 %1886
    %v1889 = vmul.f32 %v1880, %v1887
    %1891 = vrot.lane.b32.xlu0 %v1889, 64
    %v1892 = vpop.permute.xlu0 %1891
    %v1894 = vadd.f32 %v1884, %v1892
    %v1895 = vtanh.pop %v1894
    %1897 = vrot.lane.b32.xlu0 %v1895, 64
    %v1898 = vpop.permute.xlu0 %1897
    %v1900 = vmul.f32 %v1882, %v1898
    %1901 = vst.msk [vmem:[%s384] sm:$0xff] %vm382, %v1900
    %1902 = vst.msk [vmem:[#allocation3] sm:$0xff] %vm385, %v1900
    %v1903 = vld [vmem:[%s384] sm:$0xff]
    %v1904 = vpack.c.bf16 %v1903, %v1903
    %v1905 = vld [vmem:[%s7] sm:$0xf]
    %v1906 = vld [vmem:[%s7 + $0x4] sm:$0xf]
    %v1907 = vld [vmem:[%s7 + $0x8] sm:$0xf]
    %v1908 = vld [vmem:[%s7 + $0xc] sm:$0xf]
    %v1909 = vld [vmem:[%s7 + $0x10] sm:$0xf]
    %v1910 = vld [vmem:[%s7 + $0x14] sm:$0xf]
    %v1911 = vld [vmem:[%s7 + $0x18] sm:$0xf]
    %v1912 = vld [vmem:[%s7 + $0x1c] sm:$0xf]
    %v1913 = vld [vmem:[%s8] sm:$0x1]
    %v1915 = vlaneseq
    %v1916 = vshrl.u32 %v1915, 7
    %v1917 = vsub.s32 0, %v1916
    %v1918 = vrot.slane %v1913, %v1917
    %v1928 = vunpack.c.l.b16 %v1905
    %v1929 = vunpack.c.l.b16 %v1906
    %v1930 = vunpack.c.l.b16 %v1907
    %v1931 = vunpack.c.l.b16 %v1908
    %v1932 = vunpack.c.l.b16 %v1909
    %v1933 = vunpack.c.l.b16 %v1910
    %v1934 = vunpack.c.l.b16 %v1911
    %v1935 = vunpack.c.l.b16 %v1912
    %v1936 = vpack.c.b16 %v1929, %v1928
    %v1937 = vpack.c.b16 %v1931, %v1930
    %v1938 = vpack.c.b16 %v1933, %v1932
    %v1939 = vpack.c.b16 %v1935, %v1934
    %v1945 = vsel %vm293, %v1904, 0
    %1947 = vmatprep.subr.bf16.mxu0 0
    %1948 = vmatpush1.bf16.msra.mxu0 %v1936
    %1949 = vmatprep.subr.bf16.mxu0 0
    %1950 = vmatpush1.bf16.msra.mxu0 %v1937
    %1951 = vmatprep.subr.bf16.mxu0 0
    %1952 = vmatpush1.bf16.msra.mxu0 %v1938
    %1953 = vmatprep.subr.bf16.mxu0 0
    %1954 = vmatpush1.bf16.msra.mxu0 %v1939
    %1955 = vmatprep.subr.bf16.mxu0 0
    %1956 = vmatpush1.bf16.msra.mxu0 0
    %1957 = vmatprep.subr.bf16.mxu0 0
    %1958 = vmatpush1.bf16.msra.mxu0 0
    %1959 = vmatprep.subr.bf16.mxu0 0
    %1960 = vmatpush1.bf16.msra.mxu0 0
    %1961 = vmatprep.subr.bf16.mxu0 0
    %1962 = vmatpush1.bf16.msra.mxu0 0
    %1963 = vmatprep.subr.bf16.mxu0 0
    %1964 = vmatpush1.bf16.msra.mxu0 0
    %1965 = vmatprep.subr.bf16.mxu0 0
    %1966 = vmatpush1.bf16.msra.mxu0 0
    %1967 = vmatprep.subr.bf16.mxu0 0
    %1968 = vmatpush1.bf16.msra.mxu0 0
    %1969 = vmatprep.subr.bf16.mxu0 0
    %1970 = vmatpush1.bf16.msra.mxu0 0
    %1971 = vmatprep.subr.bf16.mxu0 0
    %1972 = vmatpush1.bf16.msra.mxu0 0
    %1973 = vmatprep.subr.bf16.mxu0 0
    %1974 = vmatpush1.bf16.msra.mxu0 0
    %1975 = vmatprep.subr.bf16.mxu0 0
    %1976 = vmatpush1.bf16.msra.mxu0 0
    %1977 = vmatprep.subr.bf16.mxu0 0
    %1978 = vmatpush1.bf16.msra.mxu0 0
    %1979 = vmatprep.mubr.bf16.mxu0 0
    %1980 = vmatmul.mubr.bf16.gmra.mrb[0].mxu0 %v1945
    %v1981 = vpop.f32.mrb[0].mxu0
    %v1982 = vadd.f32 %v1918, %v1981
    %v1983 = vpop.f32.mrb[0].mxu0
    %v1984 = vpop.f32.mrb[0].mxu0
    %v1985 = vpop.f32.mrb[0].mxu0
    %1986 = vdwg.mxu0
    %vm1987 = vcmask 25600
    %1988 = vst.msk [vmem:[#allocation9] sm:$0x3] %vm1987, %v1982
    // Predicated region
    $region46: #{tpu_custom_call.1} parent=1 // pred_check
      _
    $region47: #{tpu_custom_call.1} parent=1 // pred_check_branch
      %1990 = sbr.rel (0) target = $region49
    $region48: #{tpu_custom_call.1} parent=1 // pred_region
      %s1992 = ssub.s32 32, 32
      %1993 = vsyncadd [#allocation6], %s1992
      %s1995 = sshll.u32 [#allocation9], 4
      %s1996 = int_to_ptr.vmem [resolvable:$true] %s1995
      %1998 = dma.vmem_to_hbm [thread:$0]  %s1996, 32, %s9, [#allocation6]
    $region49: #{tpu_custom_call.1} parent=1 // pred_fallthru
      _
    // Predicated region
    $region50: #{tpu_custom_call.1} parent=1 // pred_check
      _
    $region51: #{tpu_custom_call.1} parent=1 // pred_check_branch
      %2000 = sbr.rel (0) target = $region53
    $region52: #{tpu_custom_call.1} parent=1 // pred_region
      %2001 = dma.done [#allocation6], 32
    $region53: #{tpu_custom_call.1} parent=1 // pred_fallthru
      _
    %2002 = vsyncpa [#allocation5], 1
    %2003 = vsyncpa [#allocation8], 1
    %2004 = vsyncpa [#allocation6], 1

</llo_original>
